<compile_context>
chip_gen: v5e
topology: v5e:2x2
jax: 0.10.0
libtpu: 0.0.40
codegen_flags: <defaults>
</compile_context>

<pallas_src>
import jax
import jax.numpy as jnp
from jax.experimental import pallas as pl
from jax.experimental.pallas import tpu as pltpu

# ----------------------------------------------------------------------------
# Problem configuration (synthetic, matches previous version)
# ----------------------------------------------------------------------------
HID = 32            # logical hidden dim of the PyTorch module
HP = 128            # lane-padded hidden dim (zero padding -> identical numerics)

USE_NODES = ['P', 'A', 'C', 'R']
MAIN_NODE = 'P'
IN_DIMS = {'P': 24, 'A': 20, 'C': 16, 'R': 16}
N_NODES = {'P': 16, 'A': 12, 'C': 8, 'R': 8}
MP = [('P', 'A')]                                   # metapath-view edge
SCHEMA = [('A', 'P'), ('C', 'P'), ('R', 'P')]       # schema-view edges
# round r: (pair of SCHEMA indices forming target h1, SCHEMA index of reconstruct edge)
ROUND_H1 = [(0, 2), (0, 1), (1, 2)]                 # schema_dict1 / 2 / 3
ROUND_REC = [1, 2, 0]                               # ('C','P') / ('R','P') / ('A','P')
R_RATE = [0.5, 0.5, 0.5]

NEG_SLOPE = 0.01    # F.leaky_relu default (GAT.message)
BN_EPS = 1e-5
NORM_EPS = 1e-12

MAX_N = 16          # max node count (padding for stacked buffers)
MAX_F = 24          # max input feature dim (padding for stacked buffers)

# parameter-slab row layout, shape (NPAR, HP)
_ROW_FC_B = 0       # 4 rows: fc bias for P,A,C,R
_ROW_FC_A = 4       # 4 rows: fc PReLU slope for P,A,C,R
_ROW_MP = 8         # 6 rows: metapath GAT/BN/PReLU (att_src, att_dst, bias, gamma, beta, slope)
_ROW_SC = 14        # 18 rows: schema GAT/BN/PReLU for edges AP, CP, RP (6 rows each)
_ROW_TOKEN = 32     # 1 row: enc_mask_token
NPAR = 33


# ----------------------------------------------------------------------------
# In-kernel building blocks (traced inside the Pallas kernel)
# ----------------------------------------------------------------------------
def _prelu(y, a):
    return jnp.where(y >= 0, y, a * y)


def _gat(xs, xd, att_src, att_dst, bias, adj):
    """Dense-adjacency GAT: out[i] = sum_j softmax_j(leaky_relu(a_s[j]+a_d[i])) * xs[j] + bias."""
    a_src = jnp.einsum('oh,nh->on', att_src, xs,
                       preferred_element_type=jnp.float32)            # (1, Ns)
    a_dst = jnp.sum(xd * att_dst, axis=-1, keepdims=True)             # (Nd, 1)
    e = a_dst + a_src                                                 # (Nd, Ns)
    e = jnp.where(e >= 0, e, NEG_SLOPE * e)                           # leaky_relu
    edge = adj > 0.5
    e = jnp.where(edge, e, jnp.float32(-1e30))
    m = jnp.max(e, axis=-1, keepdims=True)
    p = jnp.where(edge, jnp.exp(e - m), 0.0)
    den = jnp.sum(p, axis=-1, keepdims=True)
    attn = p / jnp.where(den > 0, den, 1.0)                           # isolated dst -> bias only
    return jnp.dot(attn, xs, preferred_element_type=jnp.float32) + bias


def _bn_prelu(x, gamma, beta, a):
    """Training-mode BatchNorm1d over nodes (axis 0) followed by PReLU."""
    mu = jnp.mean(x, axis=0, keepdims=True)
    var = jnp.mean((x - mu) ** 2, axis=0, keepdims=True)
    y = (x - mu) * jax.lax.rsqrt(var + BN_EPS) * gamma + beta
    return _prelu(y, a)


# ----------------------------------------------------------------------------
# The single fused kernel: encoder + 3 masked rounds + loss accumulation
# ----------------------------------------------------------------------------
def crossview_kernel(x_ref, w_ref, par_ref, adj_ref, mask_ref, loss_ref):
    x_all = x_ref[...]                                   # (4, MAX_N, MAX_F)
    w_all = w_ref[...]                                   # (4, MAX_F, HP)
    par = par_ref[...]                                   # (NPAR, HP)
    adj = adj_ref[...]                                   # (4, MAX_N, MAX_N)
    masks = mask_ref[...]                                # (3, N_P, 1)

    fc_b = par[_ROW_FC_B:_ROW_FC_B + 4]
    fc_a = par[_ROW_FC_A:_ROW_FC_A + 4]
    mp_par = par[_ROW_MP:_ROW_MP + 6]
    sc_par = [par[_ROW_SC + 6 * i:_ROW_SC + 6 * (i + 1)] for i in range(3)]
    token = par[_ROW_TOKEN:_ROW_TOKEN + 1]

    # ---- fc -> PReLU per node type (padded rows/features are zero; slice to exact) ----
    n = [N_NODES[t] for t in USE_NODES]                  # [16, 12, 8, 8]
    h = []
    for t in range(4):
        y = jnp.dot(x_all[t], w_all[t], preferred_element_type=jnp.float32)
        y = y[:n[t]] + fc_b[t:t + 1]
        h.append(_prelu(y, fc_a[t:t + 1]))
    h_p, h_a, h_c, h_r = h

    # ---- metapath view ('P','A'): GAT -> BN -> PReLU, updates h_a ----
    adj_mp = adj[0, :N_NODES['A'], :N_NODES['P']]
    e1 = _gat(h_p, h_a, mp_par[0:1], mp_par[1:2], mp_par[2:3], adj_mp)
    h_a = _bn_prelu(e1, mp_par[3:4], mp_par[4:5], mp_par[5:6])

    srcs = [h_a, h_c, h_r]
    adj_sc = [adj[1, :N_NODES['P'], :N_NODES['A']],
              adj[2, :N_NODES['P'], :N_NODES['C']],
              adj[3, :N_NODES['P'], :N_NODES['R']]]

    # ---- schema views over UNMASKED h_p: each edge computed exactly once (dedup) ----
    g = []
    for i in range(3):
        p = sc_par[i]
        gi = _gat(srcs[i], h_p, p[0:1], p[1:2], p[2:3], adj_sc[i])
        g.append(_bn_prelu(gi, p[3:4], p[4:5], p[5:6]))

    # ---- three masked rounds (statically unrolled); loss accumulated in-kernel ----
    loss = jnp.zeros((1, 1), jnp.float32)
    for r in range(3):
        m = masks[r]                                     # (N_P, 1)  1.0 = masked
        main_h = jnp.where(m > 0.5, token, h_p)          # mask-token substitution

        e = ROUND_REC[r]
        p = sc_par[e]
        e2 = _gat(srcs[e], main_h, p[0:1], p[1:2], p[2:3], adj_sc[e])
        e2 = _bn_prelu(e2, p[3:4], p[4:5], p[5:6])

        ea, eb = ROUND_H1[r]
        h1 = g[ea] + g[eb]                               # target (detached in fwd)

        # masked cosine SCE loss (alpha = 1): mean over masked rows of (1 - cos)
        xn = e2 / jnp.maximum(jnp.sqrt(jnp.sum(e2 * e2, axis=-1, keepdims=True)), NORM_EPS)
        yn = h1 / jnp.maximum(jnp.sqrt(jnp.sum(h1 * h1, axis=-1, keepdims=True)), NORM_EPS)
        cos = jnp.sum(xn * yn, axis=-1, keepdims=True)   # (N_P, 1)
        num = jnp.sum(m * (1.0 - cos), axis=(0, 1), keepdims=True)     # (1, 1)
        cnt = jnp.maximum(jnp.sum(m, axis=(0, 1), keepdims=True), 1.0)
        loss = loss + num / cnt

    loss_ref[...] = jnp.broadcast_to(loss, (1, HP))      # lane-dense store


def crossview_call(x_stack, w_stack, par_slab, adj_slab, masks):
    vm = lambda: pl.BlockSpec(memory_space=pltpu.MemorySpace.VMEM)
    out = pl.pallas_call(
        crossview_kernel,
        out_shape=jax.ShapeDtypeStruct((1, HP), jnp.float32),
        in_specs=[vm() for _ in range(5)],
        out_specs=vm(),
    )(x_stack, w_stack, par_slab, adj_slab, masks)
    return out[0, 0]


# ----------------------------------------------------------------------------
# Deterministic synthetic params + data (logical hidden dim = 32)
# ----------------------------------------------------------------------------
def make_params(key):
    ks = iter(jax.random.split(key, 64))
    params = {'fc': {}, 'act': {}, 'intra': [], 'action': [], 'bn': [],
              'intra_mp': [], 'action_mp': [], 'bn_mp': []}
    for t in USE_NODES:
        f_in = IN_DIMS[t]
        std = 1.414 * (2.0 / (f_in + HID)) ** 0.5               # xavier_normal gain=1.414
        w = jax.random.normal(next(ks), (HID, f_in), jnp.float32) * std
        b = jax.random.normal(next(ks), (1, HID), jnp.float32) * 0.01
        params['fc'][t] = {'w_t': w.T, 'b': b}
        params['act'][t] = jnp.full((1, HID), 0.25, jnp.float32)

    def make_gat(k):
        k1, k2 = jax.random.split(k)
        s = (6.0 / (1 + HID)) ** 0.5
        return {'att_src': jax.random.uniform(k1, (1, HID), jnp.float32, -s, s),
                'att_dst': jax.random.uniform(k2, (1, HID), jnp.float32, -s, s),
                'bias': jnp.zeros((1, HID), jnp.float32)}

    def make_bn():
        return {'gamma': jnp.ones((1, HID), jnp.float32),
                'beta': jnp.zeros((1, HID), jnp.float32)}

    for _ in SCHEMA:
        params['intra'].append(make_gat(next(ks)))
        params['action'].append(jnp.full((1, HID), 0.25, jnp.float32))
        params['bn'].append(make_bn())
    for _ in MP:
        params['intra_mp'].append(make_gat(next(ks)))
        params['action_mp'].append(jnp.full((1, HID), 0.25, jnp.float32))
        params['bn_mp'].append(make_bn())
    params['enc_mask_token'] = jnp.zeros((1, HID), jnp.float32)
    return params


def make_data(key):
    ks = iter(jax.random.split(key, 32))
    x = {t: jax.random.normal(next(ks), (N_NODES[t], IN_DIMS[t]), jnp.float32)
         for t in USE_NODES}
    adj = {}
    for (src, dst) in sorted(set(MP) | set(SCHEMA)):
        a = jax.random.bernoulli(next(ks), 0.4, (N_NODES[dst], N_NODES[src]))
        adj[(src, dst)] = a.astype(jnp.float32)
    return {'x': x, 'adj': adj}


# ----------------------------------------------------------------------------
# One-time packing (outside the per-call jitted path)
# ----------------------------------------------------------------------------
def pack_inputs(params, data):
    def pad_lanes(a):                       # zero-pad feature axis 32 -> 128
        return jnp.pad(a, ((0, 0), (0, HP - a.shape[-1])))

    x_l, w_l = [], []
    for t in USE_NODES:
        x = data['x'][t]
        x_l.append(jnp.pad(x, ((0, MAX_N - x.shape[0]), (0, MAX_F - x.shape[1]))))
        w_t = pad_lanes(params['fc'][t]['w_t'])                        # (F_in, HP)
        w_l.append(jnp.pad(w_t, ((0, MAX_F - w_t.shape[0]), (0, 0))))  # (MAX_F, HP)
    x_stack = jnp.stack(x_l, 0)                                        # (4, 16, 24)
    w_stack = jnp.stack(w_l, 0)                                        # (4, 24, 128)

    def gat_rows(g, bn, act):
        return [pad_lanes(g['att_src']), pad_lanes(g['att_dst']), pad_lanes(g['bias']),
                pad_lanes(bn['gamma']), pad_lanes(bn['beta']), pad_lanes(act)]

    rows = []
    rows += [pad_lanes(params['fc'][t]['b']) for t in USE_NODES]       # fc biases
    rows += [pad_lanes(params['act'][t]) for t in USE_NODES]           # fc PReLU slopes
    rows += gat_rows(params['intra_mp'][0], params['bn_mp'][0], params['action_mp'][0])
    for i in range(len(SCHEMA)):
        rows += gat_rows(params['intra'][i], params['bn'][i], params['action'][i])
    rows += [pad_lanes(params['enc_mask_token'])]
    par_slab = jnp.concatenate(rows, axis=0)                           # (33, 128)
    assert par_slab.shape == (NPAR, HP)

    def pad_adj(a):
        return jnp.pad(a, ((0, MAX_N - a.shape[0]), (0, MAX_N - a.shape[1])))
    adjs = [data['adj'][MP[0]]] + [data['adj'][e] for e in SCHEMA]
    adj_slab = jnp.stack([pad_adj(a) for a in adjs], 0)                # (4, 16, 16)

    return {'x': x_stack, 'w': w_stack, 'par': par_slab, 'adj': adj_slab}


# ----------------------------------------------------------------------------
# Forward pass (jitted): mask generation + single kernel launch
# ----------------------------------------------------------------------------
def cross_view_forward(packed, key):
    n_p = N_NODES[MAIN_NODE]
    num_mask = jnp.array([int(r * n_p) for r in R_RATE], jnp.int32)[:, None]   # (3, 1)
    # batched torch.randperm analogue: rank of each node under a random key, masked if rank < k
    u = jax.random.uniform(key, (3, n_p))
    ranks = jnp.argsort(jnp.argsort(u, axis=-1), axis=-1)
    masks = (ranks < num_mask).astype(jnp.float32)[..., None]                  # (3, 16, 1)
    return crossview_call(packed['x'], packed['w'], packed['par'], packed['adj'], masks)


# ----------------------------------------------------------------------------
# Main
# ----------------------------------------------------------------------------
if __name__ == "__main__":
    key = jax.random.PRNGKey(0)
    kp, kd, km = jax.random.split(key, 3)
    params = make_params(kp)
    data = make_data(kd)

    packed = pack_inputs(params, data)          # one-time parameter/data packing
    forward = jax.jit(cross_view_forward)
    loss = jax.block_until_ready(forward(packed, km))
    assert loss.shape == () and jnp.isfinite(loss), f"bad loss: {loss}"
    print("KERNEL_OK")
</pallas_src>

<mosaic_0001>
module attributes {stable_mosaic.version = 11 : i64} {
  func.func @crossview_kernel(%arg0: memref<4x16x24xf32, #tpu.memory_space<vmem>>, %arg1: memref<4x24x128xf32, #tpu.memory_space<vmem>>, %arg2: memref<33x128xf32, #tpu.memory_space<vmem>>, %arg3: memref<4x16x16xf32, #tpu.memory_space<vmem>>, %arg4: memref<3x16x1xf32, #tpu.memory_space<vmem>>, %arg5: memref<1x128xf32, #tpu.memory_space<vmem>>) attributes {dimension_semantics = [], scalar_prefetch = 0 : i64, scratch_operands = 0 : i64, tpu.core_type = #tpu.core_type<tc>} {
    %c0 = arith.constant 0 : index
    %c0_0 = arith.constant 0 : index
    %c0_1 = arith.constant 0 : index
    %0 = vector.load %arg0[%c0, %c0_0, %c0_1] : memref<4x16x24xf32, #tpu.memory_space<vmem>>, vector<4x16x24xf32>
    %c0_2 = arith.constant 0 : index
    %c0_3 = arith.constant 0 : index
    %c0_4 = arith.constant 0 : index
    %1 = vector.load %arg1[%c0_2, %c0_3, %c0_4] : memref<4x24x128xf32, #tpu.memory_space<vmem>>, vector<4x24x128xf32>
    %c0_5 = arith.constant 0 : index
    %c0_6 = arith.constant 0 : index
    %2 = vector.load %arg2[%c0_5, %c0_6] : memref<33x128xf32, #tpu.memory_space<vmem>>, vector<33x128xf32>
    %c0_7 = arith.constant 0 : index
    %c0_8 = arith.constant 0 : index
    %c0_9 = arith.constant 0 : index
    %3 = vector.load %arg3[%c0_7, %c0_8, %c0_9] : memref<4x16x16xf32, #tpu.memory_space<vmem>>, vector<4x16x16xf32>
    %c0_10 = arith.constant 0 : index
    %c0_11 = arith.constant 0 : index
    %c0_12 = arith.constant 0 : index
    %4 = vector.load %arg4[%c0_10, %c0_11, %c0_12] : memref<3x16x1xf32, #tpu.memory_space<vmem>>, vector<3x16x1xf32>
    %5 = vector.extract_strided_slice %2 {offsets = [0, 0], sizes = [4, 128], strides = [1, 1]} : vector<33x128xf32> to vector<4x128xf32>
    %6 = vector.extract_strided_slice %2 {offsets = [4, 0], sizes = [4, 128], strides = [1, 1]} : vector<33x128xf32> to vector<4x128xf32>
    %7 = vector.extract_strided_slice %2 {offsets = [8, 0], sizes = [6, 128], strides = [1, 1]} : vector<33x128xf32> to vector<6x128xf32>
    %8 = vector.extract_strided_slice %2 {offsets = [14, 0], sizes = [6, 128], strides = [1, 1]} : vector<33x128xf32> to vector<6x128xf32>
    %9 = vector.extract_strided_slice %2 {offsets = [20, 0], sizes = [6, 128], strides = [1, 1]} : vector<33x128xf32> to vector<6x128xf32>
    %10 = vector.extract_strided_slice %2 {offsets = [26, 0], sizes = [6, 128], strides = [1, 1]} : vector<33x128xf32> to vector<6x128xf32>
    %11 = vector.extract_strided_slice %2 {offsets = [32, 0], sizes = [1, 128], strides = [1, 1]} : vector<33x128xf32> to vector<1x128xf32>
    %12 = vector.extract_strided_slice %0 {offsets = [0, 0, 0], sizes = [1, 16, 24], strides = [1, 1, 1]} : vector<4x16x24xf32> to vector<1x16x24xf32>
    %13 = vector.shape_cast %12 : vector<1x16x24xf32> to vector<16x24xf32>
    %14 = vector.extract_strided_slice %1 {offsets = [0, 0, 0], sizes = [1, 24, 128], strides = [1, 1, 1]} : vector<4x24x128xf32> to vector<1x24x128xf32>
    %15 = vector.shape_cast %14 : vector<1x24x128xf32> to vector<24x128xf32>
    %cst = arith.constant dense<0.000000e+00> : vector<16x128xf32>
    %16 = tpu.matmul %13, %15, %cst {dimension_numbers = #tpu.dot_dimension_numbers<[1], [0], [0], [1], [0, 0, 1, 1], [], []>} : vector<16x24xf32>, vector<24x128xf32>, vector<16x128xf32> -> vector<16x128xf32>
    %17 = vector.extract_strided_slice %5 {offsets = [0, 0], sizes = [1, 128], strides = [1, 1]} : vector<4x128xf32> to vector<1x128xf32>
    %18 = vector.broadcast %17 : vector<1x128xf32> to vector<16x128xf32>
    %19 = arith.addf %16, %18 : vector<16x128xf32>
    %20 = vector.extract_strided_slice %6 {offsets = [0, 0], sizes = [1, 128], strides = [1, 1]} : vector<4x128xf32> to vector<1x128xf32>
    %cst_13 = arith.constant 0.000000e+00 : f32
    %21 = vector.broadcast %cst_13 : f32 to vector<16x128xf32>
    %22 = arith.cmpf oge, %19, %21 : vector<16x128xf32>
    %23 = vector.broadcast %20 : vector<1x128xf32> to vector<16x128xf32>
    %24 = arith.mulf %23, %19 : vector<16x128xf32>
    %25 = arith.select %22, %19, %24 : vector<16x128xi1>, vector<16x128xf32>
    %26 = vector.extract_strided_slice %0 {offsets = [1, 0, 0], sizes = [1, 16, 24], strides = [1, 1, 1]} : vector<4x16x24xf32> to vector<1x16x24xf32>
    %27 = vector.shape_cast %26 : vector<1x16x24xf32> to vector<16x24xf32>
    %28 = vector.extract_strided_slice %1 {offsets = [1, 0, 0], sizes = [1, 24, 128], strides = [1, 1, 1]} : vector<4x24x128xf32> to vector<1x24x128xf32>
    %29 = vector.shape_cast %28 : vector<1x24x128xf32> to vector<24x128xf32>
    %cst_14 = arith.constant dense<0.000000e+00> : vector<16x128xf32>
    %30 = tpu.matmul %27, %29, %cst_14 {dimension_numbers = #tpu.dot_dimension_numbers<[1], [0], [0], [1], [0, 0, 1, 1], [], []>} : vector<16x24xf32>, vector<24x128xf32>, vector<16x128xf32> -> vector<16x128xf32>
    %31 = vector.extract_strided_slice %30 {offsets = [0, 0], sizes = [12, 128], strides = [1, 1]} : vector<16x128xf32> to vector<12x128xf32>
    %32 = vector.extract_strided_slice %5 {offsets = [1, 0], sizes = [1, 128], strides = [1, 1]} : vector<4x128xf32> to vector<1x128xf32>
    %33 = vector.broadcast %32 : vector<1x128xf32> to vector<12x128xf32>
    %34 = arith.addf %31, %33 : vector<12x128xf32>
    %35 = vector.extract_strided_slice %6 {offsets = [1, 0], sizes = [1, 128], strides = [1, 1]} : vector<4x128xf32> to vector<1x128xf32>
    %cst_15 = arith.constant 0.000000e+00 : f32
    %36 = vector.broadcast %cst_15 : f32 to vector<12x128xf32>
    %37 = arith.cmpf oge, %34, %36 : vector<12x128xf32>
    %38 = vector.broadcast %35 : vector<1x128xf32> to vector<12x128xf32>
    %39 = arith.mulf %38, %34 : vector<12x128xf32>
    %40 = arith.select %37, %34, %39 : vector<12x128xi1>, vector<12x128xf32>
    %41 = vector.extract_strided_slice %0 {offsets = [2, 0, 0], sizes = [1, 16, 24], strides = [1, 1, 1]} : vector<4x16x24xf32> to vector<1x16x24xf32>
    %42 = vector.shape_cast %41 : vector<1x16x24xf32> to vector<16x24xf32>
    %43 = vector.extract_strided_slice %1 {offsets = [2, 0, 0], sizes = [1, 24, 128], strides = [1, 1, 1]} : vector<4x24x128xf32> to vector<1x24x128xf32>
    %44 = vector.shape_cast %43 : vector<1x24x128xf32> to vector<24x128xf32>
    %cst_16 = arith.constant dense<0.000000e+00> : vector<16x128xf32>
    %45 = tpu.matmul %42, %44, %cst_16 {dimension_numbers = #tpu.dot_dimension_numbers<[1], [0], [0], [1], [0, 0, 1, 1], [], []>} : vector<16x24xf32>, vector<24x128xf32>, vector<16x128xf32> -> vector<16x128xf32>
    %46 = vector.extract_strided_slice %45 {offsets = [0, 0], sizes = [8, 128], strides = [1, 1]} : vector<16x128xf32> to vector<8x128xf32>
    %47 = vector.extract_strided_slice %5 {offsets = [2, 0], sizes = [1, 128], strides = [1, 1]} : vector<4x128xf32> to vector<1x128xf32>
    %48 = vector.broadcast %47 : vector<1x128xf32> to vector<8x128xf32>
    %49 = arith.addf %46, %48 : vector<8x128xf32>
    %50 = vector.extract_strided_slice %6 {offsets = [2, 0], sizes = [1, 128], strides = [1, 1]} : vector<4x128xf32> to vector<1x128xf32>
    %cst_17 = arith.constant 0.000000e+00 : f32
    %51 = vector.broadcast %cst_17 : f32 to vector<8x128xf32>
    %52 = arith.cmpf oge, %49, %51 : vector<8x128xf32>
    %53 = vector.broadcast %50 : vector<1x128xf32> to vector<8x128xf32>
    %54 = arith.mulf %53, %49 : vector<8x128xf32>
    %55 = arith.select %52, %49, %54 : vector<8x128xi1>, vector<8x128xf32>
    %56 = vector.extract_strided_slice %0 {offsets = [3, 0, 0], sizes = [1, 16, 24], strides = [1, 1, 1]} : vector<4x16x24xf32> to vector<1x16x24xf32>
    %57 = vector.shape_cast %56 : vector<1x16x24xf32> to vector<16x24xf32>
    %58 = vector.extract_strided_slice %1 {offsets = [3, 0, 0], sizes = [1, 24, 128], strides = [1, 1, 1]} : vector<4x24x128xf32> to vector<1x24x128xf32>
    %59 = vector.shape_cast %58 : vector<1x24x128xf32> to vector<24x128xf32>
    %cst_18 = arith.constant dense<0.000000e+00> : vector<16x128xf32>
    %60 = tpu.matmul %57, %59, %cst_18 {dimension_numbers = #tpu.dot_dimension_numbers<[1], [0], [0], [1], [0, 0, 1, 1], [], []>} : vector<16x24xf32>, vector<24x128xf32>, vector<16x128xf32> -> vector<16x128xf32>
    %61 = vector.extract_strided_slice %60 {offsets = [0, 0], sizes = [8, 128], strides = [1, 1]} : vector<16x128xf32> to vector<8x128xf32>
    %62 = vector.extract_strided_slice %5 {offsets = [3, 0], sizes = [1, 128], strides = [1, 1]} : vector<4x128xf32> to vector<1x128xf32>
    %63 = vector.broadcast %62 : vector<1x128xf32> to vector<8x128xf32>
    %64 = arith.addf %61, %63 : vector<8x128xf32>
    %65 = vector.extract_strided_slice %6 {offsets = [3, 0], sizes = [1, 128], strides = [1, 1]} : vector<4x128xf32> to vector<1x128xf32>
    %cst_19 = arith.constant 0.000000e+00 : f32
    %66 = vector.broadcast %cst_19 : f32 to vector<8x128xf32>
    %67 = arith.cmpf oge, %64, %66 : vector<8x128xf32>
    %68 = vector.broadcast %65 : vector<1x128xf32> to vector<8x128xf32>
    %69 = arith.mulf %68, %64 : vector<8x128xf32>
    %70 = arith.select %67, %64, %69 : vector<8x128xi1>, vector<8x128xf32>
    %71 = vector.extract_strided_slice %3 {offsets = [0, 0, 0], sizes = [1, 12, 16], strides = [1, 1, 1]} : vector<4x16x16xf32> to vector<1x12x16xf32>
    %72 = vector.shape_cast %71 : vector<1x12x16xf32> to vector<12x16xf32>
    %73 = vector.extract_strided_slice %7 {offsets = [0, 0], sizes = [1, 128], strides = [1, 1]} : vector<6x128xf32> to vector<1x128xf32>
    %74 = vector.extract_strided_slice %7 {offsets = [1, 0], sizes = [1, 128], strides = [1, 1]} : vector<6x128xf32> to vector<1x128xf32>
    %75 = vector.extract_strided_slice %7 {offsets = [2, 0], sizes = [1, 128], strides = [1, 1]} : vector<6x128xf32> to vector<1x128xf32>
    "tpu.trace_start"() <{level = 10 : i32, message = "oh,nh->on"}> : () -> ()
    %cst_20 = arith.constant dense<0.000000e+00> : vector<1x16xf32>
    %76 = tpu.matmul %73, %25, %cst_20 {dimension_numbers = #tpu.dot_dimension_numbers<[1], [1], [0], [0], [0, 0, 1, 0], [], []>} : vector<1x128xf32>, vector<16x128xf32>, vector<1x16xf32> -> vector<1x16xf32>
    "tpu.trace_stop"() : () -> ()
    %77 = vector.broadcast %74 : vector<1x128xf32> to vector<12x128xf32>
    %78 = arith.mulf %40, %77 : vector<12x128xf32>
    %cst_21 = arith.constant dense<0.000000e+00> : vector<12xf32>
    %79 = vector.multi_reduction <add>, %78, %cst_21 [1] : vector<12x128xf32> to vector<12xf32>
    %80 = vector.shape_cast %79 : vector<12xf32> to vector<12x1xf32>
    %81 = vector.broadcast %80 : vector<12x1xf32> to vector<12x16xf32>
    %82 = vector.broadcast %76 : vector<1x16xf32> to vector<12x16xf32>
    %83 = arith.addf %81, %82 : vector<12x16xf32>
    %cst_22 = arith.constant 0.000000e+00 : f32
    %84 = vector.broadcast %cst_22 : f32 to vector<12x16xf32>
    %85 = arith.cmpf oge, %83, %84 : vector<12x16xf32>
    %cst_23 = arith.constant 0.00999999977 : f32
    %86 = vector.broadcast %cst_23 : f32 to vector<12x16xf32>
    %87 = arith.mulf %86, %83 : vector<12x16xf32>
    %88 = arith.select %85, %83, %87 : vector<12x16xi1>, vector<12x16xf32>
    %cst_24 = arith.constant 5.000000e-01 : f32
    %89 = vector.broadcast %cst_24 : f32 to vector<12x16xf32>
    %90 = arith.cmpf ogt, %72, %89 : vector<12x16xf32>
    %cst_25 = arith.constant -1.000000e+30 : f32
    %91 = vector.broadcast %cst_25 : f32 to vector<12x16xf32>
    %92 = arith.select %90, %88, %91 : vector<12x16xi1>, vector<12x16xf32>
    %cst_26 = arith.constant dense<0xFF800000> : vector<12xf32>
    %93 = vector.multi_reduction <maximumf>, %92, %cst_26 [1] : vector<12x16xf32> to vector<12xf32>
    %94 = vector.shape_cast %93 : vector<12xf32> to vector<12x1xf32>
    %95 = vector.broadcast %94 : vector<12x1xf32> to vector<12x16xf32>
    %96 = arith.subf %92, %95 : vector<12x16xf32>
    %97 = math.exp %96 : vector<12x16xf32>
    %cst_27 = arith.constant 0.000000e+00 : f32
    %98 = vector.broadcast %cst_27 : f32 to vector<12x16xf32>
    %99 = arith.select %90, %97, %98 : vector<12x16xi1>, vector<12x16xf32>
    %cst_28 = arith.constant dense<0.000000e+00> : vector<12xf32>
    %100 = vector.multi_reduction <add>, %99, %cst_28 [1] : vector<12x16xf32> to vector<12xf32>
    %101 = vector.shape_cast %100 : vector<12xf32> to vector<12x1xf32>
    %cst_29 = arith.constant 0.000000e+00 : f32
    %102 = vector.broadcast %cst_29 : f32 to vector<12x1xf32>
    %103 = arith.cmpf ogt, %101, %102 : vector<12x1xf32>
    %cst_30 = arith.constant 1.000000e+00 : f32
    %104 = vector.broadcast %cst_30 : f32 to vector<12x1xf32>
    %105 = arith.select %103, %101, %104 : vector<12x1xi1>, vector<12x1xf32>
    %106 = vector.broadcast %105 : vector<12x1xf32> to vector<12x16xf32>
    %107 = arith.divf %99, %106 : vector<12x16xf32>
    %cst_31 = arith.constant dense<0.000000e+00> : vector<12x128xf32>
    %108 = tpu.matmul %107, %25, %cst_31 {dimension_numbers = #tpu.dot_dimension_numbers<[1], [0], [0], [1], [0, 0, 1, 1], [], []>} : vector<12x16xf32>, vector<16x128xf32>, vector<12x128xf32> -> vector<12x128xf32>
    %109 = vector.broadcast %75 : vector<1x128xf32> to vector<12x128xf32>
    %110 = arith.addf %108, %109 : vector<12x128xf32>
    %111 = vector.extract_strided_slice %7 {offsets = [3, 0], sizes = [1, 128], strides = [1, 1]} : vector<6x128xf32> to vector<1x128xf32>
    %112 = vector.extract_strided_slice %7 {offsets = [4, 0], sizes = [1, 128], strides = [1, 1]} : vector<6x128xf32> to vector<1x128xf32>
    %113 = vector.extract_strided_slice %7 {offsets = [5, 0], sizes = [1, 128], strides = [1, 1]} : vector<6x128xf32> to vector<1x128xf32>
    %cst_32 = arith.constant dense<0.000000e+00> : vector<128xf32>
    %114 = vector.multi_reduction <add>, %110, %cst_32 [0] : vector<12x128xf32> to vector<128xf32>
    %115 = vector.shape_cast %114 : vector<128xf32> to vector<1x128xf32>
    %cst_33 = arith.constant 1.200000e+01 : f32
    %116 = vector.broadcast %cst_33 : f32 to vector<1x128xf32>
    %117 = arith.divf %115, %116 : vector<1x128xf32>
    %118 = vector.broadcast %117 : vector<1x128xf32> to vector<12x128xf32>
    %119 = arith.subf %110, %118 : vector<12x128xf32>
    %120 = arith.mulf %119, %119 : vector<12x128xf32>
    %cst_34 = arith.constant dense<0.000000e+00> : vector<128xf32>
    %121 = vector.multi_reduction <add>, %120, %cst_34 [0] : vector<12x128xf32> to vector<128xf32>
    %122 = vector.shape_cast %121 : vector<128xf32> to vector<1x128xf32>
    %cst_35 = arith.constant 1.200000e+01 : f32
    %123 = vector.broadcast %cst_35 : f32 to vector<1x128xf32>
    %124 = arith.divf %122, %123 : vector<1x128xf32>
    %125 = vector.broadcast %117 : vector<1x128xf32> to vector<12x128xf32>
    %126 = arith.subf %110, %125 : vector<12x128xf32>
    %cst_36 = arith.constant 9.99999974E-6 : f32
    %127 = vector.broadcast %cst_36 : f32 to vector<1x128xf32>
    %128 = arith.addf %124, %127 : vector<1x128xf32>
    %129 = math.rsqrt %128 : vector<1x128xf32>
    %130 = vector.broadcast %129 : vector<1x128xf32> to vector<12x128xf32>
    %131 = arith.mulf %126, %130 : vector<12x128xf32>
    %132 = vector.broadcast %111 : vector<1x128xf32> to vector<12x128xf32>
    %133 = arith.mulf %131, %132 : vector<12x128xf32>
    %134 = vector.broadcast %112 : vector<1x128xf32> to vector<12x128xf32>
    %135 = arith.addf %133, %134 : vector<12x128xf32>
    %cst_37 = arith.constant 0.000000e+00 : f32
    %136 = vector.broadcast %cst_37 : f32 to vector<12x128xf32>
    %137 = arith.cmpf oge, %135, %136 : vector<12x128xf32>
    %138 = vector.broadcast %113 : vector<1x128xf32> to vector<12x128xf32>
    %139 = arith.mulf %138, %135 : vector<12x128xf32>
    %140 = arith.select %137, %135, %139 : vector<12x128xi1>, vector<12x128xf32>
    %141 = vector.extract_strided_slice %3 {offsets = [1, 0, 0], sizes = [1, 16, 12], strides = [1, 1, 1]} : vector<4x16x16xf32> to vector<1x16x12xf32>
    %142 = vector.shape_cast %141 : vector<1x16x12xf32> to vector<16x12xf32>
    %143 = vector.extract_strided_slice %3 {offsets = [2, 0, 0], sizes = [1, 16, 8], strides = [1, 1, 1]} : vector<4x16x16xf32> to vector<1x16x8xf32>
    %144 = vector.shape_cast %143 : vector<1x16x8xf32> to vector<16x8xf32>
    %145 = vector.extract_strided_slice %3 {offsets = [3, 0, 0], sizes = [1, 16, 8], strides = [1, 1, 1]} : vector<4x16x16xf32> to vector<1x16x8xf32>
    %146 = vector.shape_cast %145 : vector<1x16x8xf32> to vector<16x8xf32>
    %147 = vector.extract_strided_slice %8 {offsets = [0, 0], sizes = [1, 128], strides = [1, 1]} : vector<6x128xf32> to vector<1x128xf32>
    %148 = vector.extract_strided_slice %8 {offsets = [1, 0], sizes = [1, 128], strides = [1, 1]} : vector<6x128xf32> to vector<1x128xf32>
    %149 = vector.extract_strided_slice %8 {offsets = [2, 0], sizes = [1, 128], strides = [1, 1]} : vector<6x128xf32> to vector<1x128xf32>
    "tpu.trace_start"() <{level = 10 : i32, message = "oh,nh->on"}> : () -> ()
    %cst_38 = arith.constant dense<0.000000e+00> : vector<1x12xf32>
    %150 = tpu.matmul %147, %140, %cst_38 {dimension_numbers = #tpu.dot_dimension_numbers<[1], [1], [0], [0], [0, 0, 1, 0], [], []>} : vector<1x128xf32>, vector<12x128xf32>, vector<1x12xf32> -> vector<1x12xf32>
    "tpu.trace_stop"() : () -> ()
    %151 = vector.broadcast %148 : vector<1x128xf32> to vector<16x128xf32>
    %152 = arith.mulf %25, %151 : vector<16x128xf32>
    %cst_39 = arith.constant dense<0.000000e+00> : vector<16xf32>
    %153 = vector.multi_reduction <add>, %152, %cst_39 [1] : vector<16x128xf32> to vector<16xf32>
    %154 = vector.shape_cast %153 : vector<16xf32> to vector<16x1xf32>
    %155 = vector.broadcast %154 : vector<16x1xf32> to vector<16x12xf32>
    %156 = vector.broadcast %150 : vector<1x12xf32> to vector<16x12xf32>
    %157 = arith.addf %155, %156 : vector<16x12xf32>
    %cst_40 = arith.constant 0.000000e+00 : f32
    %158 = vector.broadcast %cst_40 : f32 to vector<16x12xf32>
    %159 = arith.cmpf oge, %157, %158 : vector<16x12xf32>
    %cst_41 = arith.constant 0.00999999977 : f32
    %160 = vector.broadcast %cst_41 : f32 to vector<16x12xf32>
    %161 = arith.mulf %160, %157 : vector<16x12xf32>
    %162 = arith.select %159, %157, %161 : vector<16x12xi1>, vector<16x12xf32>
    %cst_42 = arith.constant 5.000000e-01 : f32
    %163 = vector.broadcast %cst_42 : f32 to vector<16x12xf32>
    %164 = arith.cmpf ogt, %142, %163 : vector<16x12xf32>
    %cst_43 = arith.constant -1.000000e+30 : f32
    %165 = vector.broadcast %cst_43 : f32 to vector<16x12xf32>
    %166 = arith.select %164, %162, %165 : vector<16x12xi1>, vector<16x12xf32>
    %cst_44 = arith.constant dense<0xFF800000> : vector<16xf32>
    %167 = vector.multi_reduction <maximumf>, %166, %cst_44 [1] : vector<16x12xf32> to vector<16xf32>
    %168 = vector.shape_cast %167 : vector<16xf32> to vector<16x1xf32>
    %169 = vector.broadcast %168 : vector<16x1xf32> to vector<16x12xf32>
    %170 = arith.subf %166, %169 : vector<16x12xf32>
    %171 = math.exp %170 : vector<16x12xf32>
    %cst_45 = arith.constant 0.000000e+00 : f32
    %172 = vector.broadcast %cst_45 : f32 to vector<16x12xf32>
    %173 = arith.select %164, %171, %172 : vector<16x12xi1>, vector<16x12xf32>
    %cst_46 = arith.constant dense<0.000000e+00> : vector<16xf32>
    %174 = vector.multi_reduction <add>, %173, %cst_46 [1] : vector<16x12xf32> to vector<16xf32>
    %175 = vector.shape_cast %174 : vector<16xf32> to vector<16x1xf32>
    %cst_47 = arith.constant 0.000000e+00 : f32
    %176 = vector.broadcast %cst_47 : f32 to vector<16x1xf32>
    %177 = arith.cmpf ogt, %175, %176 : vector<16x1xf32>
    %cst_48 = arith.constant 1.000000e+00 : f32
    %178 = vector.broadcast %cst_48 : f32 to vector<16x1xf32>
    %179 = arith.select %177, %175, %178 : vector<16x1xi1>, vector<16x1xf32>
    %180 = vector.broadcast %179 : vector<16x1xf32> to vector<16x12xf32>
    %181 = arith.divf %173, %180 : vector<16x12xf32>
    %cst_49 = arith.constant dense<0.000000e+00> : vector<16x128xf32>
    %182 = tpu.matmul %181, %140, %cst_49 {dimension_numbers = #tpu.dot_dimension_numbers<[1], [0], [0], [1], [0, 0, 1, 1], [], []>} : vector<16x12xf32>, vector<12x128xf32>, vector<16x128xf32> -> vector<16x128xf32>
    %183 = vector.broadcast %149 : vector<1x128xf32> to vector<16x128xf32>
    %184 = arith.addf %182, %183 : vector<16x128xf32>
    %185 = vector.extract_strided_slice %8 {offsets = [3, 0], sizes = [1, 128], strides = [1, 1]} : vector<6x128xf32> to vector<1x128xf32>
    %186 = vector.extract_strided_slice %8 {offsets = [4, 0], sizes = [1, 128], strides = [1, 1]} : vector<6x128xf32> to vector<1x128xf32>
    %187 = vector.extract_strided_slice %8 {offsets = [5, 0], sizes = [1, 128], strides = [1, 1]} : vector<6x128xf32> to vector<1x128xf32>
    %cst_50 = arith.constant dense<0.000000e+00> : vector<128xf32>
    %188 = vector.multi_reduction <add>, %184, %cst_50 [0] : vector<16x128xf32> to vector<128xf32>
    %189 = vector.shape_cast %188 : vector<128xf32> to vector<1x128xf32>
    %cst_51 = arith.constant 1.600000e+01 : f32
    %190 = vector.broadcast %cst_51 : f32 to vector<1x128xf32>
    %191 = arith.divf %189, %190 : vector<1x128xf32>
    %192 = vector.broadcast %191 : vector<1x128xf32> to vector<16x128xf32>
    %193 = arith.subf %184, %192 : vector<16x128xf32>
    %194 = arith.mulf %193, %193 : vector<16x128xf32>
    %cst_52 = arith.constant dense<0.000000e+00> : vector<128xf32>
    %195 = vector.multi_reduction <add>, %194, %cst_52 [0] : vector<16x128xf32> to vector<128xf32>
    %196 = vector.shape_cast %195 : vector<128xf32> to vector<1x128xf32>
    %cst_53 = arith.constant 1.600000e+01 : f32
    %197 = vector.broadcast %cst_53 : f32 to vector<1x128xf32>
    %198 = arith.divf %196, %197 : vector<1x128xf32>
    %199 = vector.broadcast %191 : vector<1x128xf32> to vector<16x128xf32>
    %200 = arith.subf %184, %199 : vector<16x128xf32>
    %cst_54 = arith.constant 9.99999974E-6 : f32
    %201 = vector.broadcast %cst_54 : f32 to vector<1x128xf32>
    %202 = arith.addf %198, %201 : vector<1x128xf32>
    %203 = math.rsqrt %202 : vector<1x128xf32>
    %204 = vector.broadcast %203 : vector<1x128xf32> to vector<16x128xf32>
    %205 = arith.mulf %200, %204 : vector<16x128xf32>
    %206 = vector.broadcast %185 : vector<1x128xf32> to vector<16x128xf32>
    %207 = arith.mulf %205, %206 : vector<16x128xf32>
    %208 = vector.broadcast %186 : vector<1x128xf32> to vector<16x128xf32>
    %209 = arith.addf %207, %208 : vector<16x128xf32>
    %cst_55 = arith.constant 0.000000e+00 : f32
    %210 = vector.broadcast %cst_55 : f32 to vector<16x128xf32>
    %211 = arith.cmpf oge, %209, %210 : vector<16x128xf32>
    %212 = vector.broadcast %187 : vector<1x128xf32> to vector<16x128xf32>
    %213 = arith.mulf %212, %209 : vector<16x128xf32>
    %214 = arith.select %211, %209, %213 : vector<16x128xi1>, vector<16x128xf32>
    %215 = vector.extract_strided_slice %9 {offsets = [0, 0], sizes = [1, 128], strides = [1, 1]} : vector<6x128xf32> to vector<1x128xf32>
    %216 = vector.extract_strided_slice %9 {offsets = [1, 0], sizes = [1, 128], strides = [1, 1]} : vector<6x128xf32> to vector<1x128xf32>
    %217 = vector.extract_strided_slice %9 {offsets = [2, 0], sizes = [1, 128], strides = [1, 1]} : vector<6x128xf32> to vector<1x128xf32>
    "tpu.trace_start"() <{level = 10 : i32, message = "oh,nh->on"}> : () -> ()
    %cst_56 = arith.constant dense<0.000000e+00> : vector<1x8xf32>
    %218 = tpu.matmul %215, %55, %cst_56 {dimension_numbers = #tpu.dot_dimension_numbers<[1], [1], [0], [0], [0, 0, 1, 0], [], []>} : vector<1x128xf32>, vector<8x128xf32>, vector<1x8xf32> -> vector<1x8xf32>
    "tpu.trace_stop"() : () -> ()
    %219 = vector.broadcast %216 : vector<1x128xf32> to vector<16x128xf32>
    %220 = arith.mulf %25, %219 : vector<16x128xf32>
    %cst_57 = arith.constant dense<0.000000e+00> : vector<16xf32>
    %221 = vector.multi_reduction <add>, %220, %cst_57 [1] : vector<16x128xf32> to vector<16xf32>
    %222 = vector.shape_cast %221 : vector<16xf32> to vector<16x1xf32>
    %223 = vector.broadcast %222 : vector<16x1xf32> to vector<16x8xf32>
    %224 = vector.broadcast %218 : vector<1x8xf32> to vector<16x8xf32>
    %225 = arith.addf %223, %224 : vector<16x8xf32>
    %cst_58 = arith.constant 0.000000e+00 : f32
    %226 = vector.broadcast %cst_58 : f32 to vector<16x8xf32>
    %227 = arith.cmpf oge, %225, %226 : vector<16x8xf32>
    %cst_59 = arith.constant 0.00999999977 : f32
    %228 = vector.broadcast %cst_59 : f32 to vector<16x8xf32>
    %229 = arith.mulf %228, %225 : vector<16x8xf32>
    %230 = arith.select %227, %225, %229 : vector<16x8xi1>, vector<16x8xf32>
    %cst_60 = arith.constant 5.000000e-01 : f32
    %231 = vector.broadcast %cst_60 : f32 to vector<16x8xf32>
    %232 = arith.cmpf ogt, %144, %231 : vector<16x8xf32>
    %cst_61 = arith.constant -1.000000e+30 : f32
    %233 = vector.broadcast %cst_61 : f32 to vector<16x8xf32>
    %234 = arith.select %232, %230, %233 : vector<16x8xi1>, vector<16x8xf32>
    %cst_62 = arith.constant dense<0xFF800000> : vector<16xf32>
    %235 = vector.multi_reduction <maximumf>, %234, %cst_62 [1] : vector<16x8xf32> to vector<16xf32>
    %236 = vector.shape_cast %235 : vector<16xf32> to vector<16x1xf32>
    %237 = vector.broadcast %236 : vector<16x1xf32> to vector<16x8xf32>
    %238 = arith.subf %234, %237 : vector<16x8xf32>
    %239 = math.exp %238 : vector<16x8xf32>
    %cst_63 = arith.constant 0.000000e+00 : f32
    %240 = vector.broadcast %cst_63 : f32 to vector<16x8xf32>
    %241 = arith.select %232, %239, %240 : vector<16x8xi1>, vector<16x8xf32>
    %cst_64 = arith.constant dense<0.000000e+00> : vector<16xf32>
    %242 = vector.multi_reduction <add>, %241, %cst_64 [1] : vector<16x8xf32> to vector<16xf32>
    %243 = vector.shape_cast %242 : vector<16xf32> to vector<16x1xf32>
    %cst_65 = arith.constant 0.000000e+00 : f32
    %244 = vector.broadcast %cst_65 : f32 to vector<16x1xf32>
    %245 = arith.cmpf ogt, %243, %244 : vector<16x1xf32>
    %cst_66 = arith.constant 1.000000e+00 : f32
    %246 = vector.broadcast %cst_66 : f32 to vector<16x1xf32>
    %247 = arith.select %245, %243, %246 : vector<16x1xi1>, vector<16x1xf32>
    %248 = vector.broadcast %247 : vector<16x1xf32> to vector<16x8xf32>
    %249 = arith.divf %241, %248 : vector<16x8xf32>
    %cst_67 = arith.constant dense<0.000000e+00> : vector<16x128xf32>
    %250 = tpu.matmul %249, %55, %cst_67 {dimension_numbers = #tpu.dot_dimension_numbers<[1], [0], [0], [1], [0, 0, 1, 1], [], []>} : vector<16x8xf32>, vector<8x128xf32>, vector<16x128xf32> -> vector<16x128xf32>
    %251 = vector.broadcast %217 : vector<1x128xf32> to vector<16x128xf32>
    %252 = arith.addf %250, %251 : vector<16x128xf32>
    %253 = vector.extract_strided_slice %9 {offsets = [3, 0], sizes = [1, 128], strides = [1, 1]} : vector<6x128xf32> to vector<1x128xf32>
    %254 = vector.extract_strided_slice %9 {offsets = [4, 0], sizes = [1, 128], strides = [1, 1]} : vector<6x128xf32> to vector<1x128xf32>
    %255 = vector.extract_strided_slice %9 {offsets = [5, 0], sizes = [1, 128], strides = [1, 1]} : vector<6x128xf32> to vector<1x128xf32>
    %cst_68 = arith.constant dense<0.000000e+00> : vector<128xf32>
    %256 = vector.multi_reduction <add>, %252, %cst_68 [0] : vector<16x128xf32> to vector<128xf32>
    %257 = vector.shape_cast %256 : vector<128xf32> to vector<1x128xf32>
    %cst_69 = arith.constant 1.600000e+01 : f32
    %258 = vector.broadcast %cst_69 : f32 to vector<1x128xf32>
    %259 = arith.divf %257, %258 : vector<1x128xf32>
    %260 = vector.broadcast %259 : vector<1x128xf32> to vector<16x128xf32>
    %261 = arith.subf %252, %260 : vector<16x128xf32>
    %262 = arith.mulf %261, %261 : vector<16x128xf32>
    %cst_70 = arith.constant dense<0.000000e+00> : vector<128xf32>
    %263 = vector.multi_reduction <add>, %262, %cst_70 [0] : vector<16x128xf32> to vector<128xf32>
    %264 = vector.shape_cast %263 : vector<128xf32> to vector<1x128xf32>
    %cst_71 = arith.constant 1.600000e+01 : f32
    %265 = vector.broadcast %cst_71 : f32 to vector<1x128xf32>
    %266 = arith.divf %264, %265 : vector<1x128xf32>
    %267 = vector.broadcast %259 : vector<1x128xf32> to vector<16x128xf32>
    %268 = arith.subf %252, %267 : vector<16x128xf32>
    %cst_72 = arith.constant 9.99999974E-6 : f32
    %269 = vector.broadcast %cst_72 : f32 to vector<1x128xf32>
    %270 = arith.addf %266, %269 : vector<1x128xf32>
    %271 = math.rsqrt %270 : vector<1x128xf32>
    %272 = vector.broadcast %271 : vector<1x128xf32> to vector<16x128xf32>
    %273 = arith.mulf %268, %272 : vector<16x128xf32>
    %274 = vector.broadcast %253 : vector<1x128xf32> to vector<16x128xf32>
    %275 = arith.mulf %273, %274 : vector<16x128xf32>
    %276 = vector.broadcast %254 : vector<1x128xf32> to vector<16x128xf32>
    %277 = arith.addf %275, %276 : vector<16x128xf32>
    %cst_73 = arith.constant 0.000000e+00 : f32
    %278 = vector.broadcast %cst_73 : f32 to vector<16x128xf32>
    %279 = arith.cmpf oge, %277, %278 : vector<16x128xf32>
    %280 = vector.broadcast %255 : vector<1x128xf32> to vector<16x128xf32>
    %281 = arith.mulf %280, %277 : vector<16x128xf32>
    %282 = arith.select %279, %277, %281 : vector<16x128xi1>, vector<16x128xf32>
    %283 = vector.extract_strided_slice %10 {offsets = [0, 0], sizes = [1, 128], strides = [1, 1]} : vector<6x128xf32> to vector<1x128xf32>
    %284 = vector.extract_strided_slice %10 {offsets = [1, 0], sizes = [1, 128], strides = [1, 1]} : vector<6x128xf32> to vector<1x128xf32>
    %285 = vector.extract_strided_slice %10 {offsets = [2, 0], sizes = [1, 128], strides = [1, 1]} : vector<6x128xf32> to vector<1x128xf32>
    "tpu.trace_start"() <{level = 10 : i32, message = "oh,nh->on"}> : () -> ()
    %cst_74 = arith.constant dense<0.000000e+00> : vector<1x8xf32>
    %286 = tpu.matmul %283, %70, %cst_74 {dimension_numbers = #tpu.dot_dimension_numbers<[1], [1], [0], [0], [0, 0, 1, 0], [], []>} : vector<1x128xf32>, vector<8x128xf32>, vector<1x8xf32> -> vector<1x8xf32>
    "tpu.trace_stop"() : () -> ()
    %287 = vector.broadcast %284 : vector<1x128xf32> to vector<16x128xf32>
    %288 = arith.mulf %25, %287 : vector<16x128xf32>
    %cst_75 = arith.constant dense<0.000000e+00> : vector<16xf32>
    %289 = vector.multi_reduction <add>, %288, %cst_75 [1] : vector<16x128xf32> to vector<16xf32>
    %290 = vector.shape_cast %289 : vector<16xf32> to vector<16x1xf32>
    %291 = vector.broadcast %290 : vector<16x1xf32> to vector<16x8xf32>
    %292 = vector.broadcast %286 : vector<1x8xf32> to vector<16x8xf32>
    %293 = arith.addf %291, %292 : vector<16x8xf32>
    %cst_76 = arith.constant 0.000000e+00 : f32
    %294 = vector.broadcast %cst_76 : f32 to vector<16x8xf32>
    %295 = arith.cmpf oge, %293, %294 : vector<16x8xf32>
    %cst_77 = arith.constant 0.00999999977 : f32
    %296 = vector.broadcast %cst_77 : f32 to vector<16x8xf32>
    %297 = arith.mulf %296, %293 : vector<16x8xf32>
    %298 = arith.select %295, %293, %297 : vector<16x8xi1>, vector<16x8xf32>
    %cst_78 = arith.constant 5.000000e-01 : f32
    %299 = vector.broadcast %cst_78 : f32 to vector<16x8xf32>
    %300 = arith.cmpf ogt, %146, %299 : vector<16x8xf32>
    %cst_79 = arith.constant -1.000000e+30 : f32
    %301 = vector.broadcast %cst_79 : f32 to vector<16x8xf32>
    %302 = arith.select %300, %298, %301 : vector<16x8xi1>, vector<16x8xf32>
    %cst_80 = arith.constant dense<0xFF800000> : vector<16xf32>
    %303 = vector.multi_reduction <maximumf>, %302, %cst_80 [1] : vector<16x8xf32> to vector<16xf32>
    %304 = vector.shape_cast %303 : vector<16xf32> to vector<16x1xf32>
    %305 = vector.broadcast %304 : vector<16x1xf32> to vector<16x8xf32>
    %306 = arith.subf %302, %305 : vector<16x8xf32>
    %307 = math.exp %306 : vector<16x8xf32>
    %cst_81 = arith.constant 0.000000e+00 : f32
    %308 = vector.broadcast %cst_81 : f32 to vector<16x8xf32>
    %309 = arith.select %300, %307, %308 : vector<16x8xi1>, vector<16x8xf32>
    %cst_82 = arith.constant dense<0.000000e+00> : vector<16xf32>
    %310 = vector.multi_reduction <add>, %309, %cst_82 [1] : vector<16x8xf32> to vector<16xf32>
    %311 = vector.shape_cast %310 : vector<16xf32> to vector<16x1xf32>
    %cst_83 = arith.constant 0.000000e+00 : f32
    %312 = vector.broadcast %cst_83 : f32 to vector<16x1xf32>
    %313 = arith.cmpf ogt, %311, %312 : vector<16x1xf32>
    %cst_84 = arith.constant 1.000000e+00 : f32
    %314 = vector.broadcast %cst_84 : f32 to vector<16x1xf32>
    %315 = arith.select %313, %311, %314 : vector<16x1xi1>, vector<16x1xf32>
    %316 = vector.broadcast %315 : vector<16x1xf32> to vector<16x8xf32>
    %317 = arith.divf %309, %316 : vector<16x8xf32>
    %cst_85 = arith.constant dense<0.000000e+00> : vector<16x128xf32>
    %318 = tpu.matmul %317, %70, %cst_85 {dimension_numbers = #tpu.dot_dimension_numbers<[1], [0], [0], [1], [0, 0, 1, 1], [], []>} : vector<16x8xf32>, vector<8x128xf32>, vector<16x128xf32> -> vector<16x128xf32>
    %319 = vector.broadcast %285 : vector<1x128xf32> to vector<16x128xf32>
    %320 = arith.addf %318, %319 : vector<16x128xf32>
    %321 = vector.extract_strided_slice %10 {offsets = [3, 0], sizes = [1, 128], strides = [1, 1]} : vector<6x128xf32> to vector<1x128xf32>
    %322 = vector.extract_strided_slice %10 {offsets = [4, 0], sizes = [1, 128], strides = [1, 1]} : vector<6x128xf32> to vector<1x128xf32>
    %323 = vector.extract_strided_slice %10 {offsets = [5, 0], sizes = [1, 128], strides = [1, 1]} : vector<6x128xf32> to vector<1x128xf32>
    %cst_86 = arith.constant dense<0.000000e+00> : vector<128xf32>
    %324 = vector.multi_reduction <add>, %320, %cst_86 [0] : vector<16x128xf32> to vector<128xf32>
    %325 = vector.shape_cast %324 : vector<128xf32> to vector<1x128xf32>
    %cst_87 = arith.constant 1.600000e+01 : f32
    %326 = vector.broadcast %cst_87 : f32 to vector<1x128xf32>
    %327 = arith.divf %325, %326 : vector<1x128xf32>
    %328 = vector.broadcast %327 : vector<1x128xf32> to vector<16x128xf32>
    %329 = arith.subf %320, %328 : vector<16x128xf32>
    %330 = arith.mulf %329, %329 : vector<16x128xf32>
    %cst_88 = arith.constant dense<0.000000e+00> : vector<128xf32>
    %331 = vector.multi_reduction <add>, %330, %cst_88 [0] : vector<16x128xf32> to vector<128xf32>
    %332 = vector.shape_cast %331 : vector<128xf32> to vector<1x128xf32>
    %cst_89 = arith.constant 1.600000e+01 : f32
    %333 = vector.broadcast %cst_89 : f32 to vector<1x128xf32>
    %334 = arith.divf %332, %333 : vector<1x128xf32>
    %335 = vector.broadcast %327 : vector<1x128xf32> to vector<16x128xf32>
    %336 = arith.subf %320, %335 : vector<16x128xf32>
    %cst_90 = arith.constant 9.99999974E-6 : f32
    %337 = vector.broadcast %cst_90 : f32 to vector<1x128xf32>
    %338 = arith.addf %334, %337 : vector<1x128xf32>
    %339 = math.rsqrt %338 : vector<1x128xf32>
    %340 = vector.broadcast %339 : vector<1x128xf32> to vector<16x128xf32>
    %341 = arith.mulf %336, %340 : vector<16x128xf32>
    %342 = vector.broadcast %321 : vector<1x128xf32> to vector<16x128xf32>
    %343 = arith.mulf %341, %342 : vector<16x128xf32>
    %344 = vector.broadcast %322 : vector<1x128xf32> to vector<16x128xf32>
    %345 = arith.addf %343, %344 : vector<16x128xf32>
    %cst_91 = arith.constant 0.000000e+00 : f32
    %346 = vector.broadcast %cst_91 : f32 to vector<16x128xf32>
    %347 = arith.cmpf oge, %345, %346 : vector<16x128xf32>
    %348 = vector.broadcast %323 : vector<1x128xf32> to vector<16x128xf32>
    %349 = arith.mulf %348, %345 : vector<16x128xf32>
    %350 = arith.select %347, %345, %349 : vector<16x128xi1>, vector<16x128xf32>
    %cst_92 = arith.constant 0.000000e+00 : f32
    %351 = vector.broadcast %cst_92 : f32 to vector<1x1xf32>
    %352 = vector.extract_strided_slice %4 {offsets = [0, 0, 0], sizes = [1, 16, 1], strides = [1, 1, 1]} : vector<3x16x1xf32> to vector<1x16x1xf32>
    %353 = vector.shape_cast %352 : vector<1x16x1xf32> to vector<16x1xf32>
    %cst_93 = arith.constant 5.000000e-01 : f32
    %354 = vector.broadcast %cst_93 : f32 to vector<16x1xf32>
    %355 = arith.cmpf ogt, %353, %354 : vector<16x1xf32>
    %356 = vector.shape_cast %355 : vector<16x1xi1> to vector<16x1xi1>
    %357 = vector.broadcast %356 : vector<16x1xi1> to vector<16x128xi1>
    %358 = vector.shape_cast %11 : vector<1x128xf32> to vector<1x128xf32>
    %359 = vector.broadcast %358 : vector<1x128xf32> to vector<16x128xf32>
    %360 = arith.select %357, %359, %25 : vector<16x128xi1>, vector<16x128xf32>
    %361 = vector.extract_strided_slice %9 {offsets = [0, 0], sizes = [1, 128], strides = [1, 1]} : vector<6x128xf32> to vector<1x128xf32>
    %362 = vector.extract_strided_slice %9 {offsets = [1, 0], sizes = [1, 128], strides = [1, 1]} : vector<6x128xf32> to vector<1x128xf32>
    %363 = vector.extract_strided_slice %9 {offsets = [2, 0], sizes = [1, 128], strides = [1, 1]} : vector<6x128xf32> to vector<1x128xf32>
    "tpu.trace_start"() <{level = 10 : i32, message = "oh,nh->on"}> : () -> ()
    %cst_94 = arith.constant dense<0.000000e+00> : vector<1x8xf32>
    %364 = tpu.matmul %361, %55, %cst_94 {dimension_numbers = #tpu.dot_dimension_numbers<[1], [1], [0], [0], [0, 0, 1, 0], [], []>} : vector<1x128xf32>, vector<8x128xf32>, vector<1x8xf32> -> vector<1x8xf32>
    "tpu.trace_stop"() : () -> ()
    %365 = vector.broadcast %362 : vector<1x128xf32> to vector<16x128xf32>
    %366 = arith.mulf %360, %365 : vector<16x128xf32>
    %cst_95 = arith.constant dense<0.000000e+00> : vector<16xf32>
    %367 = vector.multi_reduction <add>, %366, %cst_95 [1] : vector<16x128xf32> to vector<16xf32>
    %368 = vector.shape_cast %367 : vector<16xf32> to vector<16x1xf32>
    %369 = vector.broadcast %368 : vector<16x1xf32> to vector<16x8xf32>
    %370 = vector.broadcast %364 : vector<1x8xf32> to vector<16x8xf32>
    %371 = arith.addf %369, %370 : vector<16x8xf32>
    %cst_96 = arith.constant 0.000000e+00 : f32
    %372 = vector.broadcast %cst_96 : f32 to vector<16x8xf32>
    %373 = arith.cmpf oge, %371, %372 : vector<16x8xf32>
    %cst_97 = arith.constant 0.00999999977 : f32
    %374 = vector.broadcast %cst_97 : f32 to vector<16x8xf32>
    %375 = arith.mulf %374, %371 : vector<16x8xf32>
    %376 = arith.select %373, %371, %375 : vector<16x8xi1>, vector<16x8xf32>
    %cst_98 = arith.constant 5.000000e-01 : f32
    %377 = vector.broadcast %cst_98 : f32 to vector<16x8xf32>
    %378 = arith.cmpf ogt, %144, %377 : vector<16x8xf32>
    %cst_99 = arith.constant -1.000000e+30 : f32
    %379 = vector.broadcast %cst_99 : f32 to vector<16x8xf32>
    %380 = arith.select %378, %376, %379 : vector<16x8xi1>, vector<16x8xf32>
    %cst_100 = arith.constant dense<0xFF800000> : vector<16xf32>
    %381 = vector.multi_reduction <maximumf>, %380, %cst_100 [1] : vector<16x8xf32> to vector<16xf32>
    %382 = vector.shape_cast %381 : vector<16xf32> to vector<16x1xf32>
    %383 = vector.broadcast %382 : vector<16x1xf32> to vector<16x8xf32>
    %384 = arith.subf %380, %383 : vector<16x8xf32>
    %385 = math.exp %384 : vector<16x8xf32>
    %cst_101 = arith.constant 0.000000e+00 : f32
    %386 = vector.broadcast %cst_101 : f32 to vector<16x8xf32>
    %387 = arith.select %378, %385, %386 : vector<16x8xi1>, vector<16x8xf32>
    %cst_102 = arith.constant dense<0.000000e+00> : vector<16xf32>
    %388 = vector.multi_reduction <add>, %387, %cst_102 [1] : vector<16x8xf32> to vector<16xf32>
    %389 = vector.shape_cast %388 : vector<16xf32> to vector<16x1xf32>
    %cst_103 = arith.constant 0.000000e+00 : f32
    %390 = vector.broadcast %cst_103 : f32 to vector<16x1xf32>
    %391 = arith.cmpf ogt, %389, %390 : vector<16x1xf32>
    %cst_104 = arith.constant 1.000000e+00 : f32
    %392 = vector.broadcast %cst_104 : f32 to vector<16x1xf32>
    %393 = arith.select %391, %389, %392 : vector<16x1xi1>, vector<16x1xf32>
    %394 = vector.broadcast %393 : vector<16x1xf32> to vector<16x8xf32>
    %395 = arith.divf %387, %394 : vector<16x8xf32>
    %cst_105 = arith.constant dense<0.000000e+00> : vector<16x128xf32>
    %396 = tpu.matmul %395, %55, %cst_105 {dimension_numbers = #tpu.dot_dimension_numbers<[1], [0], [0], [1], [0, 0, 1, 1], [], []>} : vector<16x8xf32>, vector<8x128xf32>, vector<16x128xf32> -> vector<16x128xf32>
    %397 = vector.broadcast %363 : vector<1x128xf32> to vector<16x128xf32>
    %398 = arith.addf %396, %397 : vector<16x128xf32>
    %399 = vector.extract_strided_slice %9 {offsets = [3, 0], sizes = [1, 128], strides = [1, 1]} : vector<6x128xf32> to vector<1x128xf32>
    %400 = vector.extract_strided_slice %9 {offsets = [4, 0], sizes = [1, 128], strides = [1, 1]} : vector<6x128xf32> to vector<1x128xf32>
    %401 = vector.extract_strided_slice %9 {offsets = [5, 0], sizes = [1, 128], strides = [1, 1]} : vector<6x128xf32> to vector<1x128xf32>
    %cst_106 = arith.constant dense<0.000000e+00> : vector<128xf32>
    %402 = vector.multi_reduction <add>, %398, %cst_106 [0] : vector<16x128xf32> to vector<128xf32>
    %403 = vector.shape_cast %402 : vector<128xf32> to vector<1x128xf32>
    %cst_107 = arith.constant 1.600000e+01 : f32
    %404 = vector.broadcast %cst_107 : f32 to vector<1x128xf32>
    %405 = arith.divf %403, %404 : vector<1x128xf32>
    %406 = vector.broadcast %405 : vector<1x128xf32> to vector<16x128xf32>
    %407 = arith.subf %398, %406 : vector<16x128xf32>
    %408 = arith.mulf %407, %407 : vector<16x128xf32>
    %cst_108 = arith.constant dense<0.000000e+00> : vector<128xf32>
    %409 = vector.multi_reduction <add>, %408, %cst_108 [0] : vector<16x128xf32> to vector<128xf32>
    %410 = vector.shape_cast %409 : vector<128xf32> to vector<1x128xf32>
    %cst_109 = arith.constant 1.600000e+01 : f32
    %411 = vector.broadcast %cst_109 : f32 to vector<1x128xf32>
    %412 = arith.divf %410, %411 : vector<1x128xf32>
    %413 = vector.broadcast %405 : vector<1x128xf32> to vector<16x128xf32>
    %414 = arith.subf %398, %413 : vector<16x128xf32>
    %cst_110 = arith.constant 9.99999974E-6 : f32
    %415 = vector.broadcast %cst_110 : f32 to vector<1x128xf32>
    %416 = arith.addf %412, %415 : vector<1x128xf32>
    %417 = math.rsqrt %416 : vector<1x128xf32>
    %418 = vector.broadcast %417 : vector<1x128xf32> to vector<16x128xf32>
    %419 = arith.mulf %414, %418 : vector<16x128xf32>
    %420 = vector.broadcast %399 : vector<1x128xf32> to vector<16x128xf32>
    %421 = arith.mulf %419, %420 : vector<16x128xf32>
    %422 = vector.broadcast %400 : vector<1x128xf32> to vector<16x128xf32>
    %423 = arith.addf %421, %422 : vector<16x128xf32>
    %cst_111 = arith.constant 0.000000e+00 : f32
    %424 = vector.broadcast %cst_111 : f32 to vector<16x128xf32>
    %425 = arith.cmpf oge, %423, %424 : vector<16x128xf32>
    %426 = vector.broadcast %401 : vector<1x128xf32> to vector<16x128xf32>
    %427 = arith.mulf %426, %423 : vector<16x128xf32>
    %428 = arith.select %425, %423, %427 : vector<16x128xi1>, vector<16x128xf32>
    %429 = arith.addf %214, %350 : vector<16x128xf32>
    %430 = arith.mulf %428, %428 : vector<16x128xf32>
    %cst_112 = arith.constant dense<0.000000e+00> : vector<16xf32>
    %431 = vector.multi_reduction <add>, %430, %cst_112 [1] : vector<16x128xf32> to vector<16xf32>
    %432 = vector.shape_cast %431 : vector<16xf32> to vector<16x1xf32>
    %433 = math.sqrt %432 : vector<16x1xf32>
    %cst_113 = arith.constant 9.99999996E-13 : f32
    %434 = vector.broadcast %cst_113 : f32 to vector<16x1xf32>
    %435 = arith.maximumf %433, %434 : vector<16x1xf32>
    %436 = vector.broadcast %435 : vector<16x1xf32> to vector<16x128xf32>
    %437 = arith.divf %428, %436 : vector<16x128xf32>
    %438 = arith.mulf %429, %429 : vector<16x128xf32>
    %cst_114 = arith.constant dense<0.000000e+00> : vector<16xf32>
    %439 = vector.multi_reduction <add>, %438, %cst_114 [1] : vector<16x128xf32> to vector<16xf32>
    %440 = vector.shape_cast %439 : vector<16xf32> to vector<16x1xf32>
    %441 = math.sqrt %440 : vector<16x1xf32>
    %cst_115 = arith.constant 9.99999996E-13 : f32
    %442 = vector.broadcast %cst_115 : f32 to vector<16x1xf32>
    %443 = arith.maximumf %441, %442 : vector<16x1xf32>
    %444 = vector.broadcast %443 : vector<16x1xf32> to vector<16x128xf32>
    %445 = arith.divf %429, %444 : vector<16x128xf32>
    %446 = arith.mulf %437, %445 : vector<16x128xf32>
    %cst_116 = arith.constant dense<0.000000e+00> : vector<16xf32>
    %447 = vector.multi_reduction <add>, %446, %cst_116 [1] : vector<16x128xf32> to vector<16xf32>
    %448 = vector.shape_cast %447 : vector<16xf32> to vector<16x1xf32>
    %cst_117 = arith.constant 1.000000e+00 : f32
    %449 = vector.broadcast %cst_117 : f32 to vector<16x1xf32>
    %450 = arith.subf %449, %448 : vector<16x1xf32>
    %451 = arith.mulf %353, %450 : vector<16x1xf32>
    %452 = vector.shape_cast %451 : vector<16x1xf32> to vector<1x16x1xf32>
    %cst_118 = arith.constant dense<0.000000e+00> : vector<1xf32>
    %453 = vector.multi_reduction <add>, %452, %cst_118 [1, 2] : vector<1x16x1xf32> to vector<1xf32>
    %454 = vector.shape_cast %453 : vector<1xf32> to vector<1x1x1xf32>
    %455 = vector.extract %454[0, 0, 0] : f32 from vector<1x1x1xf32>
    %456 = vector.broadcast %455 : f32 to vector<1x1xf32>
    %457 = vector.shape_cast %353 : vector<16x1xf32> to vector<1x16x1xf32>
    %cst_119 = arith.constant dense<0.000000e+00> : vector<1xf32>
    %458 = vector.multi_reduction <add>, %457, %cst_119 [1, 2] : vector<1x16x1xf32> to vector<1xf32>
    %459 = vector.shape_cast %458 : vector<1xf32> to vector<1x1x1xf32>
    %460 = vector.extract %459[0, 0, 0] : f32 from vector<1x1x1xf32>
    %461 = vector.broadcast %460 : f32 to vector<1x1xf32>
    %cst_120 = arith.constant 1.000000e+00 : f32
    %462 = vector.broadcast %cst_120 : f32 to vector<1x1xf32>
    %463 = arith.maximumf %461, %462 : vector<1x1xf32>
    %464 = arith.divf %456, %463 : vector<1x1xf32>
    %465 = arith.addf %351, %464 : vector<1x1xf32>
    %466 = vector.extract_strided_slice %4 {offsets = [1, 0, 0], sizes = [1, 16, 1], strides = [1, 1, 1]} : vector<3x16x1xf32> to vector<1x16x1xf32>
    %467 = vector.shape_cast %466 : vector<1x16x1xf32> to vector<16x1xf32>
    %cst_121 = arith.constant 5.000000e-01 : f32
    %468 = vector.broadcast %cst_121 : f32 to vector<16x1xf32>
    %469 = arith.cmpf ogt, %467, %468 : vector<16x1xf32>
    %470 = vector.shape_cast %469 : vector<16x1xi1> to vector<16x1xi1>
    %471 = vector.broadcast %470 : vector<16x1xi1> to vector<16x128xi1>
    %472 = vector.shape_cast %11 : vector<1x128xf32> to vector<1x128xf32>
    %473 = vector.broadcast %472 : vector<1x128xf32> to vector<16x128xf32>
    %474 = arith.select %471, %473, %25 : vector<16x128xi1>, vector<16x128xf32>
    %475 = vector.extract_strided_slice %10 {offsets = [0, 0], sizes = [1, 128], strides = [1, 1]} : vector<6x128xf32> to vector<1x128xf32>
    %476 = vector.extract_strided_slice %10 {offsets = [1, 0], sizes = [1, 128], strides = [1, 1]} : vector<6x128xf32> to vector<1x128xf32>
    %477 = vector.extract_strided_slice %10 {offsets = [2, 0], sizes = [1, 128], strides = [1, 1]} : vector<6x128xf32> to vector<1x128xf32>
    "tpu.trace_start"() <{level = 10 : i32, message = "oh,nh->on"}> : () -> ()
    %cst_122 = arith.constant dense<0.000000e+00> : vector<1x8xf32>
    %478 = tpu.matmul %475, %70, %cst_122 {dimension_numbers = #tpu.dot_dimension_numbers<[1], [1], [0], [0], [0, 0, 1, 0], [], []>} : vector<1x128xf32>, vector<8x128xf32>, vector<1x8xf32> -> vector<1x8xf32>
    "tpu.trace_stop"() : () -> ()
    %479 = vector.broadcast %476 : vector<1x128xf32> to vector<16x128xf32>
    %480 = arith.mulf %474, %479 : vector<16x128xf32>
    %cst_123 = arith.constant dense<0.000000e+00> : vector<16xf32>
    %481 = vector.multi_reduction <add>, %480, %cst_123 [1] : vector<16x128xf32> to vector<16xf32>
    %482 = vector.shape_cast %481 : vector<16xf32> to vector<16x1xf32>
    %483 = vector.broadcast %482 : vector<16x1xf32> to vector<16x8xf32>
    %484 = vector.broadcast %478 : vector<1x8xf32> to vector<16x8xf32>
    %485 = arith.addf %483, %484 : vector<16x8xf32>
    %cst_124 = arith.constant 0.000000e+00 : f32
    %486 = vector.broadcast %cst_124 : f32 to vector<16x8xf32>
    %487 = arith.cmpf oge, %485, %486 : vector<16x8xf32>
    %cst_125 = arith.constant 0.00999999977 : f32
    %488 = vector.broadcast %cst_125 : f32 to vector<16x8xf32>
    %489 = arith.mulf %488, %485 : vector<16x8xf32>
    %490 = arith.select %487, %485, %489 : vector<16x8xi1>, vector<16x8xf32>
    %cst_126 = arith.constant 5.000000e-01 : f32
    %491 = vector.broadcast %cst_126 : f32 to vector<16x8xf32>
    %492 = arith.cmpf ogt, %146, %491 : vector<16x8xf32>
    %cst_127 = arith.constant -1.000000e+30 : f32
    %493 = vector.broadcast %cst_127 : f32 to vector<16x8xf32>
    %494 = arith.select %492, %490, %493 : vector<16x8xi1>, vector<16x8xf32>
    %cst_128 = arith.constant dense<0xFF800000> : vector<16xf32>
    %495 = vector.multi_reduction <maximumf>, %494, %cst_128 [1] : vector<16x8xf32> to vector<16xf32>
    %496 = vector.shape_cast %495 : vector<16xf32> to vector<16x1xf32>
    %497 = vector.broadcast %496 : vector<16x1xf32> to vector<16x8xf32>
    %498 = arith.subf %494, %497 : vector<16x8xf32>
    %499 = math.exp %498 : vector<16x8xf32>
    %cst_129 = arith.constant 0.000000e+00 : f32
    %500 = vector.broadcast %cst_129 : f32 to vector<16x8xf32>
    %501 = arith.select %492, %499, %500 : vector<16x8xi1>, vector<16x8xf32>
    %cst_130 = arith.constant dense<0.000000e+00> : vector<16xf32>
    %502 = vector.multi_reduction <add>, %501, %cst_130 [1] : vector<16x8xf32> to vector<16xf32>
    %503 = vector.shape_cast %502 : vector<16xf32> to vector<16x1xf32>
    %cst_131 = arith.constant 0.000000e+00 : f32
    %504 = vector.broadcast %cst_131 : f32 to vector<16x1xf32>
    %505 = arith.cmpf ogt, %503, %504 : vector<16x1xf32>
    %cst_132 = arith.constant 1.000000e+00 : f32
    %506 = vector.broadcast %cst_132 : f32 to vector<16x1xf32>
    %507 = arith.select %505, %503, %506 : vector<16x1xi1>, vector<16x1xf32>
    %508 = vector.broadcast %507 : vector<16x1xf32> to vector<16x8xf32>
    %509 = arith.divf %501, %508 : vector<16x8xf32>
    %cst_133 = arith.constant dense<0.000000e+00> : vector<16x128xf32>
    %510 = tpu.matmul %509, %70, %cst_133 {dimension_numbers = #tpu.dot_dimension_numbers<[1], [0], [0], [1], [0, 0, 1, 1], [], []>} : vector<16x8xf32>, vector<8x128xf32>, vector<16x128xf32> -> vector<16x128xf32>
    %511 = vector.broadcast %477 : vector<1x128xf32> to vector<16x128xf32>
    %512 = arith.addf %510, %511 : vector<16x128xf32>
    %513 = vector.extract_strided_slice %10 {offsets = [3, 0], sizes = [1, 128], strides = [1, 1]} : vector<6x128xf32> to vector<1x128xf32>
    %514 = vector.extract_strided_slice %10 {offsets = [4, 0], sizes = [1, 128], strides = [1, 1]} : vector<6x128xf32> to vector<1x128xf32>
    %515 = vector.extract_strided_slice %10 {offsets = [5, 0], sizes = [1, 128], strides = [1, 1]} : vector<6x128xf32> to vector<1x128xf32>
    %cst_134 = arith.constant dense<0.000000e+00> : vector<128xf32>
    %516 = vector.multi_reduction <add>, %512, %cst_134 [0] : vector<16x128xf32> to vector<128xf32>
    %517 = vector.shape_cast %516 : vector<128xf32> to vector<1x128xf32>
    %cst_135 = arith.constant 1.600000e+01 : f32
    %518 = vector.broadcast %cst_135 : f32 to vector<1x128xf32>
    %519 = arith.divf %517, %518 : vector<1x128xf32>
    %520 = vector.broadcast %519 : vector<1x128xf32> to vector<16x128xf32>
    %521 = arith.subf %512, %520 : vector<16x128xf32>
    %522 = arith.mulf %521, %521 : vector<16x128xf32>
    %cst_136 = arith.constant dense<0.000000e+00> : vector<128xf32>
    %523 = vector.multi_reduction <add>, %522, %cst_136 [0] : vector<16x128xf32> to vector<128xf32>
    %524 = vector.shape_cast %523 : vector<128xf32> to vector<1x128xf32>
    %cst_137 = arith.constant 1.600000e+01 : f32
    %525 = vector.broadcast %cst_137 : f32 to vector<1x128xf32>
    %526 = arith.divf %524, %525 : vector<1x128xf32>
    %527 = vector.broadcast %519 : vector<1x128xf32> to vector<16x128xf32>
    %528 = arith.subf %512, %527 : vector<16x128xf32>
    %cst_138 = arith.constant 9.99999974E-6 : f32
    %529 = vector.broadcast %cst_138 : f32 to vector<1x128xf32>
    %530 = arith.addf %526, %529 : vector<1x128xf32>
    %531 = math.rsqrt %530 : vector<1x128xf32>
    %532 = vector.broadcast %531 : vector<1x128xf32> to vector<16x128xf32>
    %533 = arith.mulf %528, %532 : vector<16x128xf32>
    %534 = vector.broadcast %513 : vector<1x128xf32> to vector<16x128xf32>
    %535 = arith.mulf %533, %534 : vector<16x128xf32>
    %536 = vector.broadcast %514 : vector<1x128xf32> to vector<16x128xf32>
    %537 = arith.addf %535, %536 : vector<16x128xf32>
    %cst_139 = arith.constant 0.000000e+00 : f32
    %538 = vector.broadcast %cst_139 : f32 to vector<16x128xf32>
    %539 = arith.cmpf oge, %537, %538 : vector<16x128xf32>
    %540 = vector.broadcast %515 : vector<1x128xf32> to vector<16x128xf32>
    %541 = arith.mulf %540, %537 : vector<16x128xf32>
    %542 = arith.select %539, %537, %541 : vector<16x128xi1>, vector<16x128xf32>
    %543 = arith.addf %214, %282 : vector<16x128xf32>
    %544 = arith.mulf %542, %542 : vector<16x128xf32>
    %cst_140 = arith.constant dense<0.000000e+00> : vector<16xf32>
    %545 = vector.multi_reduction <add>, %544, %cst_140 [1] : vector<16x128xf32> to vector<16xf32>
    %546 = vector.shape_cast %545 : vector<16xf32> to vector<16x1xf32>
    %547 = math.sqrt %546 : vector<16x1xf32>
    %cst_141 = arith.constant 9.99999996E-13 : f32
    %548 = vector.broadcast %cst_141 : f32 to vector<16x1xf32>
    %549 = arith.maximumf %547, %548 : vector<16x1xf32>
    %550 = vector.broadcast %549 : vector<16x1xf32> to vector<16x128xf32>
    %551 = arith.divf %542, %550 : vector<16x128xf32>
    %552 = arith.mulf %543, %543 : vector<16x128xf32>
    %cst_142 = arith.constant dense<0.000000e+00> : vector<16xf32>
    %553 = vector.multi_reduction <add>, %552, %cst_142 [1] : vector<16x128xf32> to vector<16xf32>
    %554 = vector.shape_cast %553 : vector<16xf32> to vector<16x1xf32>
    %555 = math.sqrt %554 : vector<16x1xf32>
    %cst_143 = arith.constant 9.99999996E-13 : f32
    %556 = vector.broadcast %cst_143 : f32 to vector<16x1xf32>
    %557 = arith.maximumf %555, %556 : vector<16x1xf32>
    %558 = vector.broadcast %557 : vector<16x1xf32> to vector<16x128xf32>
    %559 = arith.divf %543, %558 : vector<16x128xf32>
    %560 = arith.mulf %551, %559 : vector<16x128xf32>
    %cst_144 = arith.constant dense<0.000000e+00> : vector<16xf32>
    %561 = vector.multi_reduction <add>, %560, %cst_144 [1] : vector<16x128xf32> to vector<16xf32>
    %562 = vector.shape_cast %561 : vector<16xf32> to vector<16x1xf32>
    %cst_145 = arith.constant 1.000000e+00 : f32
    %563 = vector.broadcast %cst_145 : f32 to vector<16x1xf32>
    %564 = arith.subf %563, %562 : vector<16x1xf32>
    %565 = arith.mulf %467, %564 : vector<16x1xf32>
    %566 = vector.shape_cast %565 : vector<16x1xf32> to vector<1x16x1xf32>
    %cst_146 = arith.constant dense<0.000000e+00> : vector<1xf32>
    %567 = vector.multi_reduction <add>, %566, %cst_146 [1, 2] : vector<1x16x1xf32> to vector<1xf32>
    %568 = vector.shape_cast %567 : vector<1xf32> to vector<1x1x1xf32>
    %569 = vector.extract %568[0, 0, 0] : f32 from vector<1x1x1xf32>
    %570 = vector.broadcast %569 : f32 to vector<1x1xf32>
    %571 = vector.shape_cast %467 : vector<16x1xf32> to vector<1x16x1xf32>
    %cst_147 = arith.constant dense<0.000000e+00> : vector<1xf32>
    %572 = vector.multi_reduction <add>, %571, %cst_147 [1, 2] : vector<1x16x1xf32> to vector<1xf32>
    %573 = vector.shape_cast %572 : vector<1xf32> to vector<1x1x1xf32>
    %574 = vector.extract %573[0, 0, 0] : f32 from vector<1x1x1xf32>
    %575 = vector.broadcast %574 : f32 to vector<1x1xf32>
    %cst_148 = arith.constant 1.000000e+00 : f32
    %576 = vector.broadcast %cst_148 : f32 to vector<1x1xf32>
    %577 = arith.maximumf %575, %576 : vector<1x1xf32>
    %578 = arith.divf %570, %577 : vector<1x1xf32>
    %579 = arith.addf %465, %578 : vector<1x1xf32>
    %580 = vector.extract_strided_slice %4 {offsets = [2, 0, 0], sizes = [1, 16, 1], strides = [1, 1, 1]} : vector<3x16x1xf32> to vector<1x16x1xf32>
    %581 = vector.shape_cast %580 : vector<1x16x1xf32> to vector<16x1xf32>
    %cst_149 = arith.constant 5.000000e-01 : f32
    %582 = vector.broadcast %cst_149 : f32 to vector<16x1xf32>
    %583 = arith.cmpf ogt, %581, %582 : vector<16x1xf32>
    %584 = vector.shape_cast %583 : vector<16x1xi1> to vector<16x1xi1>
    %585 = vector.broadcast %584 : vector<16x1xi1> to vector<16x128xi1>
    %586 = vector.shape_cast %11 : vector<1x128xf32> to vector<1x128xf32>
    %587 = vector.broadcast %586 : vector<1x128xf32> to vector<16x128xf32>
    %588 = arith.select %585, %587, %25 : vector<16x128xi1>, vector<16x128xf32>
    %589 = vector.extract_strided_slice %8 {offsets = [0, 0], sizes = [1, 128], strides = [1, 1]} : vector<6x128xf32> to vector<1x128xf32>
    %590 = vector.extract_strided_slice %8 {offsets = [1, 0], sizes = [1, 128], strides = [1, 1]} : vector<6x128xf32> to vector<1x128xf32>
    %591 = vector.extract_strided_slice %8 {offsets = [2, 0], sizes = [1, 128], strides = [1, 1]} : vector<6x128xf32> to vector<1x128xf32>
    "tpu.trace_start"() <{level = 10 : i32, message = "oh,nh->on"}> : () -> ()
    %cst_150 = arith.constant dense<0.000000e+00> : vector<1x12xf32>
    %592 = tpu.matmul %589, %140, %cst_150 {dimension_numbers = #tpu.dot_dimension_numbers<[1], [1], [0], [0], [0, 0, 1, 0], [], []>} : vector<1x128xf32>, vector<12x128xf32>, vector<1x12xf32> -> vector<1x12xf32>
    "tpu.trace_stop"() : () -> ()
    %593 = vector.broadcast %590 : vector<1x128xf32> to vector<16x128xf32>
    %594 = arith.mulf %588, %593 : vector<16x128xf32>
    %cst_151 = arith.constant dense<0.000000e+00> : vector<16xf32>
    %595 = vector.multi_reduction <add>, %594, %cst_151 [1] : vector<16x128xf32> to vector<16xf32>
    %596 = vector.shape_cast %595 : vector<16xf32> to vector<16x1xf32>
    %597 = vector.broadcast %596 : vector<16x1xf32> to vector<16x12xf32>
    %598 = vector.broadcast %592 : vector<1x12xf32> to vector<16x12xf32>
    %599 = arith.addf %597, %598 : vector<16x12xf32>
    %cst_152 = arith.constant 0.000000e+00 : f32
    %600 = vector.broadcast %cst_152 : f32 to vector<16x12xf32>
    %601 = arith.cmpf oge, %599, %600 : vector<16x12xf32>
    %cst_153 = arith.constant 0.00999999977 : f32
    %602 = vector.broadcast %cst_153 : f32 to vector<16x12xf32>
    %603 = arith.mulf %602, %599 : vector<16x12xf32>
    %604 = arith.select %601, %599, %603 : vector<16x12xi1>, vector<16x12xf32>
    %cst_154 = arith.constant 5.000000e-01 : f32
    %605 = vector.broadcast %cst_154 : f32 to vector<16x12xf32>
    %606 = arith.cmpf ogt, %142, %605 : vector<16x12xf32>
    %cst_155 = arith.constant -1.000000e+30 : f32
    %607 = vector.broadcast %cst_155 : f32 to vector<16x12xf32>
    %608 = arith.select %606, %604, %607 : vector<16x12xi1>, vector<16x12xf32>
    %cst_156 = arith.constant dense<0xFF800000> : vector<16xf32>
    %609 = vector.multi_reduction <maximumf>, %608, %cst_156 [1] : vector<16x12xf32> to vector<16xf32>
    %610 = vector.shape_cast %609 : vector<16xf32> to vector<16x1xf32>
    %611 = vector.broadcast %610 : vector<16x1xf32> to vector<16x12xf32>
    %612 = arith.subf %608, %611 : vector<16x12xf32>
    %613 = math.exp %612 : vector<16x12xf32>
    %cst_157 = arith.constant 0.000000e+00 : f32
    %614 = vector.broadcast %cst_157 : f32 to vector<16x12xf32>
    %615 = arith.select %606, %613, %614 : vector<16x12xi1>, vector<16x12xf32>
    %cst_158 = arith.constant dense<0.000000e+00> : vector<16xf32>
    %616 = vector.multi_reduction <add>, %615, %cst_158 [1] : vector<16x12xf32> to vector<16xf32>
    %617 = vector.shape_cast %616 : vector<16xf32> to vector<16x1xf32>
    %cst_159 = arith.constant 0.000000e+00 : f32
    %618 = vector.broadcast %cst_159 : f32 to vector<16x1xf32>
    %619 = arith.cmpf ogt, %617, %618 : vector<16x1xf32>
    %cst_160 = arith.constant 1.000000e+00 : f32
    %620 = vector.broadcast %cst_160 : f32 to vector<16x1xf32>
    %621 = arith.select %619, %617, %620 : vector<16x1xi1>, vector<16x1xf32>
    %622 = vector.broadcast %621 : vector<16x1xf32> to vector<16x12xf32>
    %623 = arith.divf %615, %622 : vector<16x12xf32>
    %cst_161 = arith.constant dense<0.000000e+00> : vector<16x128xf32>
    %624 = tpu.matmul %623, %140, %cst_161 {dimension_numbers = #tpu.dot_dimension_numbers<[1], [0], [0], [1], [0, 0, 1, 1], [], []>} : vector<16x12xf32>, vector<12x128xf32>, vector<16x128xf32> -> vector<16x128xf32>
    %625 = vector.broadcast %591 : vector<1x128xf32> to vector<16x128xf32>
    %626 = arith.addf %624, %625 : vector<16x128xf32>
    %627 = vector.extract_strided_slice %8 {offsets = [3, 0], sizes = [1, 128], strides = [1, 1]} : vector<6x128xf32> to vector<1x128xf32>
    %628 = vector.extract_strided_slice %8 {offsets = [4, 0], sizes = [1, 128], strides = [1, 1]} : vector<6x128xf32> to vector<1x128xf32>
    %629 = vector.extract_strided_slice %8 {offsets = [5, 0], sizes = [1, 128], strides = [1, 1]} : vector<6x128xf32> to vector<1x128xf32>
    %cst_162 = arith.constant dense<0.000000e+00> : vector<128xf32>
    %630 = vector.multi_reduction <add>, %626, %cst_162 [0] : vector<16x128xf32> to vector<128xf32>
    %631 = vector.shape_cast %630 : vector<128xf32> to vector<1x128xf32>
    %cst_163 = arith.constant 1.600000e+01 : f32
    %632 = vector.broadcast %cst_163 : f32 to vector<1x128xf32>
    %633 = arith.divf %631, %632 : vector<1x128xf32>
    %634 = vector.broadcast %633 : vector<1x128xf32> to vector<16x128xf32>
    %635 = arith.subf %626, %634 : vector<16x128xf32>
    %636 = arith.mulf %635, %635 : vector<16x128xf32>
    %cst_164 = arith.constant dense<0.000000e+00> : vector<128xf32>
    %637 = vector.multi_reduction <add>, %636, %cst_164 [0] : vector<16x128xf32> to vector<128xf32>
    %638 = vector.shape_cast %637 : vector<128xf32> to vector<1x128xf32>
    %cst_165 = arith.constant 1.600000e+01 : f32
    %639 = vector.broadcast %cst_165 : f32 to vector<1x128xf32>
    %640 = arith.divf %638, %639 : vector<1x128xf32>
    %641 = vector.broadcast %633 : vector<1x128xf32> to vector<16x128xf32>
    %642 = arith.subf %626, %641 : vector<16x128xf32>
    %cst_166 = arith.constant 9.99999974E-6 : f32
    %643 = vector.broadcast %cst_166 : f32 to vector<1x128xf32>
    %644 = arith.addf %640, %643 : vector<1x128xf32>
    %645 = math.rsqrt %644 : vector<1x128xf32>
    %646 = vector.broadcast %645 : vector<1x128xf32> to vector<16x128xf32>
    %647 = arith.mulf %642, %646 : vector<16x128xf32>
    %648 = vector.broadcast %627 : vector<1x128xf32> to vector<16x128xf32>
    %649 = arith.mulf %647, %648 : vector<16x128xf32>
    %650 = vector.broadcast %628 : vector<1x128xf32> to vector<16x128xf32>
    %651 = arith.addf %649, %650 : vector<16x128xf32>
    %cst_167 = arith.constant 0.000000e+00 : f32
    %652 = vector.broadcast %cst_167 : f32 to vector<16x128xf32>
    %653 = arith.cmpf oge, %651, %652 : vector<16x128xf32>
    %654 = vector.broadcast %629 : vector<1x128xf32> to vector<16x128xf32>
    %655 = arith.mulf %654, %651 : vector<16x128xf32>
    %656 = arith.select %653, %651, %655 : vector<16x128xi1>, vector<16x128xf32>
    %657 = arith.addf %282, %350 : vector<16x128xf32>
    %658 = arith.mulf %656, %656 : vector<16x128xf32>
    %cst_168 = arith.constant dense<0.000000e+00> : vector<16xf32>
    %659 = vector.multi_reduction <add>, %658, %cst_168 [1] : vector<16x128xf32> to vector<16xf32>
    %660 = vector.shape_cast %659 : vector<16xf32> to vector<16x1xf32>
    %661 = math.sqrt %660 : vector<16x1xf32>
    %cst_169 = arith.constant 9.99999996E-13 : f32
    %662 = vector.broadcast %cst_169 : f32 to vector<16x1xf32>
    %663 = arith.maximumf %661, %662 : vector<16x1xf32>
    %664 = vector.broadcast %663 : vector<16x1xf32> to vector<16x128xf32>
    %665 = arith.divf %656, %664 : vector<16x128xf32>
    %666 = arith.mulf %657, %657 : vector<16x128xf32>
    %cst_170 = arith.constant dense<0.000000e+00> : vector<16xf32>
    %667 = vector.multi_reduction <add>, %666, %cst_170 [1] : vector<16x128xf32> to vector<16xf32>
    %668 = vector.shape_cast %667 : vector<16xf32> to vector<16x1xf32>
    %669 = math.sqrt %668 : vector<16x1xf32>
    %cst_171 = arith.constant 9.99999996E-13 : f32
    %670 = vector.broadcast %cst_171 : f32 to vector<16x1xf32>
    %671 = arith.maximumf %669, %670 : vector<16x1xf32>
    %672 = vector.broadcast %671 : vector<16x1xf32> to vector<16x128xf32>
    %673 = arith.divf %657, %672 : vector<16x128xf32>
    %674 = arith.mulf %665, %673 : vector<16x128xf32>
    %cst_172 = arith.constant dense<0.000000e+00> : vector<16xf32>
    %675 = vector.multi_reduction <add>, %674, %cst_172 [1] : vector<16x128xf32> to vector<16xf32>
    %676 = vector.shape_cast %675 : vector<16xf32> to vector<16x1xf32>
    %cst_173 = arith.constant 1.000000e+00 : f32
    %677 = vector.broadcast %cst_173 : f32 to vector<16x1xf32>
    %678 = arith.subf %677, %676 : vector<16x1xf32>
    %679 = arith.mulf %581, %678 : vector<16x1xf32>
    %680 = vector.shape_cast %679 : vector<16x1xf32> to vector<1x16x1xf32>
    %cst_174 = arith.constant dense<0.000000e+00> : vector<1xf32>
    %681 = vector.multi_reduction <add>, %680, %cst_174 [1, 2] : vector<1x16x1xf32> to vector<1xf32>
    %682 = vector.shape_cast %681 : vector<1xf32> to vector<1x1x1xf32>
    %683 = vector.extract %682[0, 0, 0] : f32 from vector<1x1x1xf32>
    %684 = vector.broadcast %683 : f32 to vector<1x1xf32>
    %685 = vector.shape_cast %581 : vector<16x1xf32> to vector<1x16x1xf32>
    %cst_175 = arith.constant dense<0.000000e+00> : vector<1xf32>
    %686 = vector.multi_reduction <add>, %685, %cst_175 [1, 2] : vector<1x16x1xf32> to vector<1xf32>
    %687 = vector.shape_cast %686 : vector<1xf32> to vector<1x1x1xf32>
    %688 = vector.extract %687[0, 0, 0] : f32 from vector<1x1x1xf32>
    %689 = vector.broadcast %688 : f32 to vector<1x1xf32>
    %cst_176 = arith.constant 1.000000e+00 : f32
    %690 = vector.broadcast %cst_176 : f32 to vector<1x1xf32>
    %691 = arith.maximumf %689, %690 : vector<1x1xf32>
    %692 = arith.divf %684, %691 : vector<1x1xf32>
    %693 = arith.addf %579, %692 : vector<1x1xf32>
    %694 = vector.shape_cast %693 : vector<1x1xf32> to vector<1x1xf32>
    %695 = vector.broadcast %694 : vector<1x1xf32> to vector<1x128xf32>
    %c0_177 = arith.constant 0 : index
    %c0_178 = arith.constant 0 : index
    %696 = vector.load %arg5[%c0_177, %c0_178] : memref<1x128xf32, #tpu.memory_space<vmem>>, vector<1x128xf32>
    tpu.vector_store %arg5[%c0_177, %c0_178], %695 {strides = array<i32>} : memref<1x128xf32, #tpu.memory_space<vmem>>, vector<1x128xf32>,
    return
  }
}

</mosaic_0001>

<llo_original>
// kernel: cross_view_forward.1
$region0: #{cross_view_forward.1}
  #allocation0 [shape = 'u32[]', space=smem, size = 0x4, offset = 0x4, fixed_abs, tag = 'smem constant byte address 0x4 - core index']
  #allocation1 [shape = 'u32[72,128]{1,0:T(1,128)}', space=vmem, size = 0x9000, scoped, tag = 'internal scratch']
  %s0 = inlined_call_operand.vmem [shape: f32[4,16,24], index: 0, kind: input, shape index: {}]
  %s1 = inlined_call_operand.vmem [shape: f32[4,24,128], index: 1, kind: input, shape index: {}]
  %s2 = inlined_call_operand.vmem [shape: f32[33,128], index: 2, kind: input, shape index: {}]
  %s3 = inlined_call_operand.vmem [shape: f32[4,16,16], index: 3, kind: input, shape index: {}]
  %s4 = inlined_call_operand.vmem [shape: f32[3,16,1], index: 4, kind: input, shape index: {}]
  %s5 = inlined_call_operand.hbm [shape: f32[1,128], index: 5, kind: output, shape index: {}]
  %s6 = sld [smem:[#allocation0]]
  $region30: #{cross_view_forward.1} parent=0
    _
  %s8 = ssub.s32 1, %s6
  %s9 = scalar_select 0, %s8, %s6
  $region1: #{cross_view_forward.1} parent=0
    #allocation2 [shape = 'u8[512]{0}', space=vmem, size = 0x400, scoped, tag = 'output window, operand 0, single buffered']
    #allocation3 [shape = 's32[1]{0}', space=sflag, size = 0x4, scoped, tag = 'scoped memory for cross_view_forward.1']
    %10 = vsyncpa [#allocation3], 0
    // Predicated region
    $region2: #{cross_view_forward.1} parent=1 // pred_check
      _
    $region3: #{cross_view_forward.1} parent=1 // pred_check_branch
      %12 = sbr.rel (0) target = $region5
    $region4: #{cross_view_forward.1} parent=1 // pred_region
      _
    $region5: #{cross_view_forward.1} parent=1 // pred_fallthru
      _
    // Predicated region
    $region6: #{cross_view_forward.1} parent=1 // pred_check
      _
    $region7: #{cross_view_forward.1} parent=1 // pred_check_branch
      %14 = sbr.rel (0) target = $region9
    $region8: #{cross_view_forward.1} parent=1 // pred_region
      _
    $region9: #{cross_view_forward.1} parent=1 // pred_fallthru
      _
    // Predicated region
    $region10: #{cross_view_forward.1} parent=1 // pred_check
      _
    $region11: #{cross_view_forward.1} parent=1 // pred_check_branch
      %16 = sbr.rel (0) target = $region13
    $region12: #{cross_view_forward.1} parent=1 // pred_region
      _
    $region13: #{cross_view_forward.1} parent=1 // pred_fallthru
      _
    // Predicated region
    $region14: #{cross_view_forward.1} parent=1 // pred_check
      _
    $region15: #{cross_view_forward.1} parent=1 // pred_check_branch
      %18 = sbr.rel (0) target = $region17
    $region16: #{cross_view_forward.1} parent=1 // pred_region
      _
    $region17: #{cross_view_forward.1} parent=1 // pred_fallthru
      _
    // Predicated region
    $region18: #{cross_view_forward.1} parent=1 // pred_check
      _
    $region19: #{cross_view_forward.1} parent=1 // pred_check_branch
      %20 = sbr.rel (0) target = $region21
    $region20: #{cross_view_forward.1} parent=1 // pred_region
      _
    $region21: #{cross_view_forward.1} parent=1 // pred_fallthru
      _
    %v21 = vld [vmem:[%s0] sm:$0xff]
    %v22 = vld [vmem:[%s0 + $0x8] sm:$0xff]
    %v23 = vld [vmem:[%s0 + $0x10] sm:$0xff]
    %v24 = vld [vmem:[%s0 + $0x18] sm:$0xff]
    %v25 = vld [vmem:[%s0 + $0x20] sm:$0xff]
    %v26 = vld [vmem:[%s0 + $0x28] sm:$0xff]
    %v27 = vld [vmem:[%s0 + $0x30] sm:$0xff]
    %v28 = vld [vmem:[%s0 + $0x38] sm:$0xff]
    %v29 = vld [vmem:[%s1] sm:$0xff]
    %v30 = vld [vmem:[%s1 + $0x8] sm:$0xff]
    %v31 = vld [vmem:[%s1 + $0x10] sm:$0xff]
    %v32 = vld [vmem:[%s1 + $0x18] sm:$0xff]
    %v33 = vld [vmem:[%s1 + $0x20] sm:$0xff]
    %v34 = vld [vmem:[%s1 + $0x28] sm:$0xff]
    %v35 = vld [vmem:[%s1 + $0x30] sm:$0xff]
    %v36 = vld [vmem:[%s1 + $0x38] sm:$0xff]
    %v37 = vld [vmem:[%s1 + $0x40] sm:$0xff]
    %v38 = vld [vmem:[%s1 + $0x48] sm:$0xff]
    %v39 = vld [vmem:[%s1 + $0x50] sm:$0xff]
    %v40 = vld [vmem:[%s1 + $0x58] sm:$0xff]
    %v41 = vld [vmem:[%s2] sm:$0xff]
    %v42 = vld [vmem:[%s2 + $0x8] sm:$0xff]
    %v43 = vld [vmem:[%s2 + $0x10] sm:$0xff]
    %v44 = vld [vmem:[%s2 + $0x18] sm:$0xff]
    %v45 = vld [vmem:[%s2 + $0x20] sm:$0x1]
    %v46 = vld [vmem:[%s3] sm:$0xff]
    %v47 = vld [vmem:[%s3 + $0x8] sm:$0xff]
    %v48 = vld [vmem:[%s3 + $0x10] sm:$0xff]
    %v49 = vld [vmem:[%s3 + $0x18] sm:$0xff]
    %v50 = vld [vmem:[%s3 + $0x20] sm:$0xff]
    %v51 = vld [vmem:[%s3 + $0x28] sm:$0xff]
    %v52 = vld [vmem:[%s3 + $0x30] sm:$0xff]
    %v53 = vld [vmem:[%s3 + $0x38] sm:$0xff]
    %v54 = vld [vmem:[%s4] sm:$0xff]
    %v55 = vld [vmem:[%s4 + $0x8] sm:$0xff]
    %v56 = vld [vmem:[%s4 + $0x10] sm:$0xff]
    %v57 = vld [vmem:[%s4 + $0x18] sm:$0xff]
    %v58 = vld [vmem:[%s4 + $0x20] sm:$0xff]
    %v59 = vld [vmem:[%s4 + $0x28] sm:$0xff]
    %v60 = vperm.slane %v41, 0
    %vm61 = vcmask 195584
    %v63 = vsel %vm61, %v21, 0
    %v66 = vsel %vm61, %v22, 0
    %68 = vmatpush.msra.mxu0 0.0
    %69 = vmatpush.msra.mxu0 0.0
    %70 = vmatpush.msra.mxu0 0.0
    %71 = vmatpush.msra.mxu0 0.0
    %72 = vmatpush.msra.mxu0 0.0
    %73 = vmatpush.msra.mxu0 0.0
    %74 = vmatpush.msra.mxu0 0.0
    %75 = vmatpush.msra.mxu0 0.0
    %76 = vmatpush.msra.mxu0 0.0
    %77 = vmatpush.msra.mxu0 0.0
    %78 = vmatpush.msra.mxu0 0.0
    %79 = vmatpush.msra.mxu0 0.0
    %80 = vmatpush.msra.mxu0 0.0
    %81 = vmatpush.msra.mxu0 %v31
    %82 = vmatpush.msra.mxu0 %v30
    %83 = vmatpush.msra.mxu0 %v29
    %84 = vmatmul.f32.gmra.mxu0 %v63
    %v85 = vpop.f32.mrf.mxu0
    %v86 = vadd.f32 %v60, %v85
    %87 = vmatmul.f32.gmra.mxu0 %v66
    %v88 = vpop.f32.mrf.mxu0
    %v89 = vadd.f32 %v60, %v88
    %90 = vdwg.mxu0
    %vm91 = vcmp.ge.f32.partialorder %v86, 0.0
    %vm92 = vcmp.ge.f32.partialorder %v89, 0.0
    %v93 = vperm.slane %v41, 4
    %v94 = vmul.f32 %v93, %v86
    %v95 = vmul.f32 %v93, %v89
    %v96 = vsel %vm91, %v86, %v94
    %v97 = vsel %vm92, %v89, %v95
    %v99 = vsel %vm61, %v23, 0
    %v102 = vsel %vm61, %v24, 0
    %104 = vmatpush.msra.mxu0 0.0
    %105 = vmatpush.msra.mxu0 0.0
    %106 = vmatpush.msra.mxu0 0.0
    %107 = vmatpush.msra.mxu0 0.0
    %108 = vmatpush.msra.mxu0 0.0
    %109 = vmatpush.msra.mxu0 0.0
    %110 = vmatpush.msra.mxu0 0.0
    %111 = vmatpush.msra.mxu0 0.0
    %112 = vmatpush.msra.mxu0 0.0
    %113 = vmatpush.msra.mxu0 0.0
    %114 = vmatpush.msra.mxu0 0.0
    %115 = vmatpush.msra.mxu0 0.0
    %116 = vmatpush.msra.mxu0 0.0
    %117 = vmatpush.msra.mxu0 %v34
    %118 = vmatpush.msra.mxu0 %v33
    %119 = vmatpush.msra.mxu0 %v32
    %120 = vmatmul.f32.gmra.mxu0 %v99
    %v121 = vpop.f32.mrf.mxu0
    %v122 = vadd.f32 0.0, %v121
    %123 = vmatmul.f32.gmra.mxu0 %v102
    %v124 = vpop.f32.mrf.mxu0
    %v125 = vadd.f32 0.0, %v124
    %126 = vdwg.mxu0
    %v127 = vperm.slane %v41, 1
    %v128 = vadd.f32 %v122, %v127
    %v129 = vadd.f32 %v125, %v127
    %vm130 = vcmp.ge.f32.partialorder %v128, 0.0
    %vm131 = vcmp.ge.f32.partialorder %v129, 0.0
    %v132 = vperm.slane %v41, 5
    %v133 = vmul.f32 %v132, %v128
    %v134 = vmul.f32 %v132, %v129
    %v135 = vsel %vm130, %v128, %v133
    %v136 = vsel %vm131, %v129, %v134
    %v138 = vsel %vm61, %v25, 0
    %v141 = vsel %vm61, %v26, 0
    %143 = vmatpush.msra.mxu0 0.0
    %144 = vmatpush.msra.mxu0 0.0
    %145 = vmatpush.msra.mxu0 0.0
    %146 = vmatpush.msra.mxu0 0.0
    %147 = vmatpush.msra.mxu0 0.0
    %148 = vmatpush.msra.mxu0 0.0
    %149 = vmatpush.msra.mxu0 0.0
    %150 = vmatpush.msra.mxu0 0.0
    %151 = vmatpush.msra.mxu0 0.0
    %152 = vmatpush.msra.mxu0 0.0
    %153 = vmatpush.msra.mxu0 0.0
    %154 = vmatpush.msra.mxu0 0.0
    %155 = vmatpush.msra.mxu0 0.0
    %156 = vmatpush.msra.mxu0 %v37
    %157 = vmatpush.msra.mxu0 %v36
    %158 = vmatpush.msra.mxu0 %v35
    %159 = vmatmul.f32.gmra.mxu0 %v138
    %v160 = vpop.f32.mrf.mxu0
    %v161 = vadd.f32 0.0, %v160
    %162 = vmatmul.f32.gmra.mxu0 %v141
    %v163 = vpop.f32.mrf.mxu0
    %164 = vdwg.mxu0
    %v165 = vperm.slane %v41, 2
    %v166 = vadd.f32 %v161, %v165
    %vm167 = vcmp.ge.f32.partialorder %v166, 0.0
    %v168 = vperm.slane %v41, 6
    %v169 = vmul.f32 %v168, %v166
    %v170 = vsel %vm167, %v166, %v169
    %v172 = vsel %vm61, %v27, 0
    %v175 = vsel %vm61, %v28, 0
    %177 = vmatpush.msra.mxu0 0.0
    %178 = vmatpush.msra.mxu0 0.0
    %179 = vmatpush.msra.mxu0 0.0
    %180 = vmatpush.msra.mxu0 0.0
    %181 = vmatpush.msra.mxu0 0.0
    %182 = vmatpush.msra.mxu0 0.0
    %183 = vmatpush.msra.mxu0 0.0
    %184 = vmatpush.msra.mxu0 0.0
    %185 = vmatpush.msra.mxu0 0.0
    %186 = vmatpush.msra.mxu0 0.0
    %187 = vmatpush.msra.mxu0 0.0
    %188 = vmatpush.msra.mxu0 0.0
    %189 = vmatpush.msra.mxu0 0.0
    %190 = vmatpush.msra.mxu0 %v40
    %191 = vmatpush.msra.mxu0 %v39
    %192 = vmatpush.msra.mxu0 %v38
    %193 = vmatmul.f32.gmra.mxu0 %v172
    %v194 = vpop.f32.mrf.mxu0
    %v195 = vadd.f32 0.0, %v194
    %196 = vmatmul.f32.gmra.mxu0 %v175
    %v197 = vpop.f32.mrf.mxu0
    %198 = vdwg.mxu0
    %v199 = vperm.slane %v41, 3
    %v200 = vadd.f32 %v195, %v199
    %vm201 = vcmp.ge.f32.partialorder %v200, 0.0
    %v202 = vperm.slane %v41, 7
    %v203 = vmul.f32 %v202, %v200
    %v204 = vsel %vm201, %v200, %v203
    %205 = vmatpush.xpose.msra.mxu0 0.0
    %206 = vmatpush.xpose.msra.mxu0 0.0
    %207 = vmatpush.xpose.msra.mxu0 0.0
    %208 = vmatpush.xpose.msra.mxu0 0.0
    %209 = vmatpush.xpose.msra.mxu0 0.0
    %210 = vmatpush.xpose.msra.mxu0 0.0
    %211 = vmatpush.xpose.msra.mxu0 0.0
    %212 = vmatpush.xpose.msra.mxu0 0.0
    %213 = vmatpush.xpose.msra.mxu0 0.0
    %214 = vmatpush.xpose.msra.mxu0 0.0
    %215 = vmatpush.xpose.msra.mxu0 0.0
    %216 = vmatpush.xpose.msra.mxu0 0.0
    %217 = vmatpush.xpose.msra.mxu0 0.0
    %218 = vmatpush.xpose.msra.mxu0 0.0
    %219 = vmatpush.xpose.msra.mxu0 %v97
    %220 = vmatpush.xpose.msra.mxu0 %v96
    %221 = vmatmul.f32.gmra.mxu0 %v42
    %v222 = vpop.f32.mrf.mxu0
    %v223 = vadd.f32 0.0, %v222
    %224 = vdwg.mxu0
    %v225 = vperm.slane %v42, 1
    %v226 = vmul.f32 %v135, %v225
    %v227 = vmul.f32 %v136, %v225
    %228 = vadd.xlane.f32.xlu0 %v226
    %v229 = vpop.xlane.xlu0 %228
    %vm230 = vcmask 1043456
    %v231 = vsel %vm230, %v227, 0.0
    %232 = vadd.xlane.f32.xlu0 %v231
    %v233 = vpop.xlane.xlu0 %232
    %v234 = vperm.slane %v223, 0
    %v235 = vadd.f32 %v229, %v234
    %v236 = vadd.f32 %v233, %v234
    %vm237 = vcmp.ge.f32.partialorder %v235, 0.0
    %vm238 = vcmp.ge.f32.partialorder %v236, 0.0
    %v239 = vmul.f32 %v235, 0.01
    %v240 = vmul.f32 %v236, 0.01
    %v241 = vsel %vm237, %v235, %v239
    %v242 = vsel %vm238, %v236, %v240
    %vm243 = vcmp.gt.f32.partialorder %v46, 0.5
    %vm244 = vcmp.gt.f32.partialorder %v47, 0.5
    %v245 = vsel %vm243, %v241, -1e+30
    %v246 = vsel %vm244, %v242, -1e+30
    %vm247 = vcmask 130048
    %v248 = vsel %vm247, %v245, -inf
    %249 = vmax.xlane.f32.xlu0 %v248
    %v250 = vpop.xlane.xlu0 %249
    %vm251 = vcmask 125952
    %v252 = vsel %vm251, %v246, -inf
    %253 = vmax.xlane.f32.xlu0 %v252
    %v254 = vpop.xlane.xlu0 %253
    %v255 = vsub.f32 %v245, %v250
    %v256 = vsub.f32 %v246, %v254
    %v257 = vmul.f32 %v255, 1.442695
    %v258 = vpow.pop %v257
    %v259 = vmul.f32 %v256, 1.442695
    %v260 = vpow.pop %v259
    %v261 = vsel %vm243, %v258, 0.0
    %v262 = vsel %vm244, %v260, 0.0
    %v263 = vsel %vm247, %v261, 0.0
    %264 = vadd.xlane.f32.xlu0 %v263
    %v265 = vpop.xlane.xlu0 %264
    %v266 = vsel %vm251, %v262, 0.0
    %267 = vadd.xlane.f32.xlu0 %v266
    %v268 = vpop.xlane.xlu0 %267
    %vm269 = vcmp.gt.f32.partialorder %v265, 0.0
    %vm270 = vcmp.gt.f32.partialorder %v268, 0.0
    %v271 = vsel %vm269, %v265, 1.0
    %v272 = vsel %vm270, %v268, 1.0
    %v273 = vrcp.pop %v271
    %v274 = vmul.f32 %v271, %v273
    %v275 = vsub.f32 1.0, %v274
    %v276 = vmul.f32 %v273, %v275
    %v277 = vadd.f32 %v273, %v276
    %vm278 = vweird.f32 %v271
    %vm279 = vweird.f32 %v273
    %vm280 = vmor %vm278, %vm279
    %v281 = vsel %vm280, %v273, %v277
    %v282 = vand.u32 2147483647, %v271
    %vm283 = vcmp.eq.f32.partialorder %v282, 8.507059e+37
    %v284 = vand.u32 %v271, 2147483648
    %v285 = vor.u32 1.1754944e-38, %v284
    %v286 = vsel %vm283, %v285, %v281
    %v287 = vmul.f32 %v261, %v286
    %v288 = vrcp.pop %v272
    %v289 = vmul.f32 %v272, %v288
    %v290 = vsub.f32 1.0, %v289
    %v291 = vmul.f32 %v288, %v290
    %v292 = vadd.f32 %v288, %v291
    %vm293 = vweird.f32 %v272
    %vm294 = vweird.f32 %v288
    %vm295 = vmor %vm293, %vm294
    %v296 = vsel %vm295, %v288, %v292
    %v297 = vand.u32 2147483647, %v272
    %vm298 = vcmp.eq.f32.partialorder %v297, 8.507059e+37
    %v299 = vand.u32 %v272, 2147483648
    %v300 = vor.u32 1.1754944e-38, %v299
    %v301 = vsel %vm298, %v300, %v296
    %v302 = vmul.f32 %v262, %v301
    %v303 = vperm.slane %v42, 2
    %v305 = vsel %vm247, %v287, 0
    %v308 = vsel %vm247, %v302, 0
    %310 = vmatpush.msra.mxu0 0.0
    %311 = vmatpush.msra.mxu0 0.0
    %312 = vmatpush.msra.mxu0 0.0
    %313 = vmatpush.msra.mxu0 0.0
    %314 = vmatpush.msra.mxu0 0.0
    %315 = vmatpush.msra.mxu0 0.0
    %316 = vmatpush.msra.mxu0 0.0
    %317 = vmatpush.msra.mxu0 0.0
    %318 = vmatpush.msra.mxu0 0.0
    %319 = vmatpush.msra.mxu0 0.0
    %320 = vmatpush.msra.mxu0 0.0
    %321 = vmatpush.msra.mxu0 0.0
    %322 = vmatpush.msra.mxu0 0.0
    %323 = vmatpush.msra.mxu0 0.0
    %324 = vmatpush.msra.mxu0 %v97
    %325 = vmatpush.msra.mxu0 %v96
    %326 = vmatmul.f32.gmra.mxu0 %v305
    %v327 = vpop.f32.mrf.mxu0
    %v328 = vadd.f32 %v303, %v327
    %329 = vmatmul.f32.gmra.mxu0 %v308
    %v330 = vpop.f32.mrf.mxu0
    %v331 = vadd.f32 %v303, %v330
    %332 = vdwg.mxu0
    %v333 = vsel %vm230, %v331, 0.0
    %v334 = vadd.f32 %v328, %v333
    %v335 = vrot.slane %v334, 4
    %v336 = vadd.f32 %v334, %v335
    %v337 = vrot.slane %v336, 2
    %v338 = vadd.f32 %v336, %v337
    %v339 = vrot.slane %v338, 1
    %v340 = vadd.f32 %v338, %v339
    %v341 = vrcp.pop 12.0
    %v342 = vmul.f32 12.0, %v341
    %v343 = vsub.f32 1.0, %v342
    %v344 = vmul.f32 %v341, %v343
    %v345 = vadd.f32 %v341, %v344
    %vm346 = vweird.f32 %v341
    %v347 = vsel %vm346, %v341, %v345
    %v348 = vmul.f32 %v340, %v347
    %v349 = vsub.f32 %v328, %v348
    %v350 = vsub.f32 %v331, %v348
    %v351 = vmul.f32 %v349, %v349
    %v352 = vmul.f32 %v350, %v350
    %v353 = vsel %vm230, %v352, 0.0
    %v354 = vadd.f32 %v351, %v353
    %v355 = vrot.slane %v354, 4
    %v356 = vadd.f32 %v354, %v355
    %v357 = vrot.slane %v356, 2
    %v358 = vadd.f32 %v356, %v357
    %v359 = vrot.slane %v358, 1
    %v360 = vadd.f32 %v358, %v359
    %v361 = vmul.f32 %v360, %v347
    %v362 = vadd.f32 %v361, 1e-05
    %v363 = vrsqrt.pop %v362
    %v364 = vmul.f32 %v363, %v362
    %v365 = vmul.f32 %v364, %v363
    %v366 = vmul.f32 0.5, %v365
    %v367 = vsub.f32 1.5, %v366
    %v368 = vmul.f32 %v363, %v367
    %vm369 = vweird.f32 %v362
    %vm370 = vweird.f32 %v363
    %vm371 = vmor %vm369, %vm370
    %v372 = vsel %vm371, %v363, %v368
    %v373 = vmul.f32 %v349, %v372
    %v374 = vmul.f32 %v350, %v372
    %v375 = vperm.slane %v42, 3
    %v376 = vmul.f32 %v373, %v375
    %v377 = vmul.f32 %v374, %v375
    %v378 = vperm.slane %v42, 4
    %v379 = vadd.f32 %v376, %v378
    %v380 = vadd.f32 %v377, %v378
    %vm381 = vcmp.ge.f32.partialorder %v379, 0.0
    %vm382 = vcmp.ge.f32.partialorder %v380, 0.0
    %v383 = vperm.slane %v42, 5
    %v384 = vmul.f32 %v383, %v379
    %v385 = vmul.f32 %v383, %v380
    %v386 = vsel %vm381, %v379, %v384
    %v387 = vsel %vm382, %v380, %v385
    %v389 = vrot.slane %v42, 6
    %391 = vmatpush.xpose.msra.mxu0 0.0
    %392 = vmatpush.xpose.msra.mxu0 0.0
    %393 = vmatpush.xpose.msra.mxu0 0.0
    %394 = vmatpush.xpose.msra.mxu0 0.0
    %395 = vmatpush.xpose.msra.mxu0 0.0
    %396 = vmatpush.xpose.msra.mxu0 0.0
    %397 = vmatpush.xpose.msra.mxu0 0.0
    %398 = vmatpush.xpose.msra.mxu0 0.0
    %399 = vmatpush.xpose.msra.mxu0 0.0
    %400 = vmatpush.xpose.msra.mxu0 0.0
    %401 = vmatpush.xpose.msra.mxu0 0.0
    %402 = vmatpush.xpose.msra.mxu0 0.0
    %403 = vmatpush.xpose.msra.mxu0 0.0
    %404 = vmatpush.xpose.msra.mxu0 0.0
    %405 = vmatpush.xpose.msra.mxu0 %v387
    %406 = vmatpush.xpose.msra.mxu0 %v386
    %407 = vmatmul.f32.gmra.mxu0 %v389
    %v408 = vpop.f32.mrf.mxu0
    %v409 = vadd.f32 0.0, %v408
    %410 = vdwg.mxu0
    %v411 = vperm.slane %v42, 7
    %v412 = vmul.f32 %v96, %v411
    %v413 = vmul.f32 %v97, %v411
    %414 = vadd.xlane.f32.xlu0 %v412
    %v415 = vpop.xlane.xlu0 %414
    %416 = vadd.xlane.f32.xlu0 %v413
    %v417 = vpop.xlane.xlu0 %416
    %v418 = vperm.slane %v409, 0
    %v419 = vadd.f32 %v415, %v418
    %v420 = vadd.f32 %v417, %v418
    %vm421 = vcmp.ge.f32.partialorder %v419, 0.0
    %vm422 = vcmp.ge.f32.partialorder %v420, 0.0
    %v423 = vmul.f32 %v419, 0.01
    %v424 = vmul.f32 %v420, 0.01
    %v425 = vsel %vm421, %v419, %v423
    %v426 = vsel %vm422, %v420, %v424
    %vm427 = vcmp.gt.f32.partialorder %v48, 0.5
    %vm428 = vcmp.gt.f32.partialorder %v49, 0.5
    %v429 = vsel %vm427, %v425, -1e+30
    %v430 = vsel %vm428, %v426, -1e+30
    %vm431 = vcmask 97280
    %v432 = vsel %vm431, %v429, -inf
    %433 = vmax.xlane.f32.xlu0 %v432
    %v434 = vpop.xlane.xlu0 %433
    %v435 = vsel %vm431, %v430, -inf
    %436 = vmax.xlane.f32.xlu0 %v435
    %v437 = vpop.xlane.xlu0 %436
    %v438 = vsub.f32 %v429, %v434
    %v439 = vsub.f32 %v430, %v437
    %v440 = vmul.f32 %v438, 1.442695
    %v441 = vpow.pop %v440
    %v442 = vmul.f32 %v439, 1.442695
    %v443 = vpow.pop %v442
    %v444 = vsel %vm427, %v441, 0.0
    %v445 = vsel %vm428, %v443, 0.0
    %v446 = vsel %vm431, %v444, 0.0
    %447 = vadd.xlane.f32.xlu0 %v446
    %v448 = vpop.xlane.xlu0 %447
    %v449 = vsel %vm431, %v445, 0.0
    %450 = vadd.xlane.f32.xlu0 %v449
    %v451 = vpop.xlane.xlu0 %450
    %vm452 = vcmp.gt.f32.partialorder %v448, 0.0
    %vm453 = vcmp.gt.f32.partialorder %v451, 0.0
    %v454 = vsel %vm452, %v448, 1.0
    %v455 = vsel %vm453, %v451, 1.0
    %v456 = vrcp.pop %v454
    %v457 = vmul.f32 %v454, %v456
    %v458 = vsub.f32 1.0, %v457
    %v459 = vmul.f32 %v456, %v458
    %v460 = vadd.f32 %v456, %v459
    %vm461 = vweird.f32 %v454
    %vm462 = vweird.f32 %v456
    %vm463 = vmor %vm461, %vm462
    %v464 = vsel %vm463, %v456, %v460
    %v465 = vand.u32 2147483647, %v454
    %vm466 = vcmp.eq.f32.partialorder %v465, 8.507059e+37
    %v467 = vand.u32 %v454, 2147483648
    %v468 = vor.u32 1.1754944e-38, %v467
    %v469 = vsel %vm466, %v468, %v464
    %v470 = vmul.f32 %v444, %v469
    %v471 = vrcp.pop %v455
    %v472 = vmul.f32 %v455, %v471
    %v473 = vsub.f32 1.0, %v472
    %v474 = vmul.f32 %v471, %v473
    %v475 = vadd.f32 %v471, %v474
    %vm476 = vweird.f32 %v455
    %vm477 = vweird.f32 %v471
    %vm478 = vmor %vm476, %vm477
    %v479 = vsel %vm478, %v471, %v475
    %v480 = vand.u32 2147483647, %v455
    %vm481 = vcmp.eq.f32.partialorder %v480, 8.507059e+37
    %v482 = vand.u32 %v455, 2147483648
    %v483 = vor.u32 1.1754944e-38, %v482
    %v484 = vsel %vm481, %v483, %v479
    %v485 = vmul.f32 %v445, %v484
    %v486 = vperm.slane %v43, 0
    %v488 = vsel %vm431, %v470, 0
    %v491 = vsel %vm431, %v485, 0
    %v494 = vsel %vm230, %v387, 0
    %496 = vmatpush.msra.mxu0 0.0
    %497 = vmatpush.msra.mxu0 0.0
    %498 = vmatpush.msra.mxu0 0.0
    %499 = vmatpush.msra.mxu0 0.0
    %500 = vmatpush.msra.mxu0 0.0
    %501 = vmatpush.msra.mxu0 0.0
    %502 = vmatpush.msra.mxu0 0.0
    %503 = vmatpush.msra.mxu0 0.0
    %504 = vmatpush.msra.mxu0 0.0
    %505 = vmatpush.msra.mxu0 0.0
    %506 = vmatpush.msra.mxu0 0.0
    %507 = vmatpush.msra.mxu0 0.0
    %508 = vmatpush.msra.mxu0 0.0
    %509 = vmatpush.msra.mxu0 0.0
    %510 = vmatpush.msra.mxu0 %v494
    %511 = vmatpush.msra.mxu0 %v386
    %512 = vmatmul.f32.gmra.mxu0 %v488
    %v513 = vpop.f32.mrf.mxu0
    %v514 = vadd.f32 %v486, %v513
    %515 = vmatmul.f32.gmra.mxu0 %v491
    %v516 = vpop.f32.mrf.mxu0
    %v517 = vadd.f32 %v486, %v516
    %518 = vdwg.mxu0
    %v519 = vadd.f32 %v514, %v517
    %v520 = vrot.slane %v519, 4
    %v521 = vadd.f32 %v519, %v520
    %v522 = vrot.slane %v521, 2
    %v523 = vadd.f32 %v521, %v522
    %v524 = vrot.slane %v523, 1
    %v525 = vadd.f32 %v523, %v524
    %v526 = vrcp.pop 16.0
    %v527 = vmul.f32 16.0, %v526
    %v528 = vsub.f32 1.0, %v527
    %v529 = vmul.f32 %v526, %v528
    %v530 = vadd.f32 %v526, %v529
    %vm531 = vweird.f32 %v526
    %v532 = vsel %vm531, %v526, %v530
    %v533 = vmul.f32 %v525, %v532
    %v534 = vsub.f32 %v514, %v533
    %v535 = vsub.f32 %v517, %v533
    %v536 = vmul.f32 %v534, %v534
    %v537 = vmul.f32 %v535, %v535
    %v538 = vadd.f32 %v536, %v537
    %v539 = vrot.slane %v538, 4
    %v540 = vadd.f32 %v538, %v539
    %v541 = vrot.slane %v540, 2
    %v542 = vadd.f32 %v540, %v541
    %v543 = vrot.slane %v542, 1
    %v544 = vadd.f32 %v542, %v543
    %v545 = vmul.f32 %v544, %v532
    %v546 = vadd.f32 %v545, 1e-05
    %v547 = vrsqrt.pop %v546
    %v548 = vmul.f32 %v547, %v546
    %v549 = vmul.f32 %v548, %v547
    %v550 = vmul.f32 0.5, %v549
    %v551 = vsub.f32 1.5, %v550
    %v552 = vmul.f32 %v547, %v551
    %vm553 = vweird.f32 %v546
    %vm554 = vweird.f32 %v547
    %vm555 = vmor %vm553, %vm554
    %v556 = vsel %vm555, %v547, %v552
    %v557 = vmul.f32 %v534, %v556
    %v558 = vmul.f32 %v535, %v556
    %v559 = vperm.slane %v43, 1
    %v560 = vmul.f32 %v557, %v559
    %v561 = vmul.f32 %v558, %v559
    %v562 = vperm.slane %v43, 2
    %v563 = vadd.f32 %v560, %v562
    %v564 = vadd.f32 %v561, %v562
    %vm565 = vcmp.ge.f32.partialorder %v563, 0.0
    %vm566 = vcmp.ge.f32.partialorder %v564, 0.0
    %v567 = vperm.slane %v43, 3
    %v568 = vmul.f32 %v567, %v563
    %v569 = vmul.f32 %v567, %v564
    %v570 = vsel %vm565, %v563, %v568
    %v571 = vsel %vm566, %v564, %v569
    %v573 = vrot.slane %v43, 4
    %575 = vmatpush.xpose.msra.mxu0 0.0
    %576 = vmatpush.xpose.msra.mxu0 0.0
    %577 = vmatpush.xpose.msra.mxu0 0.0
    %578 = vmatpush.xpose.msra.mxu0 0.0
    %579 = vmatpush.xpose.msra.mxu0 0.0
    %580 = vmatpush.xpose.msra.mxu0 0.0
    %581 = vmatpush.xpose.msra.mxu0 0.0
    %582 = vmatpush.xpose.msra.mxu0 0.0
    %583 = vmatpush.xpose.msra.mxu0 0.0
    %584 = vmatpush.xpose.msra.mxu0 0.0
    %585 = vmatpush.xpose.msra.mxu0 0.0
    %586 = vmatpush.xpose.msra.mxu0 0.0
    %587 = vmatpush.xpose.msra.mxu0 0.0
    %588 = vmatpush.xpose.msra.mxu0 0.0
    %589 = vmatpush.xpose.msra.mxu0 0.0
    %590 = vmatpush.xpose.msra.mxu0 %v170
    %591 = vmatmul.f32.gmra.mxu0 %v573
    %v592 = vpop.f32.mrf.mxu0
    %v593 = vadd.f32 0.0, %v592
    %594 = vdwg.mxu0
    %v595 = vperm.slane %v43, 5
    %v596 = vmul.f32 %v96, %v595
    %v597 = vmul.f32 %v97, %v595
    %598 = vadd.xlane.f32.xlu0 %v596
    %v599 = vpop.xlane.xlu0 %598
    %600 = vadd.xlane.f32.xlu0 %v597
    %v601 = vpop.xlane.xlu0 %600
    %v602 = vperm.slane %v593, 0
    %v603 = vadd.f32 %v599, %v602
    %v604 = vadd.f32 %v601, %v602
    %vm605 = vcmp.ge.f32.partialorder %v603, 0.0
    %vm606 = vcmp.ge.f32.partialorder %v604, 0.0
    %v607 = vmul.f32 %v603, 0.01
    %v608 = vmul.f32 %v604, 0.01
    %v609 = vsel %vm605, %v603, %v607
    %v610 = vsel %vm606, %v604, %v608
    %vm611 = vcmp.gt.f32.partialorder %v50, 0.5
    %vm612 = vcmp.gt.f32.partialorder %v51, 0.5
    %v613 = vsel %vm611, %v609, -1e+30
    %v614 = vsel %vm612, %v610, -1e+30
    %vm615 = vcmask 64512
    %v616 = vsel %vm615, %v613, -inf
    %617 = vmax.xlane.f32.xlu0 %v616
    %v618 = vpop.xlane.xlu0 %617
    %v619 = vsel %vm615, %v614, -inf
    %620 = vmax.xlane.f32.xlu0 %v619
    %v621 = vpop.xlane.xlu0 %620
    %v622 = vsub.f32 %v613, %v618
    %v623 = vsub.f32 %v614, %v621
    %v624 = vmul.f32 %v622, 1.442695
    %v625 = vpow.pop %v624
    %v626 = vmul.f32 %v623, 1.442695
    %v627 = vpow.pop %v626
    %v628 = vsel %vm611, %v625, 0.0
    %v629 = vsel %vm612, %v627, 0.0
    %v630 = vsel %vm615, %v628, 0.0
    %631 = vadd.xlane.f32.xlu0 %v630
    %v632 = vpop.xlane.xlu0 %631
    %v633 = vsel %vm615, %v629, 0.0
    %634 = vadd.xlane.f32.xlu0 %v633
    %v635 = vpop.xlane.xlu0 %634
    %vm636 = vcmp.gt.f32.partialorder %v632, 0.0
    %vm637 = vcmp.gt.f32.partialorder %v635, 0.0
    %v638 = vsel %vm636, %v632, 1.0
    %v639 = vsel %vm637, %v635, 1.0
    %v640 = vrcp.pop %v638
    %v641 = vmul.f32 %v638, %v640
    %v642 = vsub.f32 1.0, %v641
    %v643 = vmul.f32 %v640, %v642
    %v644 = vadd.f32 %v640, %v643
    %vm645 = vweird.f32 %v638
    %vm646 = vweird.f32 %v640
    %vm647 = vmor %vm645, %vm646
    %v648 = vsel %vm647, %v640, %v644
    %v649 = vand.u32 2147483647, %v638
    %vm650 = vcmp.eq.f32.partialorder %v649, 8.507059e+37
    %v651 = vand.u32 %v638, 2147483648
    %v652 = vor.u32 1.1754944e-38, %v651
    %v653 = vsel %vm650, %v652, %v648
    %v654 = vmul.f32 %v628, %v653
    %v655 = vrcp.pop %v639
    %v656 = vmul.f32 %v639, %v655
    %v657 = vsub.f32 1.0, %v656
    %v658 = vmul.f32 %v655, %v657
    %v659 = vadd.f32 %v655, %v658
    %vm660 = vweird.f32 %v639
    %vm661 = vweird.f32 %v655
    %vm662 = vmor %vm660, %vm661
    %v663 = vsel %vm662, %v655, %v659
    %v664 = vand.u32 2147483647, %v639
    %vm665 = vcmp.eq.f32.partialorder %v664, 8.507059e+37
    %v666 = vand.u32 %v639, 2147483648
    %v667 = vor.u32 1.1754944e-38, %v666
    %v668 = vsel %vm665, %v667, %v663
    %v669 = vmul.f32 %v629, %v668
    %v670 = vperm.slane %v43, 6
    %v672 = vsel %vm615, %v654, 0
    %v675 = vsel %vm615, %v669, 0
    %677 = vmatpush.msra.mxu0 0.0
    %678 = vmatpush.msra.mxu0 0.0
    %679 = vmatpush.msra.mxu0 0.0
    %680 = vmatpush.msra.mxu0 0.0
    %681 = vmatpush.msra.mxu0 0.0
    %682 = vmatpush.msra.mxu0 0.0
    %683 = vmatpush.msra.mxu0 0.0
    %684 = vmatpush.msra.mxu0 0.0
    %685 = vmatpush.msra.mxu0 0.0
    %686 = vmatpush.msra.mxu0 0.0
    %687 = vmatpush.msra.mxu0 0.0
    %688 = vmatpush.msra.mxu0 0.0
    %689 = vmatpush.msra.mxu0 0.0
    %690 = vmatpush.msra.mxu0 0.0
    %691 = vmatpush.msra.mxu0 0.0
    %692 = vmatpush.msra.mxu0 %v170
    %693 = vmatmul.f32.gmra.mxu0 %v672
    %v694 = vpop.f32.mrf.mxu0
    %v695 = vadd.f32 %v670, %v694
    %696 = vmatmul.f32.gmra.mxu0 %v675
    %v697 = vpop.f32.mrf.mxu0
    %v698 = vadd.f32 %v670, %v697
    %699 = vdwg.mxu0
    %v700 = vadd.f32 %v695, %v698
    %v701 = vrot.slane %v700, 4
    %v702 = vadd.f32 %v700, %v701
    %v703 = vrot.slane %v702, 2
    %v704 = vadd.f32 %v702, %v703
    %v705 = vrot.slane %v704, 1
    %v706 = vadd.f32 %v704, %v705
    %v707 = vmul.f32 %v706, %v532
    %v708 = vsub.f32 %v695, %v707
    %v709 = vsub.f32 %v698, %v707
    %v710 = vmul.f32 %v708, %v708
    %v711 = vmul.f32 %v709, %v709
    %v712 = vadd.f32 %v710, %v711
    %v713 = vrot.slane %v712, 4
    %v714 = vadd.f32 %v712, %v713
    %v715 = vrot.slane %v714, 2
    %v716 = vadd.f32 %v714, %v715
    %v717 = vrot.slane %v716, 1
    %v718 = vadd.f32 %v716, %v717
    %v719 = vmul.f32 %v718, %v532
    %v720 = vadd.f32 %v719, 1e-05
    %v721 = vrsqrt.pop %v720
    %v722 = vmul.f32 %v721, %v720
    %v723 = vmul.f32 %v722, %v721
    %v724 = vmul.f32 0.5, %v723
    %v725 = vsub.f32 1.5, %v724
    %v726 = vmul.f32 %v721, %v725
    %vm727 = vweird.f32 %v720
    %vm728 = vweird.f32 %v721
    %vm729 = vmor %vm727, %vm728
    %v730 = vsel %vm729, %v721, %v726
    %v731 = vmul.f32 %v708, %v730
    %v732 = vmul.f32 %v709, %v730
    %v733 = vperm.slane %v43, 7
    %v734 = vmul.f32 %v731, %v733
    %v735 = vmul.f32 %v732, %v733
    %v736 = vperm.slane %v44, 0
    %v737 = vadd.f32 %v734, %v736
    %v738 = vadd.f32 %v735, %v736
    %vm739 = vcmp.ge.f32.partialorder %v737, 0.0
    %vm740 = vcmp.ge.f32.partialorder %v738, 0.0
    %v741 = vperm.slane %v44, 1
    %v742 = vmul.f32 %v741, %v737
    %v743 = vmul.f32 %v741, %v738
    %v744 = vsel %vm739, %v737, %v742
    %v745 = vsel %vm740, %v738, %v743
    %v747 = vrot.slane %v44, 2
    %749 = vmatpush.xpose.msra.mxu0 0.0
    %750 = vmatpush.xpose.msra.mxu0 0.0
    %751 = vmatpush.xpose.msra.mxu0 0.0
    %752 = vmatpush.xpose.msra.mxu0 0.0
    %753 = vmatpush.xpose.msra.mxu0 0.0
    %754 = vmatpush.xpose.msra.mxu0 0.0
    %755 = vmatpush.xpose.msra.mxu0 0.0
    %756 = vmatpush.xpose.msra.mxu0 0.0
    %757 = vmatpush.xpose.msra.mxu0 0.0
    %758 = vmatpush.xpose.msra.mxu0 0.0
    %759 = vmatpush.xpose.msra.mxu0 0.0
    %760 = vmatpush.xpose.msra.mxu0 0.0
    %761 = vmatpush.xpose.msra.mxu0 0.0
    %762 = vmatpush.xpose.msra.mxu0 0.0
    %763 = vmatpush.xpose.msra.mxu0 0.0
    %764 = vmatpush.xpose.msra.mxu0 %v204
    %765 = vmatmul.f32.gmra.mxu0 %v747
    %v766 = vpop.f32.mrf.mxu0
    %v767 = vadd.f32 0.0, %v766
    %768 = vdwg.mxu0
    %v769 = vperm.slane %v44, 3
    %v770 = vmul.f32 %v96, %v769
    %v771 = vmul.f32 %v97, %v769
    %772 = vadd.xlane.f32.xlu0 %v770
    %v773 = vpop.xlane.xlu0 %772
    %774 = vadd.xlane.f32.xlu0 %v771
    %v775 = vpop.xlane.xlu0 %774
    %v776 = vperm.slane %v767, 0
    %v777 = vadd.f32 %v773, %v776
    %v778 = vadd.f32 %v775, %v776
    %vm779 = vcmp.ge.f32.partialorder %v777, 0.0
    %vm780 = vcmp.ge.f32.partialorder %v778, 0.0
    %v781 = vmul.f32 %v777, 0.01
    %v782 = vmul.f32 %v778, 0.01
    %v783 = vsel %vm779, %v777, %v781
    %v784 = vsel %vm780, %v778, %v782
    %vm785 = vcmp.gt.f32.partialorder %v52, 0.5
    %vm786 = vcmp.gt.f32.partialorder %v53, 0.5
    %v787 = vsel %vm785, %v783, -1e+30
    %v788 = vsel %vm786, %v784, -1e+30
    %v789 = vsel %vm615, %v787, -inf
    %790 = vmax.xlane.f32.xlu0 %v789
    %v791 = vpop.xlane.xlu0 %790
    %v792 = vsel %vm615, %v788, -inf
    %793 = vmax.xlane.f32.xlu0 %v792
    %v794 = vpop.xlane.xlu0 %793
    %v795 = vsub.f32 %v787, %v791
    %v796 = vsub.f32 %v788, %v794
    %v797 = vmul.f32 %v795, 1.442695
    %v798 = vpow.pop %v797
    %v799 = vmul.f32 %v796, 1.442695
    %v800 = vpow.pop %v799
    %v801 = vsel %vm785, %v798, 0.0
    %v802 = vsel %vm786, %v800, 0.0
    %v803 = vsel %vm615, %v801, 0.0
    %804 = vadd.xlane.f32.xlu0 %v803
    %v805 = vpop.xlane.xlu0 %804
    %v806 = vsel %vm615, %v802, 0.0
    %807 = vadd.xlane.f32.xlu0 %v806
    %v808 = vpop.xlane.xlu0 %807
    %vm809 = vcmp.gt.f32.partialorder %v805, 0.0
    %vm810 = vcmp.gt.f32.partialorder %v808, 0.0
    %v811 = vsel %vm809, %v805, 1.0
    %v812 = vsel %vm810, %v808, 1.0
    %v813 = vrcp.pop %v811
    %v814 = vmul.f32 %v811, %v813
    %v815 = vsub.f32 1.0, %v814
    %v816 = vmul.f32 %v813, %v815
    %v817 = vadd.f32 %v813, %v816
    %vm818 = vweird.f32 %v811
    %vm819 = vweird.f32 %v813
    %vm820 = vmor %vm818, %vm819
    %v821 = vsel %vm820, %v813, %v817
    %v822 = vand.u32 2147483647, %v811
    %vm823 = vcmp.eq.f32.partialorder %v822, 8.507059e+37
    %v824 = vand.u32 %v811, 2147483648
    %v825 = vor.u32 1.1754944e-38, %v824
    %v826 = vsel %vm823, %v825, %v821
    %v827 = vmul.f32 %v801, %v826
    %v828 = vrcp.pop %v812
    %v829 = vmul.f32 %v812, %v828
    %v830 = vsub.f32 1.0, %v829
    %v831 = vmul.f32 %v828, %v830
    %v832 = vadd.f32 %v828, %v831
    %vm833 = vweird.f32 %v812
    %vm834 = vweird.f32 %v828
    %vm835 = vmor %vm833, %vm834
    %v836 = vsel %vm835, %v828, %v832
    %v837 = vand.u32 2147483647, %v812
    %vm838 = vcmp.eq.f32.partialorder %v837, 8.507059e+37
    %v839 = vand.u32 %v812, 2147483648
    %v840 = vor.u32 1.1754944e-38, %v839
    %v841 = vsel %vm838, %v840, %v836
    %v842 = vmul.f32 %v802, %v841
    %v843 = vperm.slane %v44, 4
    %v845 = vsel %vm615, %v827, 0
    %v848 = vsel %vm615, %v842, 0
    %850 = vmatpush.msra.mxu0 0.0
    %851 = vmatpush.msra.mxu0 0.0
    %852 = vmatpush.msra.mxu0 0.0
    %853 = vmatpush.msra.mxu0 0.0
    %854 = vmatpush.msra.mxu0 0.0
    %855 = vmatpush.msra.mxu0 0.0
    %856 = vmatpush.msra.mxu0 0.0
    %857 = vmatpush.msra.mxu0 0.0
    %858 = vmatpush.msra.mxu0 0.0
    %859 = vmatpush.msra.mxu0 0.0
    %860 = vmatpush.msra.mxu0 0.0
    %861 = vmatpush.msra.mxu0 0.0
    %862 = vmatpush.msra.mxu0 0.0
    %863 = vmatpush.msra.mxu0 0.0
    %864 = vmatpush.msra.mxu0 0.0
    %865 = vmatpush.msra.mxu0 %v204
    %866 = vmatmul.f32.gmra.mxu0 %v845
    %v867 = vpop.f32.mrf.mxu0
    %v868 = vadd.f32 %v843, %v867
    %869 = vmatmul.f32.gmra.mxu0 %v848
    %v870 = vpop.f32.mrf.mxu0
    %v871 = vadd.f32 %v843, %v870
    %872 = vdwg.mxu0
    %v873 = vadd.f32 %v868, %v871
    %v874 = vrot.slane %v873, 4
    %v875 = vadd.f32 %v873, %v874
    %v876 = vrot.slane %v875, 2
    %v877 = vadd.f32 %v875, %v876
    %v878 = vrot.slane %v877, 1
    %v879 = vadd.f32 %v877, %v878
    %v880 = vmul.f32 %v879, %v532
    %v881 = vsub.f32 %v868, %v880
    %v882 = vsub.f32 %v871, %v880
    %v883 = vmul.f32 %v881, %v881
    %v884 = vmul.f32 %v882, %v882
    %v885 = vadd.f32 %v883, %v884
    %v886 = vrot.slane %v885, 4
    %v887 = vadd.f32 %v885, %v886
    %v888 = vrot.slane %v887, 2
    %v889 = vadd.f32 %v887, %v888
    %v890 = vrot.slane %v889, 1
    %v891 = vadd.f32 %v889, %v890
    %v892 = vmul.f32 %v891, %v532
    %v893 = vadd.f32 %v892, 1e-05
    %v894 = vrsqrt.pop %v893
    %v895 = vmul.f32 %v894, %v893
    %v896 = vmul.f32 %v895, %v894
    %v897 = vmul.f32 0.5, %v896
    %v898 = vsub.f32 1.5, %v897
    %v899 = vmul.f32 %v894, %v898
    %vm900 = vweird.f32 %v893
    %vm901 = vweird.f32 %v894
    %vm902 = vmor %vm900, %vm901
    %v903 = vsel %vm902, %v894, %v899
    %v904 = vmul.f32 %v881, %v903
    %v905 = vmul.f32 %v882, %v903
    %v906 = vperm.slane %v44, 5
    %v907 = vmul.f32 %v904, %v906
    %v908 = vmul.f32 %v905, %v906
    %v909 = vperm.slane %v44, 6
    %v910 = vadd.f32 %v907, %v909
    %v911 = vadd.f32 %v908, %v909
    %vm912 = vcmp.ge.f32.partialorder %v910, 0.0
    %vm913 = vcmp.ge.f32.partialorder %v911, 0.0
    %v914 = vperm.slane %v44, 7
    %v915 = vmul.f32 %v914, %v910
    %v916 = vmul.f32 %v914, %v911
    %v917 = vsel %vm912, %v910, %v915
    %v918 = vsel %vm913, %v911, %v916
    %vm919 = vcmp.gt.f32.partialorder %v54, 0.5
    %vm920 = vcmp.gt.f32.partialorder %v55, 0.5
    %v921 = vsel %vm919, 1, 0
    %v922 = vsel %vm920, 1, 0
    %923 = vset.pattern.permute.xlu0 0
    %924 = vperm.xlu0 %923, %v921
    %v925 = vpop.permute.xlu0 %924
    %926 = vset.pattern.permute.xlu0 0
    %927 = vperm.xlu0 %926, %v922
    %v928 = vpop.permute.xlu0 %927
    %vm929 = vcmp.eq.s32.totalorder %v925, 1
    %vm930 = vcmp.eq.s32.totalorder %v928, 1
    %v931 = vperm.slane %v45, 0
    %v932 = vsel %vm929, %v931, %v96
    %v933 = vsel %vm930, %v931, %v97
    %v934 = vmul.f32 %v932, %v595
    %v935 = vmul.f32 %v933, %v595
    %936 = vadd.xlane.f32.xlu0 %v934
    %v937 = vpop.xlane.xlu0 %936
    %938 = vadd.xlane.f32.xlu0 %v935
    %v939 = vpop.xlane.xlu0 %938
    %v940 = vadd.f32 %v937, %v602
    %v941 = vadd.f32 %v939, %v602
    %vm942 = vcmp.ge.f32.partialorder %v940, 0.0
    %vm943 = vcmp.ge.f32.partialorder %v941, 0.0
    %v944 = vmul.f32 %v940, 0.01
    %v945 = vmul.f32 %v941, 0.01
    %v946 = vsel %vm942, %v940, %v944
    %v947 = vsel %vm943, %v941, %v945
    %v948 = vsel %vm611, %v946, -1e+30
    %v949 = vsel %vm612, %v947, -1e+30
    %v950 = vsel %vm615, %v948, -inf
    %951 = vmax.xlane.f32.xlu0 %v950
    %v952 = vpop.xlane.xlu0 %951
    %v953 = vsel %vm615, %v949, -inf
    %954 = vmax.xlane.f32.xlu0 %v953
    %v955 = vpop.xlane.xlu0 %954
    %v956 = vsub.f32 %v948, %v952
    %v957 = vsub.f32 %v949, %v955
    %v958 = vmul.f32 %v956, 1.442695
    %v959 = vpow.pop %v958
    %v960 = vmul.f32 %v957, 1.442695
    %v961 = vpow.pop %v960
    %v962 = vsel %vm611, %v959, 0.0
    %v963 = vsel %vm612, %v961, 0.0
    %v964 = vsel %vm615, %v962, 0.0
    %965 = vadd.xlane.f32.xlu0 %v964
    %v966 = vpop.xlane.xlu0 %965
    %v967 = vsel %vm615, %v963, 0.0
    %968 = vadd.xlane.f32.xlu0 %v967
    %v969 = vpop.xlane.xlu0 %968
    %vm970 = vcmp.gt.f32.partialorder %v966, 0.0
    %vm971 = vcmp.gt.f32.partialorder %v969, 0.0
    %v972 = vsel %vm970, %v966, 1.0
    %v973 = vsel %vm971, %v969, 1.0
    %v974 = vrcp.pop %v972
    %v975 = vmul.f32 %v972, %v974
    %v976 = vsub.f32 1.0, %v975
    %v977 = vmul.f32 %v974, %v976
    %v978 = vadd.f32 %v974, %v977
    %vm979 = vweird.f32 %v972
    %vm980 = vweird.f32 %v974
    %vm981 = vmor %vm979, %vm980
    %v982 = vsel %vm981, %v974, %v978
    %v983 = vand.u32 2147483647, %v972
    %vm984 = vcmp.eq.f32.partialorder %v983, 8.507059e+37
    %v985 = vand.u32 %v972, 2147483648
    %v986 = vor.u32 1.1754944e-38, %v985
    %v987 = vsel %vm984, %v986, %v982
    %v988 = vmul.f32 %v962, %v987
    %v989 = vrcp.pop %v973
    %v990 = vmul.f32 %v973, %v989
    %v991 = vsub.f32 1.0, %v990
    %v992 = vmul.f32 %v989, %v991
    %v993 = vadd.f32 %v989, %v992
    %vm994 = vweird.f32 %v973
    %vm995 = vweird.f32 %v989
    %vm996 = vmor %vm994, %vm995
    %v997 = vsel %vm996, %v989, %v993
    %v998 = vand.u32 2147483647, %v973
    %vm999 = vcmp.eq.f32.partialorder %v998, 8.507059e+37
    %v1000 = vand.u32 %v973, 2147483648
    %v1001 = vor.u32 1.1754944e-38, %v1000
    %v1002 = vsel %vm999, %v1001, %v997
    %v1003 = vmul.f32 %v963, %v1002
    %v1005 = vsel %vm615, %v988, 0
    %v1008 = vsel %vm615, %v1003, 0
    %1010 = vmatpush.msra.mxu0 0.0
    %1011 = vmatpush.msra.mxu0 0.0
    %1012 = vmatpush.msra.mxu0 0.0
    %1013 = vmatpush.msra.mxu0 0.0
    %1014 = vmatpush.msra.mxu0 0.0
    %1015 = vmatpush.msra.mxu0 0.0
    %1016 = vmatpush.msra.mxu0 0.0
    %1017 = vmatpush.msra.mxu0 0.0
    %1018 = vmatpush.msra.mxu0 0.0
    %1019 = vmatpush.msra.mxu0 0.0
    %1020 = vmatpush.msra.mxu0 0.0
    %1021 = vmatpush.msra.mxu0 0.0
    %1022 = vmatpush.msra.mxu0 0.0
    %1023 = vmatpush.msra.mxu0 0.0
    %1024 = vmatpush.msra.mxu0 0.0
    %1025 = vmatpush.msra.mxu0 %v170
    %1026 = vmatmul.f32.gmra.mxu0 %v1005
    %v1027 = vpop.f32.mrf.mxu0
    %v1028 = vadd.f32 %v670, %v1027
    %1029 = vmatmul.f32.gmra.mxu0 %v1008
    %v1030 = vpop.f32.mrf.mxu0
    %v1031 = vadd.f32 %v670, %v1030
    %1032 = vdwg.mxu0
    %v1033 = vadd.f32 %v1028, %v1031
    %v1034 = vrot.slane %v1033, 4
    %v1035 = vadd.f32 %v1033, %v1034
    %v1036 = vrot.slane %v1035, 2
    %v1037 = vadd.f32 %v1035, %v1036
    %v1038 = vrot.slane %v1037, 1
    %v1039 = vadd.f32 %v1037, %v1038
    %v1040 = vmul.f32 %v1039, %v532
    %v1041 = vsub.f32 %v1028, %v1040
    %v1042 = vsub.f32 %v1031, %v1040
    %v1043 = vmul.f32 %v1041, %v1041
    %v1044 = vmul.f32 %v1042, %v1042
    %v1045 = vadd.f32 %v1043, %v1044
    %v1046 = vrot.slane %v1045, 4
    %v1047 = vadd.f32 %v1045, %v1046
    %v1048 = vrot.slane %v1047, 2
    %v1049 = vadd.f32 %v1047, %v1048
    %v1050 = vrot.slane %v1049, 1
    %v1051 = vadd.f32 %v1049, %v1050
    %v1052 = vmul.f32 %v1051, %v532
    %v1053 = vadd.f32 %v1052, 1e-05
    %v1054 = vrsqrt.pop %v1053
    %v1055 = vmul.f32 %v1054, %v1053
    %v1056 = vmul.f32 %v1055, %v1054
    %v1057 = vmul.f32 0.5, %v1056
    %v1058 = vsub.f32 1.5, %v1057
    %v1059 = vmul.f32 %v1054, %v1058
    %vm1060 = vweird.f32 %v1053
    %vm1061 = vweird.f32 %v1054
    %vm1062 = vmor %vm1060, %vm1061
    %v1063 = vsel %vm1062, %v1054, %v1059
    %v1064 = vmul.f32 %v1041, %v1063
    %v1065 = vmul.f32 %v1042, %v1063
    %v1066 = vmul.f32 %v1064, %v733
    %v1067 = vmul.f32 %v1065, %v733
    %v1068 = vadd.f32 %v1066, %v736
    %v1069 = vadd.f32 %v1067, %v736
    %vm1070 = vcmp.ge.f32.partialorder %v1068, 0.0
    %vm1071 = vcmp.ge.f32.partialorder %v1069, 0.0
    %v1072 = vmul.f32 %v741, %v1068
    %v1073 = vmul.f32 %v741, %v1069
    %v1074 = vsel %vm1070, %v1068, %v1072
    %v1075 = vsel %vm1071, %v1069, %v1073
    %v1076 = vadd.f32 %v570, %v917
    %v1077 = vadd.f32 %v571, %v918
    %v1078 = vmul.f32 %v1074, %v1074
    %v1079 = vmul.f32 %v1075, %v1075
    %1080 = vadd.xlane.f32.xlu0 %v1078
    %v1081 = vpop.xlane.xlu0 %1080
    %1082 = vadd.xlane.f32.xlu0 %v1079
    %v1083 = vpop.xlane.xlu0 %1082
    %v1084 = vrsqrt.pop %v1081
    %v1085 = vmul.f32 %v1084, %v1081
    %v1086 = vmul.f32 %v1085, %v1084
    %v1087 = vmul.f32 0.5, %v1086
    %v1088 = vsub.f32 1.5, %v1087
    %v1089 = vmul.f32 %v1084, %v1088
    %v1090 = vmul.f32 %v1081, %v1089
    %vm1091 = vcmp.eq.f32.partialorder %v1081, inf
    %v1092 = vsel %vm1091, %v1081, %v1090
    %vm1093 = vcmp.eq.f32.partialorder %v1081, 0.0
    %v1094 = vand.u32 %v1081, 2147483648
    %v1095 = vsel %vm1093, %v1094, %v1092
    %v1096 = vrsqrt.pop %v1083
    %v1097 = vmul.f32 %v1096, %v1083
    %v1098 = vmul.f32 %v1097, %v1096
    %v1099 = vmul.f32 0.5, %v1098
    %v1100 = vsub.f32 1.5, %v1099
    %v1101 = vmul.f32 %v1096, %v1100
    %v1102 = vmul.f32 %v1083, %v1101
    %vm1103 = vcmp.eq.f32.partialorder %v1083, inf
    %v1104 = vsel %vm1103, %v1083, %v1102
    %vm1105 = vcmp.eq.f32.partialorder %v1083, 0.0
    %v1106 = vand.u32 %v1083, 2147483648
    %v1107 = vsel %vm1105, %v1106, %v1104
    %v1108 = vmax.f32 %v1095, 1e-12
    %v1109 = vmax.f32 %v1107, 1e-12
    %v1110 = vrcp.pop %v1108
    %v1111 = vmul.f32 %v1108, %v1110
    %v1112 = vsub.f32 1.0, %v1111
    %v1113 = vmul.f32 %v1110, %v1112
    %v1114 = vadd.f32 %v1110, %v1113
    %vm1115 = vweird.f32 %v1108
    %vm1116 = vweird.f32 %v1110
    %vm1117 = vmor %vm1115, %vm1116
    %v1118 = vsel %vm1117, %v1110, %v1114
    %v1119 = vand.u32 2147483647, %v1108
    %vm1120 = vcmp.eq.f32.partialorder %v1119, 8.507059e+37
    %v1121 = vand.u32 %v1108, 2147483648
    %v1122 = vor.u32 1.1754944e-38, %v1121
    %v1123 = vsel %vm1120, %v1122, %v1118
    %v1124 = vmul.f32 %v1074, %v1123
    %v1125 = vrcp.pop %v1109
    %v1126 = vmul.f32 %v1109, %v1125
    %v1127 = vsub.f32 1.0, %v1126
    %v1128 = vmul.f32 %v1125, %v1127
    %v1129 = vadd.f32 %v1125, %v1128
    %vm1130 = vweird.f32 %v1109
    %vm1131 = vweird.f32 %v1125
    %vm1132 = vmor %vm1130, %vm1131
    %v1133 = vsel %vm1132, %v1125, %v1129
    %v1134 = vand.u32 2147483647, %v1109
    %vm1135 = vcmp.eq.f32.partialorder %v1134, 8.507059e+37
    %v1136 = vand.u32 %v1109, 2147483648
    %v1137 = vor.u32 1.1754944e-38, %v1136
    %v1138 = vsel %vm1135, %v1137, %v1133
    %v1139 = vmul.f32 %v1075, %v1138
    %v1140 = vmul.f32 %v1076, %v1076
    %v1141 = vmul.f32 %v1077, %v1077
    %1142 = vadd.xlane.f32.xlu0 %v1140
    %v1143 = vpop.xlane.xlu0 %1142
    %1144 = vadd.xlane.f32.xlu0 %v1141
    %v1145 = vpop.xlane.xlu0 %1144
    %v1146 = vrsqrt.pop %v1143
    %v1147 = vmul.f32 %v1146, %v1143
    %v1148 = vmul.f32 %v1147, %v1146
    %v1149 = vmul.f32 0.5, %v1148
    %v1150 = vsub.f32 1.5, %v1149
    %v1151 = vmul.f32 %v1146, %v1150
    %v1152 = vmul.f32 %v1143, %v1151
    %vm1153 = vcmp.eq.f32.partialorder %v1143, inf
    %v1154 = vsel %vm1153, %v1143, %v1152
    %vm1155 = vcmp.eq.f32.partialorder %v1143, 0.0
    %v1156 = vand.u32 %v1143, 2147483648
    %v1157 = vsel %vm1155, %v1156, %v1154
    %v1158 = vrsqrt.pop %v1145
    %v1159 = vmul.f32 %v1158, %v1145
    %v1160 = vmul.f32 %v1159, %v1158
    %v1161 = vmul.f32 0.5, %v1160
    %v1162 = vsub.f32 1.5, %v1161
    %v1163 = vmul.f32 %v1158, %v1162
    %v1164 = vmul.f32 %v1145, %v1163
    %vm1165 = vcmp.eq.f32.partialorder %v1145, inf
    %v1166 = vsel %vm1165, %v1145, %v1164
    %vm1167 = vcmp.eq.f32.partialorder %v1145, 0.0
    %v1168 = vand.u32 %v1145, 2147483648
    %v1169 = vsel %vm1167, %v1168, %v1166
    %v1170 = vmax.f32 %v1157, 1e-12
    %v1171 = vmax.f32 %v1169, 1e-12
    %v1172 = vrcp.pop %v1170
    %v1173 = vmul.f32 %v1170, %v1172
    %v1174 = vsub.f32 1.0, %v1173
    %v1175 = vmul.f32 %v1172, %v1174
    %v1176 = vadd.f32 %v1172, %v1175
    %vm1177 = vweird.f32 %v1170
    %vm1178 = vweird.f32 %v1172
    %vm1179 = vmor %vm1177, %vm1178
    %v1180 = vsel %vm1179, %v1172, %v1176
    %v1181 = vand.u32 2147483647, %v1170
    %vm1182 = vcmp.eq.f32.partialorder %v1181, 8.507059e+37
    %v1183 = vand.u32 %v1170, 2147483648
    %v1184 = vor.u32 1.1754944e-38, %v1183
    %v1185 = vsel %vm1182, %v1184, %v1180
    %v1186 = vmul.f32 %v1076, %v1185
    %v1187 = vrcp.pop %v1171
    %v1188 = vmul.f32 %v1171, %v1187
    %v1189 = vsub.f32 1.0, %v1188
    %v1190 = vmul.f32 %v1187, %v1189
    %v1191 = vadd.f32 %v1187, %v1190
    %vm1192 = vweird.f32 %v1171
    %vm1193 = vweird.f32 %v1187
    %vm1194 = vmor %vm1192, %vm1193
    %v1195 = vsel %vm1194, %v1187, %v1191
    %v1196 = vand.u32 2147483647, %v1171
    %vm1197 = vcmp.eq.f32.partialorder %v1196, 8.507059e+37
    %v1198 = vand.u32 %v1171, 2147483648
    %v1199 = vor.u32 1.1754944e-38, %v1198
    %v1200 = vsel %vm1197, %v1199, %v1195
    %v1201 = vmul.f32 %v1077, %v1200
    %v1202 = vmul.f32 %v1124, %v1186
    %v1203 = vmul.f32 %v1139, %v1201
    %1204 = vadd.xlane.f32.xlu0 %v1202
    %v1205 = vpop.xlane.xlu0 %1204
    %1206 = vadd.xlane.f32.xlu0 %v1203
    %v1207 = vpop.xlane.xlu0 %1206
    %v1208 = vsub.f32 1.0, %v1205
    %v1209 = vsub.f32 1.0, %v1207
    %v1210 = vmul.f32 %v54, %v1208
    %v1211 = vmul.f32 %v55, %v1209
    %vm1212 = vcmask 7168
    %v1213 = vsel %vm1212, %v1210, 0.0
    %v1214 = vsel %vm1212, %v1211, 0.0
    %v1215 = vadd.f32 %v1213, %v1214
    %1216 = vadd.xlane.f32.xlu0 %v1215
    %v1217 = vpop.xlane.xlu0 %1216
    %v1218 = vrot.slane %v1217, 4
    %v1219 = vadd.f32 %v1217, %v1218
    %v1220 = vrot.slane %v1219, 2
    %v1221 = vadd.f32 %v1219, %v1220
    %v1222 = vrot.slane %v1221, 1
    %v1223 = vadd.f32 %v1221, %v1222
    %s1224 = vtos %v1223
    %v1225 = vstv %s1224
    %v1226 = vsel %vm1212, %v54, 0.0
    %v1227 = vsel %vm1212, %v55, 0.0
    %v1228 = vadd.f32 %v1226, %v1227
    %1229 = vadd.xlane.f32.xlu0 %v1228
    %v1230 = vpop.xlane.xlu0 %1229
    %v1231 = vrot.slane %v1230, 4
    %v1232 = vadd.f32 %v1230, %v1231
    %v1233 = vrot.slane %v1232, 2
    %v1234 = vadd.f32 %v1232, %v1233
    %v1235 = vrot.slane %v1234, 1
    %v1236 = vadd.f32 %v1234, %v1235
    %s1237 = vtos %v1236
    %v1238 = vstv %s1237
    %v1239 = vmax.f32 %v1238, 1.0
    %v1240 = vrcp.pop %v1239
    %v1241 = vmul.f32 %v1239, %v1240
    %v1242 = vsub.f32 1.0, %v1241
    %v1243 = vmul.f32 %v1240, %v1242
    %v1244 = vadd.f32 %v1240, %v1243
    %vm1245 = vweird.f32 %v1239
    %vm1246 = vweird.f32 %v1240
    %vm1247 = vmor %vm1245, %vm1246
    %v1248 = vsel %vm1247, %v1240, %v1244
    %v1249 = vand.u32 2147483647, %v1239
    %vm1250 = vcmp.eq.f32.partialorder %v1249, 8.507059e+37
    %v1251 = vand.u32 %v1239, 2147483648
    %v1252 = vor.u32 1.1754944e-38, %v1251
    %v1253 = vsel %vm1250, %v1252, %v1248
    %v1254 = vmul.f32 %v1225, %v1253
    %v1255 = vadd.f32 %v1254, 0.0
    %vm1256 = vcmp.gt.f32.partialorder %v56, 0.5
    %vm1257 = vcmp.gt.f32.partialorder %v57, 0.5
    %v1258 = vsel %vm1256, 1, 0
    %v1259 = vsel %vm1257, 1, 0
    %1260 = vset.pattern.permute.xlu0 0
    %1261 = vperm.xlu0 %1260, %v1258
    %v1262 = vpop.permute.xlu0 %1261
    %1263 = vset.pattern.permute.xlu0 0
    %1264 = vperm.xlu0 %1263, %v1259
    %v1265 = vpop.permute.xlu0 %1264
    %vm1266 = vcmp.eq.s32.totalorder %v1262, 1
    %vm1267 = vcmp.eq.s32.totalorder %v1265, 1
    %v1268 = vsel %vm1266, %v931, %v96
    %v1269 = vsel %vm1267, %v931, %v97
    %v1270 = vmul.f32 %v1268, %v769
    %v1271 = vmul.f32 %v1269, %v769
    %1272 = vadd.xlane.f32.xlu0 %v1270
    %v1273 = vpop.xlane.xlu0 %1272
    %1274 = vadd.xlane.f32.xlu0 %v1271
    %v1275 = vpop.xlane.xlu0 %1274
    %v1276 = vadd.f32 %v1273, %v776
    %v1277 = vadd.f32 %v1275, %v776
    %vm1278 = vcmp.ge.f32.partialorder %v1276, 0.0
    %vm1279 = vcmp.ge.f32.partialorder %v1277, 0.0
    %v1280 = vmul.f32 %v1276, 0.01
    %v1281 = vmul.f32 %v1277, 0.01
    %v1282 = vsel %vm1278, %v1276, %v1280
    %v1283 = vsel %vm1279, %v1277, %v1281
    %v1284 = vsel %vm785, %v1282, -1e+30
    %v1285 = vsel %vm786, %v1283, -1e+30
    %v1286 = vsel %vm615, %v1284, -inf
    %1287 = vmax.xlane.f32.xlu0 %v1286
    %v1288 = vpop.xlane.xlu0 %1287
    %v1289 = vsel %vm615, %v1285, -inf
    %1290 = vmax.xlane.f32.xlu0 %v1289
    %v1291 = vpop.xlane.xlu0 %1290
    %v1292 = vsub.f32 %v1284, %v1288
    %v1293 = vsub.f32 %v1285, %v1291
    %v1294 = vmul.f32 %v1292, 1.442695
    %v1295 = vpow.pop %v1294
    %v1296 = vmul.f32 %v1293, 1.442695
    %v1297 = vpow.pop %v1296
    %v1298 = vsel %vm785, %v1295, 0.0
    %v1299 = vsel %vm786, %v1297, 0.0
    %v1300 = vsel %vm615, %v1298, 0.0
    %1301 = vadd.xlane.f32.xlu0 %v1300
    %v1302 = vpop.xlane.xlu0 %1301
    %v1303 = vsel %vm615, %v1299, 0.0
    %1304 = vadd.xlane.f32.xlu0 %v1303
    %v1305 = vpop.xlane.xlu0 %1304
    %vm1306 = vcmp.gt.f32.partialorder %v1302, 0.0
    %vm1307 = vcmp.gt.f32.partialorder %v1305, 0.0
    %v1308 = vsel %vm1306, %v1302, 1.0
    %v1309 = vsel %vm1307, %v1305, 1.0
    %v1310 = vrcp.pop %v1308
    %v1311 = vmul.f32 %v1308, %v1310
    %v1312 = vsub.f32 1.0, %v1311
    %v1313 = vmul.f32 %v1310, %v1312
    %v1314 = vadd.f32 %v1310, %v1313
    %vm1315 = vweird.f32 %v1308
    %vm1316 = vweird.f32 %v1310
    %vm1317 = vmor %vm1315, %vm1316
    %v1318 = vsel %vm1317, %v1310, %v1314
    %v1319 = vand.u32 2147483647, %v1308
    %vm1320 = vcmp.eq.f32.partialorder %v1319, 8.507059e+37
    %v1321 = vand.u32 %v1308, 2147483648
    %v1322 = vor.u32 1.1754944e-38, %v1321
    %v1323 = vsel %vm1320, %v1322, %v1318
    %v1324 = vmul.f32 %v1298, %v1323
    %v1325 = vrcp.pop %v1309
    %v1326 = vmul.f32 %v1309, %v1325
    %v1327 = vsub.f32 1.0, %v1326
    %v1328 = vmul.f32 %v1325, %v1327
    %v1329 = vadd.f32 %v1325, %v1328
    %vm1330 = vweird.f32 %v1309
    %vm1331 = vweird.f32 %v1325
    %vm1332 = vmor %vm1330, %vm1331
    %v1333 = vsel %vm1332, %v1325, %v1329
    %v1334 = vand.u32 2147483647, %v1309
    %vm1335 = vcmp.eq.f32.partialorder %v1334, 8.507059e+37
    %v1336 = vand.u32 %v1309, 2147483648
    %v1337 = vor.u32 1.1754944e-38, %v1336
    %v1338 = vsel %vm1335, %v1337, %v1333
    %v1339 = vmul.f32 %v1299, %v1338
    %v1341 = vsel %vm615, %v1324, 0
    %v1344 = vsel %vm615, %v1339, 0
    %1346 = vmatpush.msra.mxu0 0.0
    %1347 = vmatpush.msra.mxu0 0.0
    %1348 = vmatpush.msra.mxu0 0.0
    %1349 = vmatpush.msra.mxu0 0.0
    %1350 = vmatpush.msra.mxu0 0.0
    %1351 = vmatpush.msra.mxu0 0.0
    %1352 = vmatpush.msra.mxu0 0.0
    %1353 = vmatpush.msra.mxu0 0.0
    %1354 = vmatpush.msra.mxu0 0.0
    %1355 = vmatpush.msra.mxu0 0.0
    %1356 = vmatpush.msra.mxu0 0.0
    %1357 = vmatpush.msra.mxu0 0.0
    %1358 = vmatpush.msra.mxu0 0.0
    %1359 = vmatpush.msra.mxu0 0.0
    %1360 = vmatpush.msra.mxu0 0.0
    %1361 = vmatpush.msra.mxu0 %v204
    %1362 = vmatmul.f32.gmra.mxu0 %v1341
    %v1363 = vpop.f32.mrf.mxu0
    %v1364 = vadd.f32 %v843, %v1363
    %1365 = vmatmul.f32.gmra.mxu0 %v1344
    %v1366 = vpop.f32.mrf.mxu0
    %v1367 = vadd.f32 %v843, %v1366
    %1368 = vdwg.mxu0
    %v1369 = vadd.f32 %v1364, %v1367
    %v1370 = vrot.slane %v1369, 4
    %v1371 = vadd.f32 %v1369, %v1370
    %v1372 = vrot.slane %v1371, 2
    %v1373 = vadd.f32 %v1371, %v1372
    %v1374 = vrot.slane %v1373, 1
    %v1375 = vadd.f32 %v1373, %v1374
    %v1376 = vmul.f32 %v1375, %v532
    %v1377 = vsub.f32 %v1364, %v1376
    %v1378 = vsub.f32 %v1367, %v1376
    %v1379 = vmul.f32 %v1377, %v1377
    %v1380 = vmul.f32 %v1378, %v1378
    %v1381 = vadd.f32 %v1379, %v1380
    %v1382 = vrot.slane %v1381, 4
    %v1383 = vadd.f32 %v1381, %v1382
    %v1384 = vrot.slane %v1383, 2
    %v1385 = vadd.f32 %v1383, %v1384
    %v1386 = vrot.slane %v1385, 1
    %v1387 = vadd.f32 %v1385, %v1386
    %v1388 = vmul.f32 %v1387, %v532
    %v1389 = vadd.f32 %v1388, 1e-05
    %v1390 = vrsqrt.pop %v1389
    %v1391 = vmul.f32 %v1390, %v1389
    %v1392 = vmul.f32 %v1391, %v1390
    %v1393 = vmul.f32 0.5, %v1392
    %v1394 = vsub.f32 1.5, %v1393
    %v1395 = vmul.f32 %v1390, %v1394
    %vm1396 = vweird.f32 %v1389
    %vm1397 = vweird.f32 %v1390
    %vm1398 = vmor %vm1396, %vm1397
    %v1399 = vsel %vm1398, %v1390, %v1395
    %v1400 = vmul.f32 %v1377, %v1399
    %v1401 = vmul.f32 %v1378, %v1399
    %v1402 = vmul.f32 %v1400, %v906
    %v1403 = vmul.f32 %v1401, %v906
    %v1404 = vadd.f32 %v1402, %v909
    %v1405 = vadd.f32 %v1403, %v909
    %vm1406 = vcmp.ge.f32.partialorder %v1404, 0.0
    %vm1407 = vcmp.ge.f32.partialorder %v1405, 0.0
    %v1408 = vmul.f32 %v914, %v1404
    %v1409 = vmul.f32 %v914, %v1405
    %v1410 = vsel %vm1406, %v1404, %v1408
    %v1411 = vsel %vm1407, %v1405, %v1409
    %v1412 = vadd.f32 %v570, %v744
    %v1413 = vadd.f32 %v571, %v745
    %v1414 = vmul.f32 %v1410, %v1410
    %v1415 = vmul.f32 %v1411, %v1411
    %1416 = vadd.xlane.f32.xlu0 %v1414
    %v1417 = vpop.xlane.xlu0 %1416
    %1418 = vadd.xlane.f32.xlu0 %v1415
    %v1419 = vpop.xlane.xlu0 %1418
    %v1420 = vrsqrt.pop %v1417
    %v1421 = vmul.f32 %v1420, %v1417
    %v1422 = vmul.f32 %v1421, %v1420
    %v1423 = vmul.f32 0.5, %v1422
    %v1424 = vsub.f32 1.5, %v1423
    %v1425 = vmul.f32 %v1420, %v1424
    %v1426 = vmul.f32 %v1417, %v1425
    %vm1427 = vcmp.eq.f32.partialorder %v1417, inf
    %v1428 = vsel %vm1427, %v1417, %v1426
    %vm1429 = vcmp.eq.f32.partialorder %v1417, 0.0
    %v1430 = vand.u32 %v1417, 2147483648
    %v1431 = vsel %vm1429, %v1430, %v1428
    %v1432 = vrsqrt.pop %v1419
    %v1433 = vmul.f32 %v1432, %v1419
    %v1434 = vmul.f32 %v1433, %v1432
    %v1435 = vmul.f32 0.5, %v1434
    %v1436 = vsub.f32 1.5, %v1435
    %v1437 = vmul.f32 %v1432, %v1436
    %v1438 = vmul.f32 %v1419, %v1437
    %vm1439 = vcmp.eq.f32.partialorder %v1419, inf
    %v1440 = vsel %vm1439, %v1419, %v1438
    %vm1441 = vcmp.eq.f32.partialorder %v1419, 0.0
    %v1442 = vand.u32 %v1419, 2147483648
    %v1443 = vsel %vm1441, %v1442, %v1440
    %v1444 = vmax.f32 %v1431, 1e-12
    %v1445 = vmax.f32 %v1443, 1e-12
    %v1446 = vrcp.pop %v1444
    %v1447 = vmul.f32 %v1444, %v1446
    %v1448 = vsub.f32 1.0, %v1447
    %v1449 = vmul.f32 %v1446, %v1448
    %v1450 = vadd.f32 %v1446, %v1449
    %vm1451 = vweird.f32 %v1444
    %vm1452 = vweird.f32 %v1446
    %vm1453 = vmor %vm1451, %vm1452
    %v1454 = vsel %vm1453, %v1446, %v1450
    %v1455 = vand.u32 2147483647, %v1444
    %vm1456 = vcmp.eq.f32.partialorder %v1455, 8.507059e+37
    %v1457 = vand.u32 %v1444, 2147483648
    %v1458 = vor.u32 1.1754944e-38, %v1457
    %v1459 = vsel %vm1456, %v1458, %v1454
    %v1460 = vmul.f32 %v1410, %v1459
    %v1461 = vrcp.pop %v1445
    %v1462 = vmul.f32 %v1445, %v1461
    %v1463 = vsub.f32 1.0, %v1462
    %v1464 = vmul.f32 %v1461, %v1463
    %v1465 = vadd.f32 %v1461, %v1464
    %vm1466 = vweird.f32 %v1445
    %vm1467 = vweird.f32 %v1461
    %vm1468 = vmor %vm1466, %vm1467
    %v1469 = vsel %vm1468, %v1461, %v1465
    %v1470 = vand.u32 2147483647, %v1445
    %vm1471 = vcmp.eq.f32.partialorder %v1470, 8.507059e+37
    %v1472 = vand.u32 %v1445, 2147483648
    %v1473 = vor.u32 1.1754944e-38, %v1472
    %v1474 = vsel %vm1471, %v1473, %v1469
    %v1475 = vmul.f32 %v1411, %v1474
    %v1476 = vmul.f32 %v1412, %v1412
    %v1477 = vmul.f32 %v1413, %v1413
    %1478 = vadd.xlane.f32.xlu0 %v1476
    %v1479 = vpop.xlane.xlu0 %1478
    %1480 = vadd.xlane.f32.xlu0 %v1477
    %v1481 = vpop.xlane.xlu0 %1480
    %v1482 = vrsqrt.pop %v1479
    %v1483 = vmul.f32 %v1482, %v1479
    %v1484 = vmul.f32 %v1483, %v1482
    %v1485 = vmul.f32 0.5, %v1484
    %v1486 = vsub.f32 1.5, %v1485
    %v1487 = vmul.f32 %v1482, %v1486
    %v1488 = vmul.f32 %v1479, %v1487
    %vm1489 = vcmp.eq.f32.partialorder %v1479, inf
    %v1490 = vsel %vm1489, %v1479, %v1488
    %vm1491 = vcmp.eq.f32.partialorder %v1479, 0.0
    %v1492 = vand.u32 %v1479, 2147483648
    %v1493 = vsel %vm1491, %v1492, %v1490
    %v1494 = vrsqrt.pop %v1481
    %v1495 = vmul.f32 %v1494, %v1481
    %v1496 = vmul.f32 %v1495, %v1494
    %v1497 = vmul.f32 0.5, %v1496
    %v1498 = vsub.f32 1.5, %v1497
    %v1499 = vmul.f32 %v1494, %v1498
    %v1500 = vmul.f32 %v1481, %v1499
    %vm1501 = vcmp.eq.f32.partialorder %v1481, inf
    %v1502 = vsel %vm1501, %v1481, %v1500
    %vm1503 = vcmp.eq.f32.partialorder %v1481, 0.0
    %v1504 = vand.u32 %v1481, 2147483648
    %v1505 = vsel %vm1503, %v1504, %v1502
    %v1506 = vmax.f32 %v1493, 1e-12
    %v1507 = vmax.f32 %v1505, 1e-12
    %v1508 = vrcp.pop %v1506
    %v1509 = vmul.f32 %v1506, %v1508
    %v1510 = vsub.f32 1.0, %v1509
    %v1511 = vmul.f32 %v1508, %v1510
    %v1512 = vadd.f32 %v1508, %v1511
    %vm1513 = vweird.f32 %v1506
    %vm1514 = vweird.f32 %v1508
    %vm1515 = vmor %vm1513, %vm1514
    %v1516 = vsel %vm1515, %v1508, %v1512
    %v1517 = vand.u32 2147483647, %v1506
    %vm1518 = vcmp.eq.f32.partialorder %v1517, 8.507059e+37
    %v1519 = vand.u32 %v1506, 2147483648
    %v1520 = vor.u32 1.1754944e-38, %v1519
    %v1521 = vsel %vm1518, %v1520, %v1516
    %v1522 = vmul.f32 %v1412, %v1521
    %v1523 = vrcp.pop %v1507
    %v1524 = vmul.f32 %v1507, %v1523
    %v1525 = vsub.f32 1.0, %v1524
    %v1526 = vmul.f32 %v1523, %v1525
    %v1527 = vadd.f32 %v1523, %v1526
    %vm1528 = vweird.f32 %v1507
    %vm1529 = vweird.f32 %v1523
    %vm1530 = vmor %vm1528, %vm1529
    %v1531 = vsel %vm1530, %v1523, %v1527
    %v1532 = vand.u32 2147483647, %v1507
    %vm1533 = vcmp.eq.f32.partialorder %v1532, 8.507059e+37
    %v1534 = vand.u32 %v1507, 2147483648
    %v1535 = vor.u32 1.1754944e-38, %v1534
    %v1536 = vsel %vm1533, %v1535, %v1531
    %v1537 = vmul.f32 %v1413, %v1536
    %v1538 = vmul.f32 %v1460, %v1522
    %v1539 = vmul.f32 %v1475, %v1537
    %1540 = vadd.xlane.f32.xlu0 %v1538
    %v1541 = vpop.xlane.xlu0 %1540
    %1542 = vadd.xlane.f32.xlu0 %v1539
    %v1543 = vpop.xlane.xlu0 %1542
    %v1544 = vsub.f32 1.0, %v1541
    %v1545 = vsub.f32 1.0, %v1543
    %v1546 = vmul.f32 %v56, %v1544
    %v1547 = vmul.f32 %v57, %v1545
    %v1548 = vsel %vm1212, %v1546, 0.0
    %v1549 = vsel %vm1212, %v1547, 0.0
    %v1550 = vadd.f32 %v1548, %v1549
    %1551 = vadd.xlane.f32.xlu0 %v1550
    %v1552 = vpop.xlane.xlu0 %1551
    %v1553 = vrot.slane %v1552, 4
    %v1554 = vadd.f32 %v1552, %v1553
    %v1555 = vrot.slane %v1554, 2
    %v1556 = vadd.f32 %v1554, %v1555
    %v1557 = vrot.slane %v1556, 1
    %v1558 = vadd.f32 %v1556, %v1557
    %s1559 = vtos %v1558
    %v1560 = vstv %s1559
    %v1561 = vsel %vm1212, %v56, 0.0
    %v1562 = vsel %vm1212, %v57, 0.0
    %v1563 = vadd.f32 %v1561, %v1562
    %1564 = vadd.xlane.f32.xlu0 %v1563
    %v1565 = vpop.xlane.xlu0 %1564
    %v1566 = vrot.slane %v1565, 4
    %v1567 = vadd.f32 %v1565, %v1566
    %v1568 = vrot.slane %v1567, 2
    %v1569 = vadd.f32 %v1567, %v1568
    %v1570 = vrot.slane %v1569, 1
    %v1571 = vadd.f32 %v1569, %v1570
    %s1572 = vtos %v1571
    %v1573 = vstv %s1572
    %v1574 = vmax.f32 %v1573, 1.0
    %v1575 = vrcp.pop %v1574
    %v1576 = vmul.f32 %v1574, %v1575
    %v1577 = vsub.f32 1.0, %v1576
    %v1578 = vmul.f32 %v1575, %v1577
    %v1579 = vadd.f32 %v1575, %v1578
    %vm1580 = vweird.f32 %v1574
    %vm1581 = vweird.f32 %v1575
    %vm1582 = vmor %vm1580, %vm1581
    %v1583 = vsel %vm1582, %v1575, %v1579
    %v1584 = vand.u32 2147483647, %v1574
    %vm1585 = vcmp.eq.f32.partialorder %v1584, 8.507059e+37
    %v1586 = vand.u32 %v1574, 2147483648
    %v1587 = vor.u32 1.1754944e-38, %v1586
    %v1588 = vsel %vm1585, %v1587, %v1583
    %v1589 = vmul.f32 %v1560, %v1588
    %v1590 = vadd.f32 %v1255, %v1589
    %vm1591 = vcmp.gt.f32.partialorder %v58, 0.5
    %vm1592 = vcmp.gt.f32.partialorder %v59, 0.5
    %v1593 = vsel %vm1591, 1, 0
    %v1594 = vsel %vm1592, 1, 0
    %1595 = vset.pattern.permute.xlu0 0
    %1596 = vperm.xlu0 %1595, %v1593
    %v1597 = vpop.permute.xlu0 %1596
    %1598 = vset.pattern.permute.xlu0 0
    %1599 = vperm.xlu0 %1598, %v1594
    %v1600 = vpop.permute.xlu0 %1599
    %vm1601 = vcmp.eq.s32.totalorder %v1597, 1
    %vm1602 = vcmp.eq.s32.totalorder %v1600, 1
    %v1603 = vsel %vm1601, %v931, %v96
    %v1604 = vsel %vm1602, %v931, %v97
    %v1605 = vmul.f32 %v1603, %v411
    %v1606 = vmul.f32 %v1604, %v411
    %1607 = vadd.xlane.f32.xlu0 %v1605
    %v1608 = vpop.xlane.xlu0 %1607
    %1609 = vadd.xlane.f32.xlu0 %v1606
    %v1610 = vpop.xlane.xlu0 %1609
    %v1611 = vadd.f32 %v1608, %v418
    %v1612 = vadd.f32 %v1610, %v418
    %vm1613 = vcmp.ge.f32.partialorder %v1611, 0.0
    %vm1614 = vcmp.ge.f32.partialorder %v1612, 0.0
    %v1615 = vmul.f32 %v1611, 0.01
    %v1616 = vmul.f32 %v1612, 0.01
    %v1617 = vsel %vm1613, %v1611, %v1615
    %v1618 = vsel %vm1614, %v1612, %v1616
    %v1619 = vsel %vm427, %v1617, -1e+30
    %v1620 = vsel %vm428, %v1618, -1e+30
    %v1621 = vsel %vm431, %v1619, -inf
    %1622 = vmax.xlane.f32.xlu0 %v1621
    %v1623 = vpop.xlane.xlu0 %1622
    %v1624 = vsel %vm431, %v1620, -inf
    %1625 = vmax.xlane.f32.xlu0 %v1624
    %v1626 = vpop.xlane.xlu0 %1625
    %v1627 = vsub.f32 %v1619, %v1623
    %v1628 = vsub.f32 %v1620, %v1626
    %v1629 = vmul.f32 %v1627, 1.442695
    %v1630 = vpow.pop %v1629
    %v1631 = vmul.f32 %v1628, 1.442695
    %v1632 = vpow.pop %v1631
    %v1633 = vsel %vm427, %v1630, 0.0
    %v1634 = vsel %vm428, %v1632, 0.0
    %v1635 = vsel %vm431, %v1633, 0.0
    %1636 = vadd.xlane.f32.xlu0 %v1635
    %v1637 = vpop.xlane.xlu0 %1636
    %v1638 = vsel %vm431, %v1634, 0.0
    %1639 = vadd.xlane.f32.xlu0 %v1638
    %v1640 = vpop.xlane.xlu0 %1639
    %vm1641 = vcmp.gt.f32.partialorder %v1637, 0.0
    %vm1642 = vcmp.gt.f32.partialorder %v1640, 0.0
    %v1643 = vsel %vm1641, %v1637, 1.0
    %v1644 = vsel %vm1642, %v1640, 1.0
    %v1645 = vrcp.pop %v1643
    %v1646 = vmul.f32 %v1643, %v1645
    %v1647 = vsub.f32 1.0, %v1646
    %v1648 = vmul.f32 %v1645, %v1647
    %v1649 = vadd.f32 %v1645, %v1648
    %vm1650 = vweird.f32 %v1643
    %vm1651 = vweird.f32 %v1645
    %vm1652 = vmor %vm1650, %vm1651
    %v1653 = vsel %vm1652, %v1645, %v1649
    %v1654 = vand.u32 2147483647, %v1643
    %vm1655 = vcmp.eq.f32.partialorder %v1654, 8.507059e+37
    %v1656 = vand.u32 %v1643, 2147483648
    %v1657 = vor.u32 1.1754944e-38, %v1656
    %v1658 = vsel %vm1655, %v1657, %v1653
    %v1659 = vmul.f32 %v1633, %v1658
    %v1660 = vrcp.pop %v1644
    %v1661 = vmul.f32 %v1644, %v1660
    %v1662 = vsub.f32 1.0, %v1661
    %v1663 = vmul.f32 %v1660, %v1662
    %v1664 = vadd.f32 %v1660, %v1663
    %vm1665 = vweird.f32 %v1644
    %vm1666 = vweird.f32 %v1660
    %vm1667 = vmor %vm1665, %vm1666
    %v1668 = vsel %vm1667, %v1660, %v1664
    %v1669 = vand.u32 2147483647, %v1644
    %vm1670 = vcmp.eq.f32.partialorder %v1669, 8.507059e+37
    %v1671 = vand.u32 %v1644, 2147483648
    %v1672 = vor.u32 1.1754944e-38, %v1671
    %v1673 = vsel %vm1670, %v1672, %v1668
    %v1674 = vmul.f32 %v1634, %v1673
    %v1676 = vsel %vm431, %v1659, 0
    %v1679 = vsel %vm431, %v1674, 0
    %1681 = vmatpush.msra.mxu0 0.0
    %1682 = vmatpush.msra.mxu0 0.0
    %1683 = vmatpush.msra.mxu0 0.0
    %1684 = vmatpush.msra.mxu0 0.0
    %1685 = vmatpush.msra.mxu0 0.0
    %1686 = vmatpush.msra.mxu0 0.0
    %1687 = vmatpush.msra.mxu0 0.0
    %1688 = vmatpush.msra.mxu0 0.0
    %1689 = vmatpush.msra.mxu0 0.0
    %1690 = vmatpush.msra.mxu0 0.0
    %1691 = vmatpush.msra.mxu0 0.0
    %1692 = vmatpush.msra.mxu0 0.0
    %1693 = vmatpush.msra.mxu0 0.0
    %1694 = vmatpush.msra.mxu0 0.0
    %1695 = vmatpush.msra.mxu0 %v494
    %1696 = vmatpush.msra.mxu0 %v386
    %1697 = vmatmul.f32.gmra.mxu0 %v1676
    %v1698 = vpop.f32.mrf.mxu0
    %v1699 = vadd.f32 %v486, %v1698
    %1700 = vmatmul.f32.gmra.mxu0 %v1679
    %v1701 = vpop.f32.mrf.mxu0
    %v1702 = vadd.f32 %v486, %v1701
    %1703 = vdwg.mxu0
    %v1704 = vadd.f32 %v1699, %v1702
    %v1705 = vrot.slane %v1704, 4
    %v1706 = vadd.f32 %v1704, %v1705
    %v1707 = vrot.slane %v1706, 2
    %v1708 = vadd.f32 %v1706, %v1707
    %v1709 = vrot.slane %v1708, 1
    %v1710 = vadd.f32 %v1708, %v1709
    %v1711 = vmul.f32 %v1710, %v532
    %v1712 = vsub.f32 %v1699, %v1711
    %v1713 = vsub.f32 %v1702, %v1711
    %v1714 = vmul.f32 %v1712, %v1712
    %v1715 = vmul.f32 %v1713, %v1713
    %v1716 = vadd.f32 %v1714, %v1715
    %v1717 = vrot.slane %v1716, 4
    %v1718 = vadd.f32 %v1716, %v1717
    %v1719 = vrot.slane %v1718, 2
    %v1720 = vadd.f32 %v1718, %v1719
    %v1721 = vrot.slane %v1720, 1
    %v1722 = vadd.f32 %v1720, %v1721
    %v1723 = vmul.f32 %v1722, %v532
    %v1724 = vadd.f32 %v1723, 1e-05
    %v1725 = vrsqrt.pop %v1724
    %v1726 = vmul.f32 %v1725, %v1724
    %v1727 = vmul.f32 %v1726, %v1725
    %v1728 = vmul.f32 0.5, %v1727
    %v1729 = vsub.f32 1.5, %v1728
    %v1730 = vmul.f32 %v1725, %v1729
    %vm1731 = vweird.f32 %v1724
    %vm1732 = vweird.f32 %v1725
    %vm1733 = vmor %vm1731, %vm1732
    %v1734 = vsel %vm1733, %v1725, %v1730
    %v1735 = vmul.f32 %v1712, %v1734
    %v1736 = vmul.f32 %v1713, %v1734
    %v1737 = vmul.f32 %v1735, %v559
    %v1738 = vmul.f32 %v1736, %v559
    %v1739 = vadd.f32 %v1737, %v562
    %v1740 = vadd.f32 %v1738, %v562
    %vm1741 = vcmp.ge.f32.partialorder %v1739, 0.0
    %vm1742 = vcmp.ge.f32.partialorder %v1740, 0.0
    %v1743 = vmul.f32 %v567, %v1739
    %v1744 = vmul.f32 %v567, %v1740
    %v1745 = vsel %vm1741, %v1739, %v1743
    %v1746 = vsel %vm1742, %v1740, %v1744
    %v1747 = vadd.f32 %v744, %v917
    %v1748 = vadd.f32 %v745, %v918
    %v1749 = vmul.f32 %v1745, %v1745
    %v1750 = vmul.f32 %v1746, %v1746
    %1751 = vadd.xlane.f32.xlu0 %v1749
    %v1752 = vpop.xlane.xlu0 %1751
    %1753 = vadd.xlane.f32.xlu0 %v1750
    %v1754 = vpop.xlane.xlu0 %1753
    %v1755 = vrsqrt.pop %v1752
    %v1756 = vmul.f32 %v1755, %v1752
    %v1757 = vmul.f32 %v1756, %v1755
    %v1758 = vmul.f32 0.5, %v1757
    %v1759 = vsub.f32 1.5, %v1758
    %v1760 = vmul.f32 %v1755, %v1759
    %v1761 = vmul.f32 %v1752, %v1760
    %vm1762 = vcmp.eq.f32.partialorder %v1752, inf
    %v1763 = vsel %vm1762, %v1752, %v1761
    %vm1764 = vcmp.eq.f32.partialorder %v1752, 0.0
    %v1765 = vand.u32 %v1752, 2147483648
    %v1766 = vsel %vm1764, %v1765, %v1763
    %v1767 = vrsqrt.pop %v1754
    %v1768 = vmul.f32 %v1767, %v1754
    %v1769 = vmul.f32 %v1768, %v1767
    %v1770 = vmul.f32 0.5, %v1769
    %v1771 = vsub.f32 1.5, %v1770
    %v1772 = vmul.f32 %v1767, %v1771
    %v1773 = vmul.f32 %v1754, %v1772
    %vm1774 = vcmp.eq.f32.partialorder %v1754, inf
    %v1775 = vsel %vm1774, %v1754, %v1773
    %vm1776 = vcmp.eq.f32.partialorder %v1754, 0.0
    %v1777 = vand.u32 %v1754, 2147483648
    %v1778 = vsel %vm1776, %v1777, %v1775
    %v1779 = vmax.f32 %v1766, 1e-12
    %v1780 = vmax.f32 %v1778, 1e-12
    %v1781 = vrcp.pop %v1779
    %v1782 = vmul.f32 %v1779, %v1781
    %v1783 = vsub.f32 1.0, %v1782
    %v1784 = vmul.f32 %v1781, %v1783
    %v1785 = vadd.f32 %v1781, %v1784
    %vm1786 = vweird.f32 %v1779
    %vm1787 = vweird.f32 %v1781
    %vm1788 = vmor %vm1786, %vm1787
    %v1789 = vsel %vm1788, %v1781, %v1785
    %v1790 = vand.u32 2147483647, %v1779
    %vm1791 = vcmp.eq.f32.partialorder %v1790, 8.507059e+37
    %v1792 = vand.u32 %v1779, 2147483648
    %v1793 = vor.u32 1.1754944e-38, %v1792
    %v1794 = vsel %vm1791, %v1793, %v1789
    %v1795 = vmul.f32 %v1745, %v1794
    %v1796 = vrcp.pop %v1780
    %v1797 = vmul.f32 %v1780, %v1796
    %v1798 = vsub.f32 1.0, %v1797
    %v1799 = vmul.f32 %v1796, %v1798
    %v1800 = vadd.f32 %v1796, %v1799
    %vm1801 = vweird.f32 %v1780
    %vm1802 = vweird.f32 %v1796
    %vm1803 = vmor %vm1801, %vm1802
    %v1804 = vsel %vm1803, %v1796, %v1800
    %v1805 = vand.u32 2147483647, %v1780
    %vm1806 = vcmp.eq.f32.partialorder %v1805, 8.507059e+37
    %v1807 = vand.u32 %v1780, 2147483648
    %v1808 = vor.u32 1.1754944e-38, %v1807
    %v1809 = vsel %vm1806, %v1808, %v1804
    %v1810 = vmul.f32 %v1746, %v1809
    %v1811 = vmul.f32 %v1747, %v1747
    %v1812 = vmul.f32 %v1748, %v1748
    %1813 = vadd.xlane.f32.xlu0 %v1811
    %v1814 = vpop.xlane.xlu0 %1813
    %1815 = vadd.xlane.f32.xlu0 %v1812
    %v1816 = vpop.xlane.xlu0 %1815
    %v1817 = vrsqrt.pop %v1814
    %v1818 = vmul.f32 %v1817, %v1814
    %v1819 = vmul.f32 %v1818, %v1817
    %v1820 = vmul.f32 0.5, %v1819
    %v1821 = vsub.f32 1.5, %v1820
    %v1822 = vmul.f32 %v1817, %v1821
    %v1823 = vmul.f32 %v1814, %v1822
    %vm1824 = vcmp.eq.f32.partialorder %v1814, inf
    %v1825 = vsel %vm1824, %v1814, %v1823
    %vm1826 = vcmp.eq.f32.partialorder %v1814, 0.0
    %v1827 = vand.u32 %v1814, 2147483648
    %v1828 = vsel %vm1826, %v1827, %v1825
    %v1829 = vrsqrt.pop %v1816
    %v1830 = vmul.f32 %v1829, %v1816
    %v1831 = vmul.f32 %v1830, %v1829
    %v1832 = vmul.f32 0.5, %v1831
    %v1833 = vsub.f32 1.5, %v1832
    %v1834 = vmul.f32 %v1829, %v1833
    %v1835 = vmul.f32 %v1816, %v1834
    %vm1836 = vcmp.eq.f32.partialorder %v1816, inf
    %v1837 = vsel %vm1836, %v1816, %v1835
    %vm1838 = vcmp.eq.f32.partialorder %v1816, 0.0
    %v1839 = vand.u32 %v1816, 2147483648
    %v1840 = vsel %vm1838, %v1839, %v1837
    %v1841 = vmax.f32 %v1828, 1e-12
    %v1842 = vmax.f32 %v1840, 1e-12
    %v1843 = vrcp.pop %v1841
    %v1844 = vmul.f32 %v1841, %v1843
    %v1845 = vsub.f32 1.0, %v1844
    %v1846 = vmul.f32 %v1843, %v1845
    %v1847 = vadd.f32 %v1843, %v1846
    %vm1848 = vweird.f32 %v1841
    %vm1849 = vweird.f32 %v1843
    %vm1850 = vmor %vm1848, %vm1849
    %v1851 = vsel %vm1850, %v1843, %v1847
    %v1852 = vand.u32 2147483647, %v1841
    %vm1853 = vcmp.eq.f32.partialorder %v1852, 8.507059e+37
    %v1854 = vand.u32 %v1841, 2147483648
    %v1855 = vor.u32 1.1754944e-38, %v1854
    %v1856 = vsel %vm1853, %v1855, %v1851
    %v1857 = vmul.f32 %v1747, %v1856
    %v1858 = vrcp.pop %v1842
    %v1859 = vmul.f32 %v1842, %v1858
    %v1860 = vsub.f32 1.0, %v1859
    %v1861 = vmul.f32 %v1858, %v1860
    %v1862 = vadd.f32 %v1858, %v1861
    %vm1863 = vweird.f32 %v1842
    %vm1864 = vweird.f32 %v1858
    %vm1865 = vmor %vm1863, %vm1864
    %v1866 = vsel %vm1865, %v1858, %v1862
    %v1867 = vand.u32 2147483647, %v1842
    %vm1868 = vcmp.eq.f32.partialorder %v1867, 8.507059e+37
    %v1869 = vand.u32 %v1842, 2147483648
    %v1870 = vor.u32 1.1754944e-38, %v1869
    %v1871 = vsel %vm1868, %v1870, %v1866
    %v1872 = vmul.f32 %v1748, %v1871
    %v1873 = vmul.f32 %v1795, %v1857
    %v1874 = vmul.f32 %v1810, %v1872
    %1875 = vadd.xlane.f32.xlu0 %v1873
    %v1876 = vpop.xlane.xlu0 %1875
    %1877 = vadd.xlane.f32.xlu0 %v1874
    %v1878 = vpop.xlane.xlu0 %1877
    %v1879 = vsub.f32 1.0, %v1876
    %v1880 = vsub.f32 1.0, %v1878
    %v1881 = vmul.f32 %v58, %v1879
    %v1882 = vmul.f32 %v59, %v1880
    %v1883 = vsel %vm1212, %v1881, 0.0
    %v1884 = vsel %vm1212, %v1882, 0.0
    %v1885 = vadd.f32 %v1883, %v1884
    %1886 = vadd.xlane.f32.xlu0 %v1885
    %v1887 = vpop.xlane.xlu0 %1886
    %v1888 = vrot.slane %v1887, 4
    %v1889 = vadd.f32 %v1887, %v1888
    %v1890 = vrot.slane %v1889, 2
    %v1891 = vadd.f32 %v1889, %v1890
    %v1892 = vrot.slane %v1891, 1
    %v1893 = vadd.f32 %v1891, %v1892
    %s1894 = vtos %v1893
    %v1895 = vstv %s1894
    %v1896 = vsel %vm1212, %v58, 0.0
    %v1897 = vsel %vm1212, %v59, 0.0
    %v1898 = vadd.f32 %v1896, %v1897
    %1899 = vadd.xlane.f32.xlu0 %v1898
    %v1900 = vpop.xlane.xlu0 %1899
    %v1901 = vrot.slane %v1900, 4
    %v1902 = vadd.f32 %v1900, %v1901
    %v1903 = vrot.slane %v1902, 2
    %v1904 = vadd.f32 %v1902, %v1903
    %v1905 = vrot.slane %v1904, 1
    %v1906 = vadd.f32 %v1904, %v1905
    %s1907 = vtos %v1906
    %v1908 = vstv %s1907
    %v1909 = vmax.f32 %v1908, 1.0
    %v1910 = vrcp.pop %v1909
    %v1911 = vmul.f32 %v1909, %v1910
    %v1912 = vsub.f32 1.0, %v1911
    %v1913 = vmul.f32 %v1910, %v1912
    %v1914 = vadd.f32 %v1910, %v1913
    %vm1915 = vweird.f32 %v1909
    %vm1916 = vweird.f32 %v1910
    %vm1917 = vmor %vm1915, %vm1916
    %v1918 = vsel %vm1917, %v1910, %v1914
    %v1919 = vand.u32 2147483647, %v1909
    %vm1920 = vcmp.eq.f32.partialorder %v1919, 8.507059e+37
    %v1921 = vand.u32 %v1909, 2147483648
    %v1922 = vor.u32 1.1754944e-38, %v1921
    %v1923 = vsel %vm1920, %v1922, %v1918
    %v1924 = vmul.f32 %v1895, %v1923
    %v1925 = vadd.f32 %v1590, %v1924
    %1926 = vst [vmem:[#allocation2] sm:$0x1] %v1925
    // Predicated region
    $region22: #{cross_view_forward.1} parent=1 // pred_check
      _
    $region23: #{cross_view_forward.1} parent=1 // pred_check_branch
      %1928 = sbr.rel (0) target = $region25
    $region24: #{cross_view_forward.1} parent=1 // pred_region
      %1930 = vsyncadd [#allocation3], 0
      %s1932 = sshll.u32 [#allocation2], 4
      %s1933 = int_to_ptr.vmem [resolvable:$true] %s1932
      %s1934 = sshll.u32 %s5, 4
      %s1935 = int_to_ptr.hbm [resolvable:$true] %s1934
      %1937 = dma.vmem_to_hbm [thread:$0]  %s1933, 16, %s1935, [#allocation3]
    $region25: #{cross_view_forward.1} parent=1 // pred_fallthru
      _
    // Predicated region
    $region26: #{cross_view_forward.1} parent=1 // pred_check
      _
    $region27: #{cross_view_forward.1} parent=1 // pred_check_branch
      %1939 = sbr.rel (0) target = $region29
    $region28: #{cross_view_forward.1} parent=1 // pred_region
      %1941 = dma.done [#allocation3], 16
    $region29: #{cross_view_forward.1} parent=1 // pred_fallthru
      _
    %1942 = vsyncpa [#allocation3], 1

</llo_original>
